<compile_context>
chip_gen: v7x
topology: tpu7x:2x2x1
jax: 0.10.0
libtpu: 0.0.40
codegen_flags: <defaults>
</compile_context>

<pallas_src>
import jax
import jax.numpy as jnp
from jax import lax
from jax.experimental import pallas as pl
from jax.experimental.pallas import tpu as pltpu


# ----------------------------- Pallas kernel --------------------------------

def fused_gru_kernel(x_ref, w1i_ref, b1i_ref, wbig_ref, bbig_ref, wlin_ref,
                     blin_ref, out_ref, gx_ref):
    """Fused 2-layer GRU + linear head (one batch tile per grid program).

    x_ref:    (S, BT, H)   time-major embedded input for this batch tile
    w1i_ref:  (H, 3H)      layer-1 input weights, gate panels [r|z|n] transposed
    b1i_ref:  (1, 3H)      [b1_ir+b1_hr | b1_iz+b1_hz | b1_in]
    wbig_ref: (2H, 7H)     per-step fused weight (see header comment)
    bbig_ref: (1, 7H)      [0 | 0 | b1_hn | b2_r | b2_z | b2_in | b2_hn]
    wlin_ref: (S, BT, H)   linear weights, pre-broadcast over the batch tile
    blin_ref: (1, 1)       linear bias
    out_ref:  (BT, 1)      per-row scalar output
    gx_ref:   (S*BT, 3H)   scratch: layer-1 input-gate pre-activations
    """
    S, BT, H = x_ref.shape
    GW = wbig_ref.shape[1]          # 7*H
    f32 = jnp.float32

    # Layer-1 input projections for the WHOLE sequence: one big MXU matmul.
    x2d = x_ref[...].reshape(S * BT, H)
    gx_ref[...] = (jnp.dot(x2d, w1i_ref[...], preferred_element_type=f32)
                   + b1i_ref[...])

    # Hoisted loop invariants (JAX does not CSE broadcast_in_dim).
    wbig = wbig_ref[...]
    bbig = jnp.broadcast_to(bbig_ref[...], (BT, GW))

    h1 = jnp.zeros((BT, H), f32)
    h2 = jnp.zeros((BT, H), f32)
    acc = jnp.zeros((BT, H), f32)

    # Skewed wavefront: iteration t -> layer-1 step t (t < S) and
    # layer-2 step t-1 (t >= 1).  Both use only values from before this
    # iteration (layer-2's input at step t-1 IS the current h1), so their
    # compute is independent and pipelines in the MXU/EUP.
    # S is small & static -> fully unrolled Python loop.
    # TODO(synk): switch to lax.fori_loop(unroll=2..4) if S/H grow large.
    for t in range(S + 1):
        if t == 0:
            g = bbig                              # h1 = h2 = 0 at t == 0
        else:
            hcat = jnp.concatenate([h1, h2], axis=1)           # (BT, 2H)
            g = jnp.dot(hcat, wbig, preferred_element_type=f32) + bbig

        if t >= 1:
            # ---- layer 2, step t-1 (all biases already inside g) ----
            rz2 = jax.nn.sigmoid(g[:, 3 * H:5 * H])
            r2 = rz2[:, :H]
            z2 = rz2[:, H:]
            n2 = jnp.tanh(g[:, 5 * H:6 * H] + r2 * g[:, 6 * H:7 * H])
            h2 = (1.0 - z2) * n2 + z2 * h2
            # Fused Linear(S*H, 1): running per-lane FMA against the
            # per-timestep weight panel (pre-broadcast, no per-step broadcast).
            acc = acc + h2 * wlin_ref[t - 1]

        if t < S:
            # ---- layer 1, step t ----
            gx = gx_ref[pl.ds(t * BT, BT), :]                   # (BT, 3H)
            rz1 = jax.nn.sigmoid(gx[:, :2 * H] + g[:, :2 * H])
            r1 = rz1[:, :H]
            z1 = rz1[:, H:]
            n1 = jnp.tanh(gx[:, 2 * H:] + r1 * g[:, 2 * H:3 * H])
            h1 = (1.0 - z1) * n1 + z1 * h1

    out_ref[...] = jnp.sum(acc, axis=1, keepdims=True) + blin_ref[...]


# ------------------------------ weight packing --------------------------------

def pack_params(params):
    """One-time conversion of PyTorch-layout params into kernel layout."""
    H = params["embedding"].shape[1]
    f32 = jnp.float32

    def gates_T(w):   # (3H, H) -> three (H, H) transposed panels (r, z, n)
        return [w[g * H:(g + 1) * H, :].T.astype(f32) for g in range(3)]

    w1i_r, w1i_z, w1i_n = gates_T(params["w_ih_l0"])
    w1h_r, w1h_z, w1h_n = gates_T(params["w_hh_l0"])
    w2i_r, w2i_z, w2i_n = gates_T(params["w_ih_l1"])
    w2h_r, w2h_z, w2h_n = gates_T(params["w_hh_l1"])

    b1i = params["b_ih_l0"].reshape(3, H).astype(f32)
    b1h = params["b_hh_l0"].reshape(3, H).astype(f32)
    b2i = params["b_ih_l1"].reshape(3, H).astype(f32)
    b2h = params["b_hh_l1"].reshape(3, H).astype(f32)

    # Layer-1 input projection: gate panels concatenated along lanes.
    w1i_cat = jnp.concatenate([w1i_r, w1i_z, w1i_n], axis=1)          # (H, 3H)
    b1i_cat = jnp.concatenate(
        [b1i[0] + b1h[0], b1i[1] + b1h[1], b1i[2]]).reshape(1, 3 * H)

    # Per-step fused weight: rows 0:H multiply h1, rows H:2H multiply h2.
    # Columns: [gh1_r | gh1_z | gh1_n | a2_r | a2_z | gx2_n | gh2_n]
    Z = jnp.zeros((H, H), f32)
    top = jnp.concatenate([w1h_r, w1h_z, w1h_n, w2i_r, w2i_z, w2i_n, Z], axis=1)
    bot = jnp.concatenate([Z, Z, Z, w2h_r, w2h_z, Z, w2h_n], axis=1)
    wbig = jnp.concatenate([top, bot], axis=0)                        # (2H, 7H)

    zb = jnp.zeros((H,), f32)
    bbig = jnp.concatenate(
        [zb, zb, b1h[2],                       # gh1_n carries b1_hn (inside r*(...))
         b2i[0] + b2h[0], b2i[1] + b2h[1],     # layer-2 r/z biases
         b2i[2], b2h[2]]).reshape(1, 7 * H)    # gx2_n bias, gh2_n bias

    S = params["lin_w"].shape[1] // H          # module forces seq_len == input_dim
    return {
        "embedding": params["embedding"].astype(f32),
        "w1i": w1i_cat, "b1i": b1i_cat,
        "wbig": wbig, "bbig": bbig,
        "wlin": params["lin_w"].reshape(S, H).astype(f32),
        "blin": params["lin_b"].reshape(1, 1).astype(f32),
    }


# ------------------------------ forward wrapper --------------------------------

def gru_model_forward(packed, x_idx):
    """x_idx: (B, S) int32 token ids; S must equal input_dim (module constraint)."""
    B, S = x_idx.shape
    H = packed["embedding"].shape[1]

    # Pad batch to a full sublane tile and split into batch tiles for the grid
    # (larger batches shard across v7x's two TensorCores via "parallel").
    Bp = max(8, ((B + 7) // 8) * 8)
    BT = min(Bp, 128)
    Bp = ((Bp + BT - 1) // BT) * BT
    NT = Bp // BT

    # Embedding gather (plain-JAX glue), then time-major + batch padding.
    emb = packed["embedding"][x_idx]                       # (B, S, H)
    x = jnp.swapaxes(emb, 0, 1)                            # (S, B, H)
    x = jnp.pad(x, ((0, 0), (0, Bp - B), (0, 0))).astype(jnp.float32)

    # Pre-broadcast linear-head weights over the batch tile (hoists the
    # per-step broadcast out of the kernel loop entirely).
    wlin_b = jnp.broadcast_to(packed["wlin"][:, None, :], (S, BT, H))

    # TODO(synk): nn.GRU inter-layer dropout is train-mode only; eval forward applies none.
    out = pl.pallas_call(
        fused_gru_kernel,
        out_shape=jax.ShapeDtypeStruct((Bp, 1), jnp.float32),
        grid=(NT,),
        in_specs=[
            pl.BlockSpec((S, BT, H), lambda i: (0, i, 0)),
            pl.BlockSpec((H, 3 * H), lambda i: (0, 0)),
            pl.BlockSpec((1, 3 * H), lambda i: (0, 0)),
            pl.BlockSpec((2 * H, 7 * H), lambda i: (0, 0)),
            pl.BlockSpec((1, 7 * H), lambda i: (0, 0)),
            pl.BlockSpec((S, BT, H), lambda i: (0, 0, 0)),
            pl.BlockSpec((1, 1), lambda i: (0, 0)),
        ],
        out_specs=pl.BlockSpec((BT, 1), lambda i: (i, 0)),
        scratch_shapes=[pltpu.VMEM((S * BT, 3 * H), jnp.float32)],
        compiler_params=pltpu.CompilerParams(dimension_semantics=("parallel",)),
    )(x, packed["w1i"], packed["b1i"], packed["wbig"], packed["bbig"],
      wlin_b, packed["blin"])
    return out[:B, 0]


# --------------------------- param init / reference --------------------------

def init_params(key, input_dim, hidden_dim):
    H = hidden_dim
    bound = 1.0 / jnp.sqrt(jnp.float32(H))
    ks = jax.random.split(key, 12)

    def u(k, shape):
        return jax.random.uniform(k, shape, jnp.float32, -bound, bound)

    return {
        "embedding": jax.random.normal(ks[0], (input_dim, H), jnp.float32),
        "w_ih_l0": u(ks[1], (3 * H, H)),
        "w_hh_l0": u(ks[2], (3 * H, H)),
        "b_ih_l0": u(ks[3], (3 * H,)),
        "b_hh_l0": u(ks[4], (3 * H,)),
        "w_ih_l1": u(ks[5], (3 * H, H)),
        "w_hh_l1": u(ks[6], (3 * H, H)),
        "b_ih_l1": u(ks[7], (3 * H,)),
        "b_hh_l1": u(ks[8], (3 * H,)),
        "lin_w": u(ks[9], (1, input_dim * H)),
        "lin_b": u(ks[10], (1,)),
    }


def _gru_layer_ref(x_bsh, w_ih, w_hh, b_ih, b_hh):
    B, S, H = x_bsh.shape

    def cell(h, xt):
        gx = xt @ w_ih.T + b_ih
        gh = h @ w_hh.T + b_hh
        r = jax.nn.sigmoid(gx[:, :H] + gh[:, :H])
        z = jax.nn.sigmoid(gx[:, H:2 * H] + gh[:, H:2 * H])
        n = jnp.tanh(gx[:, 2 * H:] + r * gh[:, 2 * H:])
        h_new = (1.0 - z) * n + z * h
        return h_new, h_new

    h0 = jnp.zeros((B, H), jnp.float32)
    _, ys = lax.scan(cell, h0, jnp.swapaxes(x_bsh, 0, 1))
    return jnp.swapaxes(ys, 0, 1)


def forward_ref(params, x_idx):
    B, S = x_idx.shape
    h = params["embedding"][x_idx]
    h = _gru_layer_ref(h, params["w_ih_l0"], params["w_hh_l0"],
                       params["b_ih_l0"], params["b_hh_l0"])
    h = _gru_layer_ref(h, params["w_ih_l1"], params["w_hh_l1"],
                       params["b_ih_l1"], params["b_hh_l1"])
    flat = h.reshape(B, -1)
    return (flat @ params["lin_w"].T + params["lin_b"]).reshape(B)


# --------------------------------- main ---------------------------------------

if __name__ == "__main__":
    # The module's Linear(input_dim * hidden_dim, 1) forces seq_len == input_dim.
    input_dim = 16     # vocab size == sequence length
    hidden_dim = 32
    batch = 2

    key = jax.random.PRNGKey(0)
    kp, kx = jax.random.split(key)
    params = init_params(kp, input_dim, hidden_dim)
    packed = pack_params(params)   # one-time weight repack (kernel layout)
    x_idx = jax.random.randint(kx, (batch, input_dim), 0, input_dim, dtype=jnp.int32)

    forward = jax.jit(gru_model_forward)
    out = forward(packed, x_idx)
    out = jax.block_until_ready(out)

    ref = forward_ref(params, x_idx)
    assert out.shape == (batch,)
    assert bool(jnp.allclose(out, ref, atol=1e-3, rtol=1e-3)), (out, ref)

    print("KERNEL_OK")
</pallas_src>

<mosaic_0001>
module attributes {stable_mosaic.version = 11 : i64} {
  func.func @fused_gru_kernel(%arg0: i32, %arg1: memref<16x8x32xf32, #tpu.memory_space<vmem>>, %arg2: memref<32x96xf32, #tpu.memory_space<vmem>>, %arg3: memref<1x96xf32, #tpu.memory_space<vmem>>, %arg4: memref<64x224xf32, #tpu.memory_space<vmem>>, %arg5: memref<1x224xf32, #tpu.memory_space<vmem>>, %arg6: memref<16x8x32xf32, #tpu.memory_space<vmem>>, %arg7: memref<1x1xf32, #tpu.memory_space<vmem>>, %arg8: memref<8x1xf32, #tpu.memory_space<vmem>>, %arg9: memref<128x96xf32, #tpu.memory_space<vmem>>) attributes {dimension_semantics = [#tpu.dimension_semantics<parallel>], iteration_bounds = array<i64: 1>, scalar_prefetch = 0 : i64, scratch_operands = 1 : i64, tpu.core_type = #tpu.core_type<tc>, window_params = [{transform_indices = @transform_0, window_bounds = array<i64: 16, 8, 32>}, {pipeline_mode = #tpu.pipeline_mode<synchronous>, transform_indices = @transform_1, window_bounds = array<i64: 32, 96>}, {pipeline_mode = #tpu.pipeline_mode<synchronous>, transform_indices = @transform_2, window_bounds = array<i64: 1, 96>}, {pipeline_mode = #tpu.pipeline_mode<synchronous>, transform_indices = @transform_3, window_bounds = array<i64: 64, 224>}, {pipeline_mode = #tpu.pipeline_mode<synchronous>, transform_indices = @transform_4, window_bounds = array<i64: 1, 224>}, {pipeline_mode = #tpu.pipeline_mode<synchronous>, transform_indices = @transform_5, window_bounds = array<i64: 16, 8, 32>}, {pipeline_mode = #tpu.pipeline_mode<synchronous>, transform_indices = @transform_6, window_bounds = array<i64: 1, 1>}, {transform_indices = @transform_7, window_bounds = array<i64: 8, 1>}]} {
    %c0 = arith.constant 0 : index
    %c0_0 = arith.constant 0 : index
    %c0_1 = arith.constant 0 : index
    %0 = vector.load %arg1[%c0, %c0_0, %c0_1] : memref<16x8x32xf32, #tpu.memory_space<vmem>>, vector<16x8x32xf32>
    %1 = vector.shape_cast %0 : vector<16x8x32xf32> to vector<128x32xf32>
    %c0_2 = arith.constant 0 : index
    %c0_3 = arith.constant 0 : index
    %2 = vector.load %arg2[%c0_2, %c0_3] : memref<32x96xf32, #tpu.memory_space<vmem>>, vector<32x96xf32>
    %cst = arith.constant dense<0.000000e+00> : vector<128x96xf32>
    %3 = tpu.matmul %1, %2, %cst {dimension_numbers = #tpu.dot_dimension_numbers<[1], [0], [0], [1], [0, 0, 1, 1], [], []>} : vector<128x32xf32>, vector<32x96xf32>, vector<128x96xf32> -> vector<128x96xf32>
    %c0_4 = arith.constant 0 : index
    %c0_5 = arith.constant 0 : index
    %4 = vector.load %arg3[%c0_4, %c0_5] : memref<1x96xf32, #tpu.memory_space<vmem>>, vector<1x96xf32>
    %5 = vector.broadcast %4 : vector<1x96xf32> to vector<128x96xf32>
    %6 = arith.addf %3, %5 : vector<128x96xf32>
    %c0_6 = arith.constant 0 : index
    %c0_7 = arith.constant 0 : index
    %7 = vector.load %arg9[%c0_6, %c0_7] : memref<128x96xf32, #tpu.memory_space<vmem>>, vector<128x96xf32>
    tpu.vector_store %arg9[%c0_6, %c0_7], %6 {strides = array<i32>} : memref<128x96xf32, #tpu.memory_space<vmem>>, vector<128x96xf32>,
    %c0_8 = arith.constant 0 : index
    %c0_9 = arith.constant 0 : index
    %8 = vector.load %arg4[%c0_8, %c0_9] : memref<64x224xf32, #tpu.memory_space<vmem>>, vector<64x224xf32>
    %c0_10 = arith.constant 0 : index
    %c0_11 = arith.constant 0 : index
    %9 = vector.load %arg5[%c0_10, %c0_11] : memref<1x224xf32, #tpu.memory_space<vmem>>, vector<1x224xf32>
    %10 = vector.shape_cast %9 : vector<1x224xf32> to vector<1x224xf32>
    %11 = vector.broadcast %10 : vector<1x224xf32> to vector<8x224xf32>
    %cst_12 = arith.constant 0.000000e+00 : f32
    %12 = vector.broadcast %cst_12 : f32 to vector<8x32xf32>
    %cst_13 = arith.constant 0.000000e+00 : f32
    %13 = vector.broadcast %cst_13 : f32 to vector<8x32xf32>
    %cst_14 = arith.constant 0.000000e+00 : f32
    %14 = vector.broadcast %cst_14 : f32 to vector<8x32xf32>
    %c0_15 = arith.constant 0 : index
    %c0_16 = arith.constant 0 : index
    %15 = vector.load %arg9[%c0_15, %c0_16] : memref<128x96xf32, #tpu.memory_space<vmem>>, vector<8x96xf32>
    %16 = vector.extract_strided_slice %15 {offsets = [0, 0], sizes = [8, 64], strides = [1, 1]} : vector<8x96xf32> to vector<8x64xf32>
    %17 = vector.extract_strided_slice %11 {offsets = [0, 0], sizes = [8, 64], strides = [1, 1]} : vector<8x224xf32> to vector<8x64xf32>
    %18 = arith.addf %16, %17 : vector<8x64xf32>
    %19 = arith.negf %18 : vector<8x64xf32>
    %20 = math.exp %19 : vector<8x64xf32>
    %cst_17 = arith.constant 1.000000e+00 : f32
    %21 = vector.broadcast %cst_17 : f32 to vector<8x64xf32>
    %22 = arith.addf %21, %20 : vector<8x64xf32>
    %23 = arith.divf %21, %22 : vector<8x64xf32>
    %24 = vector.extract_strided_slice %23 {offsets = [0, 0], sizes = [8, 32], strides = [1, 1]} : vector<8x64xf32> to vector<8x32xf32>
    %25 = vector.extract_strided_slice %23 {offsets = [0, 32], sizes = [8, 32], strides = [1, 1]} : vector<8x64xf32> to vector<8x32xf32>
    %26 = vector.extract_strided_slice %15 {offsets = [0, 64], sizes = [8, 32], strides = [1, 1]} : vector<8x96xf32> to vector<8x32xf32>
    %27 = vector.extract_strided_slice %11 {offsets = [0, 64], sizes = [8, 32], strides = [1, 1]} : vector<8x224xf32> to vector<8x32xf32>
    %28 = arith.mulf %24, %27 : vector<8x32xf32>
    %29 = arith.addf %26, %28 : vector<8x32xf32>
    %30 = math.tanh %29 : vector<8x32xf32>
    %cst_18 = arith.constant 1.000000e+00 : f32
    %31 = vector.broadcast %cst_18 : f32 to vector<8x32xf32>
    %32 = arith.subf %31, %25 : vector<8x32xf32>
    %33 = arith.mulf %32, %30 : vector<8x32xf32>
    %34 = arith.mulf %25, %12 : vector<8x32xf32>
    %35 = arith.addf %33, %34 : vector<8x32xf32>
    %36 = tpu.concatenate %35, %13 in 1 : vector<8x32xf32>, vector<8x32xf32> -> vector<8x64xf32>
    %cst_19 = arith.constant dense<0.000000e+00> : vector<8x224xf32>
    %37 = tpu.matmul %36, %8, %cst_19 {dimension_numbers = #tpu.dot_dimension_numbers<[1], [0], [0], [1], [0, 0, 1, 1], [], []>} : vector<8x64xf32>, vector<64x224xf32>, vector<8x224xf32> -> vector<8x224xf32>
    %38 = arith.addf %37, %11 : vector<8x224xf32>
    %39 = vector.extract_strided_slice %38 {offsets = [0, 96], sizes = [8, 64], strides = [1, 1]} : vector<8x224xf32> to vector<8x64xf32>
    %40 = arith.negf %39 : vector<8x64xf32>
    %41 = math.exp %40 : vector<8x64xf32>
    %cst_20 = arith.constant 1.000000e+00 : f32
    %42 = vector.broadcast %cst_20 : f32 to vector<8x64xf32>
    %43 = arith.addf %42, %41 : vector<8x64xf32>
    %44 = arith.divf %42, %43 : vector<8x64xf32>
    %45 = vector.extract_strided_slice %44 {offsets = [0, 0], sizes = [8, 32], strides = [1, 1]} : vector<8x64xf32> to vector<8x32xf32>
    %46 = vector.extract_strided_slice %44 {offsets = [0, 32], sizes = [8, 32], strides = [1, 1]} : vector<8x64xf32> to vector<8x32xf32>
    %47 = vector.extract_strided_slice %38 {offsets = [0, 160], sizes = [8, 32], strides = [1, 1]} : vector<8x224xf32> to vector<8x32xf32>
    %48 = vector.extract_strided_slice %38 {offsets = [0, 192], sizes = [8, 32], strides = [1, 1]} : vector<8x224xf32> to vector<8x32xf32>
    %49 = arith.mulf %45, %48 : vector<8x32xf32>
    %50 = arith.addf %47, %49 : vector<8x32xf32>
    %51 = math.tanh %50 : vector<8x32xf32>
    %cst_21 = arith.constant 1.000000e+00 : f32
    %52 = vector.broadcast %cst_21 : f32 to vector<8x32xf32>
    %53 = arith.subf %52, %46 : vector<8x32xf32>
    %54 = arith.mulf %53, %51 : vector<8x32xf32>
    %55 = arith.mulf %46, %13 : vector<8x32xf32>
    %56 = arith.addf %54, %55 : vector<8x32xf32>
    %c0_22 = arith.constant 0 : index
    %c0_23 = arith.constant 0 : index
    %c0_24 = arith.constant 0 : index
    %57 = vector.load %arg6[%c0_22, %c0_23, %c0_24] : memref<16x8x32xf32, #tpu.memory_space<vmem>>, vector<1x8x32xf32>
    %58 = vector.shape_cast %57 : vector<1x8x32xf32> to vector<8x32xf32>
    %59 = arith.mulf %56, %58 : vector<8x32xf32>
    %60 = arith.addf %14, %59 : vector<8x32xf32>
    %c8 = arith.constant 8 : index
    %c0_25 = arith.constant 0 : index
    %61 = vector.load %arg9[%c8, %c0_25] : memref<128x96xf32, #tpu.memory_space<vmem>>, vector<8x96xf32>
    %62 = vector.extract_strided_slice %61 {offsets = [0, 0], sizes = [8, 64], strides = [1, 1]} : vector<8x96xf32> to vector<8x64xf32>
    %63 = vector.extract_strided_slice %38 {offsets = [0, 0], sizes = [8, 64], strides = [1, 1]} : vector<8x224xf32> to vector<8x64xf32>
    %64 = arith.addf %62, %63 : vector<8x64xf32>
    %65 = arith.negf %64 : vector<8x64xf32>
    %66 = math.exp %65 : vector<8x64xf32>
    %cst_26 = arith.constant 1.000000e+00 : f32
    %67 = vector.broadcast %cst_26 : f32 to vector<8x64xf32>
    %68 = arith.addf %67, %66 : vector<8x64xf32>
    %69 = arith.divf %67, %68 : vector<8x64xf32>
    %70 = vector.extract_strided_slice %69 {offsets = [0, 0], sizes = [8, 32], strides = [1, 1]} : vector<8x64xf32> to vector<8x32xf32>
    %71 = vector.extract_strided_slice %69 {offsets = [0, 32], sizes = [8, 32], strides = [1, 1]} : vector<8x64xf32> to vector<8x32xf32>
    %72 = vector.extract_strided_slice %61 {offsets = [0, 64], sizes = [8, 32], strides = [1, 1]} : vector<8x96xf32> to vector<8x32xf32>
    %73 = vector.extract_strided_slice %38 {offsets = [0, 64], sizes = [8, 32], strides = [1, 1]} : vector<8x224xf32> to vector<8x32xf32>
    %74 = arith.mulf %70, %73 : vector<8x32xf32>
    %75 = arith.addf %72, %74 : vector<8x32xf32>
    %76 = math.tanh %75 : vector<8x32xf32>
    %cst_27 = arith.constant 1.000000e+00 : f32
    %77 = vector.broadcast %cst_27 : f32 to vector<8x32xf32>
    %78 = arith.subf %77, %71 : vector<8x32xf32>
    %79 = arith.mulf %78, %76 : vector<8x32xf32>
    %80 = arith.mulf %71, %35 : vector<8x32xf32>
    %81 = arith.addf %79, %80 : vector<8x32xf32>
    %82 = tpu.concatenate %81, %56 in 1 : vector<8x32xf32>, vector<8x32xf32> -> vector<8x64xf32>
    %cst_28 = arith.constant dense<0.000000e+00> : vector<8x224xf32>
    %83 = tpu.matmul %82, %8, %cst_28 {dimension_numbers = #tpu.dot_dimension_numbers<[1], [0], [0], [1], [0, 0, 1, 1], [], []>} : vector<8x64xf32>, vector<64x224xf32>, vector<8x224xf32> -> vector<8x224xf32>
    %84 = arith.addf %83, %11 : vector<8x224xf32>
    %85 = vector.extract_strided_slice %84 {offsets = [0, 96], sizes = [8, 64], strides = [1, 1]} : vector<8x224xf32> to vector<8x64xf32>
    %86 = arith.negf %85 : vector<8x64xf32>
    %87 = math.exp %86 : vector<8x64xf32>
    %cst_29 = arith.constant 1.000000e+00 : f32
    %88 = vector.broadcast %cst_29 : f32 to vector<8x64xf32>
    %89 = arith.addf %88, %87 : vector<8x64xf32>
    %90 = arith.divf %88, %89 : vector<8x64xf32>
    %91 = vector.extract_strided_slice %90 {offsets = [0, 0], sizes = [8, 32], strides = [1, 1]} : vector<8x64xf32> to vector<8x32xf32>
    %92 = vector.extract_strided_slice %90 {offsets = [0, 32], sizes = [8, 32], strides = [1, 1]} : vector<8x64xf32> to vector<8x32xf32>
    %93 = vector.extract_strided_slice %84 {offsets = [0, 160], sizes = [8, 32], strides = [1, 1]} : vector<8x224xf32> to vector<8x32xf32>
    %94 = vector.extract_strided_slice %84 {offsets = [0, 192], sizes = [8, 32], strides = [1, 1]} : vector<8x224xf32> to vector<8x32xf32>
    %95 = arith.mulf %91, %94 : vector<8x32xf32>
    %96 = arith.addf %93, %95 : vector<8x32xf32>
    %97 = math.tanh %96 : vector<8x32xf32>
    %cst_30 = arith.constant 1.000000e+00 : f32
    %98 = vector.broadcast %cst_30 : f32 to vector<8x32xf32>
    %99 = arith.subf %98, %92 : vector<8x32xf32>
    %100 = arith.mulf %99, %97 : vector<8x32xf32>
    %101 = arith.mulf %92, %56 : vector<8x32xf32>
    %102 = arith.addf %100, %101 : vector<8x32xf32>
    %c1 = arith.constant 1 : index
    %c0_31 = arith.constant 0 : index
    %c0_32 = arith.constant 0 : index
    %103 = vector.load %arg6[%c1, %c0_31, %c0_32] : memref<16x8x32xf32, #tpu.memory_space<vmem>>, vector<1x8x32xf32>
    %104 = vector.shape_cast %103 : vector<1x8x32xf32> to vector<8x32xf32>
    %105 = arith.mulf %102, %104 : vector<8x32xf32>
    %106 = arith.addf %60, %105 : vector<8x32xf32>
    %c16 = arith.constant 16 : index
    %c0_33 = arith.constant 0 : index
    %107 = vector.load %arg9[%c16, %c0_33] : memref<128x96xf32, #tpu.memory_space<vmem>>, vector<8x96xf32>
    %108 = vector.extract_strided_slice %107 {offsets = [0, 0], sizes = [8, 64], strides = [1, 1]} : vector<8x96xf32> to vector<8x64xf32>
    %109 = vector.extract_strided_slice %84 {offsets = [0, 0], sizes = [8, 64], strides = [1, 1]} : vector<8x224xf32> to vector<8x64xf32>
    %110 = arith.addf %108, %109 : vector<8x64xf32>
    %111 = arith.negf %110 : vector<8x64xf32>
    %112 = math.exp %111 : vector<8x64xf32>
    %cst_34 = arith.constant 1.000000e+00 : f32
    %113 = vector.broadcast %cst_34 : f32 to vector<8x64xf32>
    %114 = arith.addf %113, %112 : vector<8x64xf32>
    %115 = arith.divf %113, %114 : vector<8x64xf32>
    %116 = vector.extract_strided_slice %115 {offsets = [0, 0], sizes = [8, 32], strides = [1, 1]} : vector<8x64xf32> to vector<8x32xf32>
    %117 = vector.extract_strided_slice %115 {offsets = [0, 32], sizes = [8, 32], strides = [1, 1]} : vector<8x64xf32> to vector<8x32xf32>
    %118 = vector.extract_strided_slice %107 {offsets = [0, 64], sizes = [8, 32], strides = [1, 1]} : vector<8x96xf32> to vector<8x32xf32>
    %119 = vector.extract_strided_slice %84 {offsets = [0, 64], sizes = [8, 32], strides = [1, 1]} : vector<8x224xf32> to vector<8x32xf32>
    %120 = arith.mulf %116, %119 : vector<8x32xf32>
    %121 = arith.addf %118, %120 : vector<8x32xf32>
    %122 = math.tanh %121 : vector<8x32xf32>
    %cst_35 = arith.constant 1.000000e+00 : f32
    %123 = vector.broadcast %cst_35 : f32 to vector<8x32xf32>
    %124 = arith.subf %123, %117 : vector<8x32xf32>
    %125 = arith.mulf %124, %122 : vector<8x32xf32>
    %126 = arith.mulf %117, %81 : vector<8x32xf32>
    %127 = arith.addf %125, %126 : vector<8x32xf32>
    %128 = tpu.concatenate %127, %102 in 1 : vector<8x32xf32>, vector<8x32xf32> -> vector<8x64xf32>
    %cst_36 = arith.constant dense<0.000000e+00> : vector<8x224xf32>
    %129 = tpu.matmul %128, %8, %cst_36 {dimension_numbers = #tpu.dot_dimension_numbers<[1], [0], [0], [1], [0, 0, 1, 1], [], []>} : vector<8x64xf32>, vector<64x224xf32>, vector<8x224xf32> -> vector<8x224xf32>
    %130 = arith.addf %129, %11 : vector<8x224xf32>
    %131 = vector.extract_strided_slice %130 {offsets = [0, 96], sizes = [8, 64], strides = [1, 1]} : vector<8x224xf32> to vector<8x64xf32>
    %132 = arith.negf %131 : vector<8x64xf32>
    %133 = math.exp %132 : vector<8x64xf32>
    %cst_37 = arith.constant 1.000000e+00 : f32
    %134 = vector.broadcast %cst_37 : f32 to vector<8x64xf32>
    %135 = arith.addf %134, %133 : vector<8x64xf32>
    %136 = arith.divf %134, %135 : vector<8x64xf32>
    %137 = vector.extract_strided_slice %136 {offsets = [0, 0], sizes = [8, 32], strides = [1, 1]} : vector<8x64xf32> to vector<8x32xf32>
    %138 = vector.extract_strided_slice %136 {offsets = [0, 32], sizes = [8, 32], strides = [1, 1]} : vector<8x64xf32> to vector<8x32xf32>
    %139 = vector.extract_strided_slice %130 {offsets = [0, 160], sizes = [8, 32], strides = [1, 1]} : vector<8x224xf32> to vector<8x32xf32>
    %140 = vector.extract_strided_slice %130 {offsets = [0, 192], sizes = [8, 32], strides = [1, 1]} : vector<8x224xf32> to vector<8x32xf32>
    %141 = arith.mulf %137, %140 : vector<8x32xf32>
    %142 = arith.addf %139, %141 : vector<8x32xf32>
    %143 = math.tanh %142 : vector<8x32xf32>
    %cst_38 = arith.constant 1.000000e+00 : f32
    %144 = vector.broadcast %cst_38 : f32 to vector<8x32xf32>
    %145 = arith.subf %144, %138 : vector<8x32xf32>
    %146 = arith.mulf %145, %143 : vector<8x32xf32>
    %147 = arith.mulf %138, %102 : vector<8x32xf32>
    %148 = arith.addf %146, %147 : vector<8x32xf32>
    %c2 = arith.constant 2 : index
    %c0_39 = arith.constant 0 : index
    %c0_40 = arith.constant 0 : index
    %149 = vector.load %arg6[%c2, %c0_39, %c0_40] : memref<16x8x32xf32, #tpu.memory_space<vmem>>, vector<1x8x32xf32>
    %150 = vector.shape_cast %149 : vector<1x8x32xf32> to vector<8x32xf32>
    %151 = arith.mulf %148, %150 : vector<8x32xf32>
    %152 = arith.addf %106, %151 : vector<8x32xf32>
    %c24 = arith.constant 24 : index
    %c0_41 = arith.constant 0 : index
    %153 = vector.load %arg9[%c24, %c0_41] : memref<128x96xf32, #tpu.memory_space<vmem>>, vector<8x96xf32>
    %154 = vector.extract_strided_slice %153 {offsets = [0, 0], sizes = [8, 64], strides = [1, 1]} : vector<8x96xf32> to vector<8x64xf32>
    %155 = vector.extract_strided_slice %130 {offsets = [0, 0], sizes = [8, 64], strides = [1, 1]} : vector<8x224xf32> to vector<8x64xf32>
    %156 = arith.addf %154, %155 : vector<8x64xf32>
    %157 = arith.negf %156 : vector<8x64xf32>
    %158 = math.exp %157 : vector<8x64xf32>
    %cst_42 = arith.constant 1.000000e+00 : f32
    %159 = vector.broadcast %cst_42 : f32 to vector<8x64xf32>
    %160 = arith.addf %159, %158 : vector<8x64xf32>
    %161 = arith.divf %159, %160 : vector<8x64xf32>
    %162 = vector.extract_strided_slice %161 {offsets = [0, 0], sizes = [8, 32], strides = [1, 1]} : vector<8x64xf32> to vector<8x32xf32>
    %163 = vector.extract_strided_slice %161 {offsets = [0, 32], sizes = [8, 32], strides = [1, 1]} : vector<8x64xf32> to vector<8x32xf32>
    %164 = vector.extract_strided_slice %153 {offsets = [0, 64], sizes = [8, 32], strides = [1, 1]} : vector<8x96xf32> to vector<8x32xf32>
    %165 = vector.extract_strided_slice %130 {offsets = [0, 64], sizes = [8, 32], strides = [1, 1]} : vector<8x224xf32> to vector<8x32xf32>
    %166 = arith.mulf %162, %165 : vector<8x32xf32>
    %167 = arith.addf %164, %166 : vector<8x32xf32>
    %168 = math.tanh %167 : vector<8x32xf32>
    %cst_43 = arith.constant 1.000000e+00 : f32
    %169 = vector.broadcast %cst_43 : f32 to vector<8x32xf32>
    %170 = arith.subf %169, %163 : vector<8x32xf32>
    %171 = arith.mulf %170, %168 : vector<8x32xf32>
    %172 = arith.mulf %163, %127 : vector<8x32xf32>
    %173 = arith.addf %171, %172 : vector<8x32xf32>
    %174 = tpu.concatenate %173, %148 in 1 : vector<8x32xf32>, vector<8x32xf32> -> vector<8x64xf32>
    %cst_44 = arith.constant dense<0.000000e+00> : vector<8x224xf32>
    %175 = tpu.matmul %174, %8, %cst_44 {dimension_numbers = #tpu.dot_dimension_numbers<[1], [0], [0], [1], [0, 0, 1, 1], [], []>} : vector<8x64xf32>, vector<64x224xf32>, vector<8x224xf32> -> vector<8x224xf32>
    %176 = arith.addf %175, %11 : vector<8x224xf32>
    %177 = vector.extract_strided_slice %176 {offsets = [0, 96], sizes = [8, 64], strides = [1, 1]} : vector<8x224xf32> to vector<8x64xf32>
    %178 = arith.negf %177 : vector<8x64xf32>
    %179 = math.exp %178 : vector<8x64xf32>
    %cst_45 = arith.constant 1.000000e+00 : f32
    %180 = vector.broadcast %cst_45 : f32 to vector<8x64xf32>
    %181 = arith.addf %180, %179 : vector<8x64xf32>
    %182 = arith.divf %180, %181 : vector<8x64xf32>
    %183 = vector.extract_strided_slice %182 {offsets = [0, 0], sizes = [8, 32], strides = [1, 1]} : vector<8x64xf32> to vector<8x32xf32>
    %184 = vector.extract_strided_slice %182 {offsets = [0, 32], sizes = [8, 32], strides = [1, 1]} : vector<8x64xf32> to vector<8x32xf32>
    %185 = vector.extract_strided_slice %176 {offsets = [0, 160], sizes = [8, 32], strides = [1, 1]} : vector<8x224xf32> to vector<8x32xf32>
    %186 = vector.extract_strided_slice %176 {offsets = [0, 192], sizes = [8, 32], strides = [1, 1]} : vector<8x224xf32> to vector<8x32xf32>
    %187 = arith.mulf %183, %186 : vector<8x32xf32>
    %188 = arith.addf %185, %187 : vector<8x32xf32>
    %189 = math.tanh %188 : vector<8x32xf32>
    %cst_46 = arith.constant 1.000000e+00 : f32
    %190 = vector.broadcast %cst_46 : f32 to vector<8x32xf32>
    %191 = arith.subf %190, %184 : vector<8x32xf32>
    %192 = arith.mulf %191, %189 : vector<8x32xf32>
    %193 = arith.mulf %184, %148 : vector<8x32xf32>
    %194 = arith.addf %192, %193 : vector<8x32xf32>
    %c3 = arith.constant 3 : index
    %c0_47 = arith.constant 0 : index
    %c0_48 = arith.constant 0 : index
    %195 = vector.load %arg6[%c3, %c0_47, %c0_48] : memref<16x8x32xf32, #tpu.memory_space<vmem>>, vector<1x8x32xf32>
    %196 = vector.shape_cast %195 : vector<1x8x32xf32> to vector<8x32xf32>
    %197 = arith.mulf %194, %196 : vector<8x32xf32>
    %198 = arith.addf %152, %197 : vector<8x32xf32>
    %c32 = arith.constant 32 : index
    %c0_49 = arith.constant 0 : index
    %199 = vector.load %arg9[%c32, %c0_49] : memref<128x96xf32, #tpu.memory_space<vmem>>, vector<8x96xf32>
    %200 = vector.extract_strided_slice %199 {offsets = [0, 0], sizes = [8, 64], strides = [1, 1]} : vector<8x96xf32> to vector<8x64xf32>
    %201 = vector.extract_strided_slice %176 {offsets = [0, 0], sizes = [8, 64], strides = [1, 1]} : vector<8x224xf32> to vector<8x64xf32>
    %202 = arith.addf %200, %201 : vector<8x64xf32>
    %203 = arith.negf %202 : vector<8x64xf32>
    %204 = math.exp %203 : vector<8x64xf32>
    %cst_50 = arith.constant 1.000000e+00 : f32
    %205 = vector.broadcast %cst_50 : f32 to vector<8x64xf32>
    %206 = arith.addf %205, %204 : vector<8x64xf32>
    %207 = arith.divf %205, %206 : vector<8x64xf32>
    %208 = vector.extract_strided_slice %207 {offsets = [0, 0], sizes = [8, 32], strides = [1, 1]} : vector<8x64xf32> to vector<8x32xf32>
    %209 = vector.extract_strided_slice %207 {offsets = [0, 32], sizes = [8, 32], strides = [1, 1]} : vector<8x64xf32> to vector<8x32xf32>
    %210 = vector.extract_strided_slice %199 {offsets = [0, 64], sizes = [8, 32], strides = [1, 1]} : vector<8x96xf32> to vector<8x32xf32>
    %211 = vector.extract_strided_slice %176 {offsets = [0, 64], sizes = [8, 32], strides = [1, 1]} : vector<8x224xf32> to vector<8x32xf32>
    %212 = arith.mulf %208, %211 : vector<8x32xf32>
    %213 = arith.addf %210, %212 : vector<8x32xf32>
    %214 = math.tanh %213 : vector<8x32xf32>
    %cst_51 = arith.constant 1.000000e+00 : f32
    %215 = vector.broadcast %cst_51 : f32 to vector<8x32xf32>
    %216 = arith.subf %215, %209 : vector<8x32xf32>
    %217 = arith.mulf %216, %214 : vector<8x32xf32>
    %218 = arith.mulf %209, %173 : vector<8x32xf32>
    %219 = arith.addf %217, %218 : vector<8x32xf32>
    %220 = tpu.concatenate %219, %194 in 1 : vector<8x32xf32>, vector<8x32xf32> -> vector<8x64xf32>
    %cst_52 = arith.constant dense<0.000000e+00> : vector<8x224xf32>
    %221 = tpu.matmul %220, %8, %cst_52 {dimension_numbers = #tpu.dot_dimension_numbers<[1], [0], [0], [1], [0, 0, 1, 1], [], []>} : vector<8x64xf32>, vector<64x224xf32>, vector<8x224xf32> -> vector<8x224xf32>
    %222 = arith.addf %221, %11 : vector<8x224xf32>
    %223 = vector.extract_strided_slice %222 {offsets = [0, 96], sizes = [8, 64], strides = [1, 1]} : vector<8x224xf32> to vector<8x64xf32>
    %224 = arith.negf %223 : vector<8x64xf32>
    %225 = math.exp %224 : vector<8x64xf32>
    %cst_53 = arith.constant 1.000000e+00 : f32
    %226 = vector.broadcast %cst_53 : f32 to vector<8x64xf32>
    %227 = arith.addf %226, %225 : vector<8x64xf32>
    %228 = arith.divf %226, %227 : vector<8x64xf32>
    %229 = vector.extract_strided_slice %228 {offsets = [0, 0], sizes = [8, 32], strides = [1, 1]} : vector<8x64xf32> to vector<8x32xf32>
    %230 = vector.extract_strided_slice %228 {offsets = [0, 32], sizes = [8, 32], strides = [1, 1]} : vector<8x64xf32> to vector<8x32xf32>
    %231 = vector.extract_strided_slice %222 {offsets = [0, 160], sizes = [8, 32], strides = [1, 1]} : vector<8x224xf32> to vector<8x32xf32>
    %232 = vector.extract_strided_slice %222 {offsets = [0, 192], sizes = [8, 32], strides = [1, 1]} : vector<8x224xf32> to vector<8x32xf32>
    %233 = arith.mulf %229, %232 : vector<8x32xf32>
    %234 = arith.addf %231, %233 : vector<8x32xf32>
    %235 = math.tanh %234 : vector<8x32xf32>
    %cst_54 = arith.constant 1.000000e+00 : f32
    %236 = vector.broadcast %cst_54 : f32 to vector<8x32xf32>
    %237 = arith.subf %236, %230 : vector<8x32xf32>
    %238 = arith.mulf %237, %235 : vector<8x32xf32>
    %239 = arith.mulf %230, %194 : vector<8x32xf32>
    %240 = arith.addf %238, %239 : vector<8x32xf32>
    %c4 = arith.constant 4 : index
    %c0_55 = arith.constant 0 : index
    %c0_56 = arith.constant 0 : index
    %241 = vector.load %arg6[%c4, %c0_55, %c0_56] : memref<16x8x32xf32, #tpu.memory_space<vmem>>, vector<1x8x32xf32>
    %242 = vector.shape_cast %241 : vector<1x8x32xf32> to vector<8x32xf32>
    %243 = arith.mulf %240, %242 : vector<8x32xf32>
    %244 = arith.addf %198, %243 : vector<8x32xf32>
    %c40 = arith.constant 40 : index
    %c0_57 = arith.constant 0 : index
    %245 = vector.load %arg9[%c40, %c0_57] : memref<128x96xf32, #tpu.memory_space<vmem>>, vector<8x96xf32>
    %246 = vector.extract_strided_slice %245 {offsets = [0, 0], sizes = [8, 64], strides = [1, 1]} : vector<8x96xf32> to vector<8x64xf32>
    %247 = vector.extract_strided_slice %222 {offsets = [0, 0], sizes = [8, 64], strides = [1, 1]} : vector<8x224xf32> to vector<8x64xf32>
    %248 = arith.addf %246, %247 : vector<8x64xf32>
    %249 = arith.negf %248 : vector<8x64xf32>
    %250 = math.exp %249 : vector<8x64xf32>
    %cst_58 = arith.constant 1.000000e+00 : f32
    %251 = vector.broadcast %cst_58 : f32 to vector<8x64xf32>
    %252 = arith.addf %251, %250 : vector<8x64xf32>
    %253 = arith.divf %251, %252 : vector<8x64xf32>
    %254 = vector.extract_strided_slice %253 {offsets = [0, 0], sizes = [8, 32], strides = [1, 1]} : vector<8x64xf32> to vector<8x32xf32>
    %255 = vector.extract_strided_slice %253 {offsets = [0, 32], sizes = [8, 32], strides = [1, 1]} : vector<8x64xf32> to vector<8x32xf32>
    %256 = vector.extract_strided_slice %245 {offsets = [0, 64], sizes = [8, 32], strides = [1, 1]} : vector<8x96xf32> to vector<8x32xf32>
    %257 = vector.extract_strided_slice %222 {offsets = [0, 64], sizes = [8, 32], strides = [1, 1]} : vector<8x224xf32> to vector<8x32xf32>
    %258 = arith.mulf %254, %257 : vector<8x32xf32>
    %259 = arith.addf %256, %258 : vector<8x32xf32>
    %260 = math.tanh %259 : vector<8x32xf32>
    %cst_59 = arith.constant 1.000000e+00 : f32
    %261 = vector.broadcast %cst_59 : f32 to vector<8x32xf32>
    %262 = arith.subf %261, %255 : vector<8x32xf32>
    %263 = arith.mulf %262, %260 : vector<8x32xf32>
    %264 = arith.mulf %255, %219 : vector<8x32xf32>
    %265 = arith.addf %263, %264 : vector<8x32xf32>
    %266 = tpu.concatenate %265, %240 in 1 : vector<8x32xf32>, vector<8x32xf32> -> vector<8x64xf32>
    %cst_60 = arith.constant dense<0.000000e+00> : vector<8x224xf32>
    %267 = tpu.matmul %266, %8, %cst_60 {dimension_numbers = #tpu.dot_dimension_numbers<[1], [0], [0], [1], [0, 0, 1, 1], [], []>} : vector<8x64xf32>, vector<64x224xf32>, vector<8x224xf32> -> vector<8x224xf32>
    %268 = arith.addf %267, %11 : vector<8x224xf32>
    %269 = vector.extract_strided_slice %268 {offsets = [0, 96], sizes = [8, 64], strides = [1, 1]} : vector<8x224xf32> to vector<8x64xf32>
    %270 = arith.negf %269 : vector<8x64xf32>
    %271 = math.exp %270 : vector<8x64xf32>
    %cst_61 = arith.constant 1.000000e+00 : f32
    %272 = vector.broadcast %cst_61 : f32 to vector<8x64xf32>
    %273 = arith.addf %272, %271 : vector<8x64xf32>
    %274 = arith.divf %272, %273 : vector<8x64xf32>
    %275 = vector.extract_strided_slice %274 {offsets = [0, 0], sizes = [8, 32], strides = [1, 1]} : vector<8x64xf32> to vector<8x32xf32>
    %276 = vector.extract_strided_slice %274 {offsets = [0, 32], sizes = [8, 32], strides = [1, 1]} : vector<8x64xf32> to vector<8x32xf32>
    %277 = vector.extract_strided_slice %268 {offsets = [0, 160], sizes = [8, 32], strides = [1, 1]} : vector<8x224xf32> to vector<8x32xf32>
    %278 = vector.extract_strided_slice %268 {offsets = [0, 192], sizes = [8, 32], strides = [1, 1]} : vector<8x224xf32> to vector<8x32xf32>
    %279 = arith.mulf %275, %278 : vector<8x32xf32>
    %280 = arith.addf %277, %279 : vector<8x32xf32>
    %281 = math.tanh %280 : vector<8x32xf32>
    %cst_62 = arith.constant 1.000000e+00 : f32
    %282 = vector.broadcast %cst_62 : f32 to vector<8x32xf32>
    %283 = arith.subf %282, %276 : vector<8x32xf32>
    %284 = arith.mulf %283, %281 : vector<8x32xf32>
    %285 = arith.mulf %276, %240 : vector<8x32xf32>
    %286 = arith.addf %284, %285 : vector<8x32xf32>
    %c5 = arith.constant 5 : index
    %c0_63 = arith.constant 0 : index
    %c0_64 = arith.constant 0 : index
    %287 = vector.load %arg6[%c5, %c0_63, %c0_64] : memref<16x8x32xf32, #tpu.memory_space<vmem>>, vector<1x8x32xf32>
    %288 = vector.shape_cast %287 : vector<1x8x32xf32> to vector<8x32xf32>
    %289 = arith.mulf %286, %288 : vector<8x32xf32>
    %290 = arith.addf %244, %289 : vector<8x32xf32>
    %c48 = arith.constant 48 : index
    %c0_65 = arith.constant 0 : index
    %291 = vector.load %arg9[%c48, %c0_65] : memref<128x96xf32, #tpu.memory_space<vmem>>, vector<8x96xf32>
    %292 = vector.extract_strided_slice %291 {offsets = [0, 0], sizes = [8, 64], strides = [1, 1]} : vector<8x96xf32> to vector<8x64xf32>
    %293 = vector.extract_strided_slice %268 {offsets = [0, 0], sizes = [8, 64], strides = [1, 1]} : vector<8x224xf32> to vector<8x64xf32>
    %294 = arith.addf %292, %293 : vector<8x64xf32>
    %295 = arith.negf %294 : vector<8x64xf32>
    %296 = math.exp %295 : vector<8x64xf32>
    %cst_66 = arith.constant 1.000000e+00 : f32
    %297 = vector.broadcast %cst_66 : f32 to vector<8x64xf32>
    %298 = arith.addf %297, %296 : vector<8x64xf32>
    %299 = arith.divf %297, %298 : vector<8x64xf32>
    %300 = vector.extract_strided_slice %299 {offsets = [0, 0], sizes = [8, 32], strides = [1, 1]} : vector<8x64xf32> to vector<8x32xf32>
    %301 = vector.extract_strided_slice %299 {offsets = [0, 32], sizes = [8, 32], strides = [1, 1]} : vector<8x64xf32> to vector<8x32xf32>
    %302 = vector.extract_strided_slice %291 {offsets = [0, 64], sizes = [8, 32], strides = [1, 1]} : vector<8x96xf32> to vector<8x32xf32>
    %303 = vector.extract_strided_slice %268 {offsets = [0, 64], sizes = [8, 32], strides = [1, 1]} : vector<8x224xf32> to vector<8x32xf32>
    %304 = arith.mulf %300, %303 : vector<8x32xf32>
    %305 = arith.addf %302, %304 : vector<8x32xf32>
    %306 = math.tanh %305 : vector<8x32xf32>
    %cst_67 = arith.constant 1.000000e+00 : f32
    %307 = vector.broadcast %cst_67 : f32 to vector<8x32xf32>
    %308 = arith.subf %307, %301 : vector<8x32xf32>
    %309 = arith.mulf %308, %306 : vector<8x32xf32>
    %310 = arith.mulf %301, %265 : vector<8x32xf32>
    %311 = arith.addf %309, %310 : vector<8x32xf32>
    %312 = tpu.concatenate %311, %286 in 1 : vector<8x32xf32>, vector<8x32xf32> -> vector<8x64xf32>
    %cst_68 = arith.constant dense<0.000000e+00> : vector<8x224xf32>
    %313 = tpu.matmul %312, %8, %cst_68 {dimension_numbers = #tpu.dot_dimension_numbers<[1], [0], [0], [1], [0, 0, 1, 1], [], []>} : vector<8x64xf32>, vector<64x224xf32>, vector<8x224xf32> -> vector<8x224xf32>
    %314 = arith.addf %313, %11 : vector<8x224xf32>
    %315 = vector.extract_strided_slice %314 {offsets = [0, 96], sizes = [8, 64], strides = [1, 1]} : vector<8x224xf32> to vector<8x64xf32>
    %316 = arith.negf %315 : vector<8x64xf32>
    %317 = math.exp %316 : vector<8x64xf32>
    %cst_69 = arith.constant 1.000000e+00 : f32
    %318 = vector.broadcast %cst_69 : f32 to vector<8x64xf32>
    %319 = arith.addf %318, %317 : vector<8x64xf32>
    %320 = arith.divf %318, %319 : vector<8x64xf32>
    %321 = vector.extract_strided_slice %320 {offsets = [0, 0], sizes = [8, 32], strides = [1, 1]} : vector<8x64xf32> to vector<8x32xf32>
    %322 = vector.extract_strided_slice %320 {offsets = [0, 32], sizes = [8, 32], strides = [1, 1]} : vector<8x64xf32> to vector<8x32xf32>
    %323 = vector.extract_strided_slice %314 {offsets = [0, 160], sizes = [8, 32], strides = [1, 1]} : vector<8x224xf32> to vector<8x32xf32>
    %324 = vector.extract_strided_slice %314 {offsets = [0, 192], sizes = [8, 32], strides = [1, 1]} : vector<8x224xf32> to vector<8x32xf32>
    %325 = arith.mulf %321, %324 : vector<8x32xf32>
    %326 = arith.addf %323, %325 : vector<8x32xf32>
    %327 = math.tanh %326 : vector<8x32xf32>
    %cst_70 = arith.constant 1.000000e+00 : f32
    %328 = vector.broadcast %cst_70 : f32 to vector<8x32xf32>
    %329 = arith.subf %328, %322 : vector<8x32xf32>
    %330 = arith.mulf %329, %327 : vector<8x32xf32>
    %331 = arith.mulf %322, %286 : vector<8x32xf32>
    %332 = arith.addf %330, %331 : vector<8x32xf32>
    %c6 = arith.constant 6 : index
    %c0_71 = arith.constant 0 : index
    %c0_72 = arith.constant 0 : index
    %333 = vector.load %arg6[%c6, %c0_71, %c0_72] : memref<16x8x32xf32, #tpu.memory_space<vmem>>, vector<1x8x32xf32>
    %334 = vector.shape_cast %333 : vector<1x8x32xf32> to vector<8x32xf32>
    %335 = arith.mulf %332, %334 : vector<8x32xf32>
    %336 = arith.addf %290, %335 : vector<8x32xf32>
    %c56 = arith.constant 56 : index
    %c0_73 = arith.constant 0 : index
    %337 = vector.load %arg9[%c56, %c0_73] : memref<128x96xf32, #tpu.memory_space<vmem>>, vector<8x96xf32>
    %338 = vector.extract_strided_slice %337 {offsets = [0, 0], sizes = [8, 64], strides = [1, 1]} : vector<8x96xf32> to vector<8x64xf32>
    %339 = vector.extract_strided_slice %314 {offsets = [0, 0], sizes = [8, 64], strides = [1, 1]} : vector<8x224xf32> to vector<8x64xf32>
    %340 = arith.addf %338, %339 : vector<8x64xf32>
    %341 = arith.negf %340 : vector<8x64xf32>
    %342 = math.exp %341 : vector<8x64xf32>
    %cst_74 = arith.constant 1.000000e+00 : f32
    %343 = vector.broadcast %cst_74 : f32 to vector<8x64xf32>
    %344 = arith.addf %343, %342 : vector<8x64xf32>
    %345 = arith.divf %343, %344 : vector<8x64xf32>
    %346 = vector.extract_strided_slice %345 {offsets = [0, 0], sizes = [8, 32], strides = [1, 1]} : vector<8x64xf32> to vector<8x32xf32>
    %347 = vector.extract_strided_slice %345 {offsets = [0, 32], sizes = [8, 32], strides = [1, 1]} : vector<8x64xf32> to vector<8x32xf32>
    %348 = vector.extract_strided_slice %337 {offsets = [0, 64], sizes = [8, 32], strides = [1, 1]} : vector<8x96xf32> to vector<8x32xf32>
    %349 = vector.extract_strided_slice %314 {offsets = [0, 64], sizes = [8, 32], strides = [1, 1]} : vector<8x224xf32> to vector<8x32xf32>
    %350 = arith.mulf %346, %349 : vector<8x32xf32>
    %351 = arith.addf %348, %350 : vector<8x32xf32>
    %352 = math.tanh %351 : vector<8x32xf32>
    %cst_75 = arith.constant 1.000000e+00 : f32
    %353 = vector.broadcast %cst_75 : f32 to vector<8x32xf32>
    %354 = arith.subf %353, %347 : vector<8x32xf32>
    %355 = arith.mulf %354, %352 : vector<8x32xf32>
    %356 = arith.mulf %347, %311 : vector<8x32xf32>
    %357 = arith.addf %355, %356 : vector<8x32xf32>
    %358 = tpu.concatenate %357, %332 in 1 : vector<8x32xf32>, vector<8x32xf32> -> vector<8x64xf32>
    %cst_76 = arith.constant dense<0.000000e+00> : vector<8x224xf32>
    %359 = tpu.matmul %358, %8, %cst_76 {dimension_numbers = #tpu.dot_dimension_numbers<[1], [0], [0], [1], [0, 0, 1, 1], [], []>} : vector<8x64xf32>, vector<64x224xf32>, vector<8x224xf32> -> vector<8x224xf32>
    %360 = arith.addf %359, %11 : vector<8x224xf32>
    %361 = vector.extract_strided_slice %360 {offsets = [0, 96], sizes = [8, 64], strides = [1, 1]} : vector<8x224xf32> to vector<8x64xf32>
    %362 = arith.negf %361 : vector<8x64xf32>
    %363 = math.exp %362 : vector<8x64xf32>
    %cst_77 = arith.constant 1.000000e+00 : f32
    %364 = vector.broadcast %cst_77 : f32 to vector<8x64xf32>
    %365 = arith.addf %364, %363 : vector<8x64xf32>
    %366 = arith.divf %364, %365 : vector<8x64xf32>
    %367 = vector.extract_strided_slice %366 {offsets = [0, 0], sizes = [8, 32], strides = [1, 1]} : vector<8x64xf32> to vector<8x32xf32>
    %368 = vector.extract_strided_slice %366 {offsets = [0, 32], sizes = [8, 32], strides = [1, 1]} : vector<8x64xf32> to vector<8x32xf32>
    %369 = vector.extract_strided_slice %360 {offsets = [0, 160], sizes = [8, 32], strides = [1, 1]} : vector<8x224xf32> to vector<8x32xf32>
    %370 = vector.extract_strided_slice %360 {offsets = [0, 192], sizes = [8, 32], strides = [1, 1]} : vector<8x224xf32> to vector<8x32xf32>
    %371 = arith.mulf %367, %370 : vector<8x32xf32>
    %372 = arith.addf %369, %371 : vector<8x32xf32>
    %373 = math.tanh %372 : vector<8x32xf32>
    %cst_78 = arith.constant 1.000000e+00 : f32
    %374 = vector.broadcast %cst_78 : f32 to vector<8x32xf32>
    %375 = arith.subf %374, %368 : vector<8x32xf32>
    %376 = arith.mulf %375, %373 : vector<8x32xf32>
    %377 = arith.mulf %368, %332 : vector<8x32xf32>
    %378 = arith.addf %376, %377 : vector<8x32xf32>
    %c7 = arith.constant 7 : index
    %c0_79 = arith.constant 0 : index
    %c0_80 = arith.constant 0 : index
    %379 = vector.load %arg6[%c7, %c0_79, %c0_80] : memref<16x8x32xf32, #tpu.memory_space<vmem>>, vector<1x8x32xf32>
    %380 = vector.shape_cast %379 : vector<1x8x32xf32> to vector<8x32xf32>
    %381 = arith.mulf %378, %380 : vector<8x32xf32>
    %382 = arith.addf %336, %381 : vector<8x32xf32>
    %c64 = arith.constant 64 : index
    %c0_81 = arith.constant 0 : index
    %383 = vector.load %arg9[%c64, %c0_81] : memref<128x96xf32, #tpu.memory_space<vmem>>, vector<8x96xf32>
    %384 = vector.extract_strided_slice %383 {offsets = [0, 0], sizes = [8, 64], strides = [1, 1]} : vector<8x96xf32> to vector<8x64xf32>
    %385 = vector.extract_strided_slice %360 {offsets = [0, 0], sizes = [8, 64], strides = [1, 1]} : vector<8x224xf32> to vector<8x64xf32>
    %386 = arith.addf %384, %385 : vector<8x64xf32>
    %387 = arith.negf %386 : vector<8x64xf32>
    %388 = math.exp %387 : vector<8x64xf32>
    %cst_82 = arith.constant 1.000000e+00 : f32
    %389 = vector.broadcast %cst_82 : f32 to vector<8x64xf32>
    %390 = arith.addf %389, %388 : vector<8x64xf32>
    %391 = arith.divf %389, %390 : vector<8x64xf32>
    %392 = vector.extract_strided_slice %391 {offsets = [0, 0], sizes = [8, 32], strides = [1, 1]} : vector<8x64xf32> to vector<8x32xf32>
    %393 = vector.extract_strided_slice %391 {offsets = [0, 32], sizes = [8, 32], strides = [1, 1]} : vector<8x64xf32> to vector<8x32xf32>
    %394 = vector.extract_strided_slice %383 {offsets = [0, 64], sizes = [8, 32], strides = [1, 1]} : vector<8x96xf32> to vector<8x32xf32>
    %395 = vector.extract_strided_slice %360 {offsets = [0, 64], sizes = [8, 32], strides = [1, 1]} : vector<8x224xf32> to vector<8x32xf32>
    %396 = arith.mulf %392, %395 : vector<8x32xf32>
    %397 = arith.addf %394, %396 : vector<8x32xf32>
    %398 = math.tanh %397 : vector<8x32xf32>
    %cst_83 = arith.constant 1.000000e+00 : f32
    %399 = vector.broadcast %cst_83 : f32 to vector<8x32xf32>
    %400 = arith.subf %399, %393 : vector<8x32xf32>
    %401 = arith.mulf %400, %398 : vector<8x32xf32>
    %402 = arith.mulf %393, %357 : vector<8x32xf32>
    %403 = arith.addf %401, %402 : vector<8x32xf32>
    %404 = tpu.concatenate %403, %378 in 1 : vector<8x32xf32>, vector<8x32xf32> -> vector<8x64xf32>
    %cst_84 = arith.constant dense<0.000000e+00> : vector<8x224xf32>
    %405 = tpu.matmul %404, %8, %cst_84 {dimension_numbers = #tpu.dot_dimension_numbers<[1], [0], [0], [1], [0, 0, 1, 1], [], []>} : vector<8x64xf32>, vector<64x224xf32>, vector<8x224xf32> -> vector<8x224xf32>
    %406 = arith.addf %405, %11 : vector<8x224xf32>
    %407 = vector.extract_strided_slice %406 {offsets = [0, 96], sizes = [8, 64], strides = [1, 1]} : vector<8x224xf32> to vector<8x64xf32>
    %408 = arith.negf %407 : vector<8x64xf32>
    %409 = math.exp %408 : vector<8x64xf32>
    %cst_85 = arith.constant 1.000000e+00 : f32
    %410 = vector.broadcast %cst_85 : f32 to vector<8x64xf32>
    %411 = arith.addf %410, %409 : vector<8x64xf32>
    %412 = arith.divf %410, %411 : vector<8x64xf32>
    %413 = vector.extract_strided_slice %412 {offsets = [0, 0], sizes = [8, 32], strides = [1, 1]} : vector<8x64xf32> to vector<8x32xf32>
    %414 = vector.extract_strided_slice %412 {offsets = [0, 32], sizes = [8, 32], strides = [1, 1]} : vector<8x64xf32> to vector<8x32xf32>
    %415 = vector.extract_strided_slice %406 {offsets = [0, 160], sizes = [8, 32], strides = [1, 1]} : vector<8x224xf32> to vector<8x32xf32>
    %416 = vector.extract_strided_slice %406 {offsets = [0, 192], sizes = [8, 32], strides = [1, 1]} : vector<8x224xf32> to vector<8x32xf32>
    %417 = arith.mulf %413, %416 : vector<8x32xf32>
    %418 = arith.addf %415, %417 : vector<8x32xf32>
    %419 = math.tanh %418 : vector<8x32xf32>
    %cst_86 = arith.constant 1.000000e+00 : f32
    %420 = vector.broadcast %cst_86 : f32 to vector<8x32xf32>
    %421 = arith.subf %420, %414 : vector<8x32xf32>
    %422 = arith.mulf %421, %419 : vector<8x32xf32>
    %423 = arith.mulf %414, %378 : vector<8x32xf32>
    %424 = arith.addf %422, %423 : vector<8x32xf32>
    %c8_87 = arith.constant 8 : index
    %c0_88 = arith.constant 0 : index
    %c0_89 = arith.constant 0 : index
    %425 = vector.load %arg6[%c8_87, %c0_88, %c0_89] : memref<16x8x32xf32, #tpu.memory_space<vmem>>, vector<1x8x32xf32>
    %426 = vector.shape_cast %425 : vector<1x8x32xf32> to vector<8x32xf32>
    %427 = arith.mulf %424, %426 : vector<8x32xf32>
    %428 = arith.addf %382, %427 : vector<8x32xf32>
    %c72 = arith.constant 72 : index
    %c0_90 = arith.constant 0 : index
    %429 = vector.load %arg9[%c72, %c0_90] : memref<128x96xf32, #tpu.memory_space<vmem>>, vector<8x96xf32>
    %430 = vector.extract_strided_slice %429 {offsets = [0, 0], sizes = [8, 64], strides = [1, 1]} : vector<8x96xf32> to vector<8x64xf32>
    %431 = vector.extract_strided_slice %406 {offsets = [0, 0], sizes = [8, 64], strides = [1, 1]} : vector<8x224xf32> to vector<8x64xf32>
    %432 = arith.addf %430, %431 : vector<8x64xf32>
    %433 = arith.negf %432 : vector<8x64xf32>
    %434 = math.exp %433 : vector<8x64xf32>
    %cst_91 = arith.constant 1.000000e+00 : f32
    %435 = vector.broadcast %cst_91 : f32 to vector<8x64xf32>
    %436 = arith.addf %435, %434 : vector<8x64xf32>
    %437 = arith.divf %435, %436 : vector<8x64xf32>
    %438 = vector.extract_strided_slice %437 {offsets = [0, 0], sizes = [8, 32], strides = [1, 1]} : vector<8x64xf32> to vector<8x32xf32>
    %439 = vector.extract_strided_slice %437 {offsets = [0, 32], sizes = [8, 32], strides = [1, 1]} : vector<8x64xf32> to vector<8x32xf32>
    %440 = vector.extract_strided_slice %429 {offsets = [0, 64], sizes = [8, 32], strides = [1, 1]} : vector<8x96xf32> to vector<8x32xf32>
    %441 = vector.extract_strided_slice %406 {offsets = [0, 64], sizes = [8, 32], strides = [1, 1]} : vector<8x224xf32> to vector<8x32xf32>
    %442 = arith.mulf %438, %441 : vector<8x32xf32>
    %443 = arith.addf %440, %442 : vector<8x32xf32>
    %444 = math.tanh %443 : vector<8x32xf32>
    %cst_92 = arith.constant 1.000000e+00 : f32
    %445 = vector.broadcast %cst_92 : f32 to vector<8x32xf32>
    %446 = arith.subf %445, %439 : vector<8x32xf32>
    %447 = arith.mulf %446, %444 : vector<8x32xf32>
    %448 = arith.mulf %439, %403 : vector<8x32xf32>
    %449 = arith.addf %447, %448 : vector<8x32xf32>
    %450 = tpu.concatenate %449, %424 in 1 : vector<8x32xf32>, vector<8x32xf32> -> vector<8x64xf32>
    %cst_93 = arith.constant dense<0.000000e+00> : vector<8x224xf32>
    %451 = tpu.matmul %450, %8, %cst_93 {dimension_numbers = #tpu.dot_dimension_numbers<[1], [0], [0], [1], [0, 0, 1, 1], [], []>} : vector<8x64xf32>, vector<64x224xf32>, vector<8x224xf32> -> vector<8x224xf32>
    %452 = arith.addf %451, %11 : vector<8x224xf32>
    %453 = vector.extract_strided_slice %452 {offsets = [0, 96], sizes = [8, 64], strides = [1, 1]} : vector<8x224xf32> to vector<8x64xf32>
    %454 = arith.negf %453 : vector<8x64xf32>
    %455 = math.exp %454 : vector<8x64xf32>
    %cst_94 = arith.constant 1.000000e+00 : f32
    %456 = vector.broadcast %cst_94 : f32 to vector<8x64xf32>
    %457 = arith.addf %456, %455 : vector<8x64xf32>
    %458 = arith.divf %456, %457 : vector<8x64xf32>
    %459 = vector.extract_strided_slice %458 {offsets = [0, 0], sizes = [8, 32], strides = [1, 1]} : vector<8x64xf32> to vector<8x32xf32>
    %460 = vector.extract_strided_slice %458 {offsets = [0, 32], sizes = [8, 32], strides = [1, 1]} : vector<8x64xf32> to vector<8x32xf32>
    %461 = vector.extract_strided_slice %452 {offsets = [0, 160], sizes = [8, 32], strides = [1, 1]} : vector<8x224xf32> to vector<8x32xf32>
    %462 = vector.extract_strided_slice %452 {offsets = [0, 192], sizes = [8, 32], strides = [1, 1]} : vector<8x224xf32> to vector<8x32xf32>
    %463 = arith.mulf %459, %462 : vector<8x32xf32>
    %464 = arith.addf %461, %463 : vector<8x32xf32>
    %465 = math.tanh %464 : vector<8x32xf32>
    %cst_95 = arith.constant 1.000000e+00 : f32
    %466 = vector.broadcast %cst_95 : f32 to vector<8x32xf32>
    %467 = arith.subf %466, %460 : vector<8x32xf32>
    %468 = arith.mulf %467, %465 : vector<8x32xf32>
    %469 = arith.mulf %460, %424 : vector<8x32xf32>
    %470 = arith.addf %468, %469 : vector<8x32xf32>
    %c9 = arith.constant 9 : index
    %c0_96 = arith.constant 0 : index
    %c0_97 = arith.constant 0 : index
    %471 = vector.load %arg6[%c9, %c0_96, %c0_97] : memref<16x8x32xf32, #tpu.memory_space<vmem>>, vector<1x8x32xf32>
    %472 = vector.shape_cast %471 : vector<1x8x32xf32> to vector<8x32xf32>
    %473 = arith.mulf %470, %472 : vector<8x32xf32>
    %474 = arith.addf %428, %473 : vector<8x32xf32>
    %c80 = arith.constant 80 : index
    %c0_98 = arith.constant 0 : index
    %475 = vector.load %arg9[%c80, %c0_98] : memref<128x96xf32, #tpu.memory_space<vmem>>, vector<8x96xf32>
    %476 = vector.extract_strided_slice %475 {offsets = [0, 0], sizes = [8, 64], strides = [1, 1]} : vector<8x96xf32> to vector<8x64xf32>
    %477 = vector.extract_strided_slice %452 {offsets = [0, 0], sizes = [8, 64], strides = [1, 1]} : vector<8x224xf32> to vector<8x64xf32>
    %478 = arith.addf %476, %477 : vector<8x64xf32>
    %479 = arith.negf %478 : vector<8x64xf32>
    %480 = math.exp %479 : vector<8x64xf32>
    %cst_99 = arith.constant 1.000000e+00 : f32
    %481 = vector.broadcast %cst_99 : f32 to vector<8x64xf32>
    %482 = arith.addf %481, %480 : vector<8x64xf32>
    %483 = arith.divf %481, %482 : vector<8x64xf32>
    %484 = vector.extract_strided_slice %483 {offsets = [0, 0], sizes = [8, 32], strides = [1, 1]} : vector<8x64xf32> to vector<8x32xf32>
    %485 = vector.extract_strided_slice %483 {offsets = [0, 32], sizes = [8, 32], strides = [1, 1]} : vector<8x64xf32> to vector<8x32xf32>
    %486 = vector.extract_strided_slice %475 {offsets = [0, 64], sizes = [8, 32], strides = [1, 1]} : vector<8x96xf32> to vector<8x32xf32>
    %487 = vector.extract_strided_slice %452 {offsets = [0, 64], sizes = [8, 32], strides = [1, 1]} : vector<8x224xf32> to vector<8x32xf32>
    %488 = arith.mulf %484, %487 : vector<8x32xf32>
    %489 = arith.addf %486, %488 : vector<8x32xf32>
    %490 = math.tanh %489 : vector<8x32xf32>
    %cst_100 = arith.constant 1.000000e+00 : f32
    %491 = vector.broadcast %cst_100 : f32 to vector<8x32xf32>
    %492 = arith.subf %491, %485 : vector<8x32xf32>
    %493 = arith.mulf %492, %490 : vector<8x32xf32>
    %494 = arith.mulf %485, %449 : vector<8x32xf32>
    %495 = arith.addf %493, %494 : vector<8x32xf32>
    %496 = tpu.concatenate %495, %470 in 1 : vector<8x32xf32>, vector<8x32xf32> -> vector<8x64xf32>
    %cst_101 = arith.constant dense<0.000000e+00> : vector<8x224xf32>
    %497 = tpu.matmul %496, %8, %cst_101 {dimension_numbers = #tpu.dot_dimension_numbers<[1], [0], [0], [1], [0, 0, 1, 1], [], []>} : vector<8x64xf32>, vector<64x224xf32>, vector<8x224xf32> -> vector<8x224xf32>
    %498 = arith.addf %497, %11 : vector<8x224xf32>
    %499 = vector.extract_strided_slice %498 {offsets = [0, 96], sizes = [8, 64], strides = [1, 1]} : vector<8x224xf32> to vector<8x64xf32>
    %500 = arith.negf %499 : vector<8x64xf32>
    %501 = math.exp %500 : vector<8x64xf32>
    %cst_102 = arith.constant 1.000000e+00 : f32
    %502 = vector.broadcast %cst_102 : f32 to vector<8x64xf32>
    %503 = arith.addf %502, %501 : vector<8x64xf32>
    %504 = arith.divf %502, %503 : vector<8x64xf32>
    %505 = vector.extract_strided_slice %504 {offsets = [0, 0], sizes = [8, 32], strides = [1, 1]} : vector<8x64xf32> to vector<8x32xf32>
    %506 = vector.extract_strided_slice %504 {offsets = [0, 32], sizes = [8, 32], strides = [1, 1]} : vector<8x64xf32> to vector<8x32xf32>
    %507 = vector.extract_strided_slice %498 {offsets = [0, 160], sizes = [8, 32], strides = [1, 1]} : vector<8x224xf32> to vector<8x32xf32>
    %508 = vector.extract_strided_slice %498 {offsets = [0, 192], sizes = [8, 32], strides = [1, 1]} : vector<8x224xf32> to vector<8x32xf32>
    %509 = arith.mulf %505, %508 : vector<8x32xf32>
    %510 = arith.addf %507, %509 : vector<8x32xf32>
    %511 = math.tanh %510 : vector<8x32xf32>
    %cst_103 = arith.constant 1.000000e+00 : f32
    %512 = vector.broadcast %cst_103 : f32 to vector<8x32xf32>
    %513 = arith.subf %512, %506 : vector<8x32xf32>
    %514 = arith.mulf %513, %511 : vector<8x32xf32>
    %515 = arith.mulf %506, %470 : vector<8x32xf32>
    %516 = arith.addf %514, %515 : vector<8x32xf32>
    %c10 = arith.constant 10 : index
    %c0_104 = arith.constant 0 : index
    %c0_105 = arith.constant 0 : index
    %517 = vector.load %arg6[%c10, %c0_104, %c0_105] : memref<16x8x32xf32, #tpu.memory_space<vmem>>, vector<1x8x32xf32>
    %518 = vector.shape_cast %517 : vector<1x8x32xf32> to vector<8x32xf32>
    %519 = arith.mulf %516, %518 : vector<8x32xf32>
    %520 = arith.addf %474, %519 : vector<8x32xf32>
    %c88 = arith.constant 88 : index
    %c0_106 = arith.constant 0 : index
    %521 = vector.load %arg9[%c88, %c0_106] : memref<128x96xf32, #tpu.memory_space<vmem>>, vector<8x96xf32>
    %522 = vector.extract_strided_slice %521 {offsets = [0, 0], sizes = [8, 64], strides = [1, 1]} : vector<8x96xf32> to vector<8x64xf32>
    %523 = vector.extract_strided_slice %498 {offsets = [0, 0], sizes = [8, 64], strides = [1, 1]} : vector<8x224xf32> to vector<8x64xf32>
    %524 = arith.addf %522, %523 : vector<8x64xf32>
    %525 = arith.negf %524 : vector<8x64xf32>
    %526 = math.exp %525 : vector<8x64xf32>
    %cst_107 = arith.constant 1.000000e+00 : f32
    %527 = vector.broadcast %cst_107 : f32 to vector<8x64xf32>
    %528 = arith.addf %527, %526 : vector<8x64xf32>
    %529 = arith.divf %527, %528 : vector<8x64xf32>
    %530 = vector.extract_strided_slice %529 {offsets = [0, 0], sizes = [8, 32], strides = [1, 1]} : vector<8x64xf32> to vector<8x32xf32>
    %531 = vector.extract_strided_slice %529 {offsets = [0, 32], sizes = [8, 32], strides = [1, 1]} : vector<8x64xf32> to vector<8x32xf32>
    %532 = vector.extract_strided_slice %521 {offsets = [0, 64], sizes = [8, 32], strides = [1, 1]} : vector<8x96xf32> to vector<8x32xf32>
    %533 = vector.extract_strided_slice %498 {offsets = [0, 64], sizes = [8, 32], strides = [1, 1]} : vector<8x224xf32> to vector<8x32xf32>
    %534 = arith.mulf %530, %533 : vector<8x32xf32>
    %535 = arith.addf %532, %534 : vector<8x32xf32>
    %536 = math.tanh %535 : vector<8x32xf32>
    %cst_108 = arith.constant 1.000000e+00 : f32
    %537 = vector.broadcast %cst_108 : f32 to vector<8x32xf32>
    %538 = arith.subf %537, %531 : vector<8x32xf32>
    %539 = arith.mulf %538, %536 : vector<8x32xf32>
    %540 = arith.mulf %531, %495 : vector<8x32xf32>
    %541 = arith.addf %539, %540 : vector<8x32xf32>
    %542 = tpu.concatenate %541, %516 in 1 : vector<8x32xf32>, vector<8x32xf32> -> vector<8x64xf32>
    %cst_109 = arith.constant dense<0.000000e+00> : vector<8x224xf32>
    %543 = tpu.matmul %542, %8, %cst_109 {dimension_numbers = #tpu.dot_dimension_numbers<[1], [0], [0], [1], [0, 0, 1, 1], [], []>} : vector<8x64xf32>, vector<64x224xf32>, vector<8x224xf32> -> vector<8x224xf32>
    %544 = arith.addf %543, %11 : vector<8x224xf32>
    %545 = vector.extract_strided_slice %544 {offsets = [0, 96], sizes = [8, 64], strides = [1, 1]} : vector<8x224xf32> to vector<8x64xf32>
    %546 = arith.negf %545 : vector<8x64xf32>
    %547 = math.exp %546 : vector<8x64xf32>
    %cst_110 = arith.constant 1.000000e+00 : f32
    %548 = vector.broadcast %cst_110 : f32 to vector<8x64xf32>
    %549 = arith.addf %548, %547 : vector<8x64xf32>
    %550 = arith.divf %548, %549 : vector<8x64xf32>
    %551 = vector.extract_strided_slice %550 {offsets = [0, 0], sizes = [8, 32], strides = [1, 1]} : vector<8x64xf32> to vector<8x32xf32>
    %552 = vector.extract_strided_slice %550 {offsets = [0, 32], sizes = [8, 32], strides = [1, 1]} : vector<8x64xf32> to vector<8x32xf32>
    %553 = vector.extract_strided_slice %544 {offsets = [0, 160], sizes = [8, 32], strides = [1, 1]} : vector<8x224xf32> to vector<8x32xf32>
    %554 = vector.extract_strided_slice %544 {offsets = [0, 192], sizes = [8, 32], strides = [1, 1]} : vector<8x224xf32> to vector<8x32xf32>
    %555 = arith.mulf %551, %554 : vector<8x32xf32>
    %556 = arith.addf %553, %555 : vector<8x32xf32>
    %557 = math.tanh %556 : vector<8x32xf32>
    %cst_111 = arith.constant 1.000000e+00 : f32
    %558 = vector.broadcast %cst_111 : f32 to vector<8x32xf32>
    %559 = arith.subf %558, %552 : vector<8x32xf32>
    %560 = arith.mulf %559, %557 : vector<8x32xf32>
    %561 = arith.mulf %552, %516 : vector<8x32xf32>
    %562 = arith.addf %560, %561 : vector<8x32xf32>
    %c11 = arith.constant 11 : index
    %c0_112 = arith.constant 0 : index
    %c0_113 = arith.constant 0 : index
    %563 = vector.load %arg6[%c11, %c0_112, %c0_113] : memref<16x8x32xf32, #tpu.memory_space<vmem>>, vector<1x8x32xf32>
    %564 = vector.shape_cast %563 : vector<1x8x32xf32> to vector<8x32xf32>
    %565 = arith.mulf %562, %564 : vector<8x32xf32>
    %566 = arith.addf %520, %565 : vector<8x32xf32>
    %c96 = arith.constant 96 : index
    %c0_114 = arith.constant 0 : index
    %567 = vector.load %arg9[%c96, %c0_114] : memref<128x96xf32, #tpu.memory_space<vmem>>, vector<8x96xf32>
    %568 = vector.extract_strided_slice %567 {offsets = [0, 0], sizes = [8, 64], strides = [1, 1]} : vector<8x96xf32> to vector<8x64xf32>
    %569 = vector.extract_strided_slice %544 {offsets = [0, 0], sizes = [8, 64], strides = [1, 1]} : vector<8x224xf32> to vector<8x64xf32>
    %570 = arith.addf %568, %569 : vector<8x64xf32>
    %571 = arith.negf %570 : vector<8x64xf32>
    %572 = math.exp %571 : vector<8x64xf32>
    %cst_115 = arith.constant 1.000000e+00 : f32
    %573 = vector.broadcast %cst_115 : f32 to vector<8x64xf32>
    %574 = arith.addf %573, %572 : vector<8x64xf32>
    %575 = arith.divf %573, %574 : vector<8x64xf32>
    %576 = vector.extract_strided_slice %575 {offsets = [0, 0], sizes = [8, 32], strides = [1, 1]} : vector<8x64xf32> to vector<8x32xf32>
    %577 = vector.extract_strided_slice %575 {offsets = [0, 32], sizes = [8, 32], strides = [1, 1]} : vector<8x64xf32> to vector<8x32xf32>
    %578 = vector.extract_strided_slice %567 {offsets = [0, 64], sizes = [8, 32], strides = [1, 1]} : vector<8x96xf32> to vector<8x32xf32>
    %579 = vector.extract_strided_slice %544 {offsets = [0, 64], sizes = [8, 32], strides = [1, 1]} : vector<8x224xf32> to vector<8x32xf32>
    %580 = arith.mulf %576, %579 : vector<8x32xf32>
    %581 = arith.addf %578, %580 : vector<8x32xf32>
    %582 = math.tanh %581 : vector<8x32xf32>
    %cst_116 = arith.constant 1.000000e+00 : f32
    %583 = vector.broadcast %cst_116 : f32 to vector<8x32xf32>
    %584 = arith.subf %583, %577 : vector<8x32xf32>
    %585 = arith.mulf %584, %582 : vector<8x32xf32>
    %586 = arith.mulf %577, %541 : vector<8x32xf32>
    %587 = arith.addf %585, %586 : vector<8x32xf32>
    %588 = tpu.concatenate %587, %562 in 1 : vector<8x32xf32>, vector<8x32xf32> -> vector<8x64xf32>
    %cst_117 = arith.constant dense<0.000000e+00> : vector<8x224xf32>
    %589 = tpu.matmul %588, %8, %cst_117 {dimension_numbers = #tpu.dot_dimension_numbers<[1], [0], [0], [1], [0, 0, 1, 1], [], []>} : vector<8x64xf32>, vector<64x224xf32>, vector<8x224xf32> -> vector<8x224xf32>
    %590 = arith.addf %589, %11 : vector<8x224xf32>
    %591 = vector.extract_strided_slice %590 {offsets = [0, 96], sizes = [8, 64], strides = [1, 1]} : vector<8x224xf32> to vector<8x64xf32>
    %592 = arith.negf %591 : vector<8x64xf32>
    %593 = math.exp %592 : vector<8x64xf32>
    %cst_118 = arith.constant 1.000000e+00 : f32
    %594 = vector.broadcast %cst_118 : f32 to vector<8x64xf32>
    %595 = arith.addf %594, %593 : vector<8x64xf32>
    %596 = arith.divf %594, %595 : vector<8x64xf32>
    %597 = vector.extract_strided_slice %596 {offsets = [0, 0], sizes = [8, 32], strides = [1, 1]} : vector<8x64xf32> to vector<8x32xf32>
    %598 = vector.extract_strided_slice %596 {offsets = [0, 32], sizes = [8, 32], strides = [1, 1]} : vector<8x64xf32> to vector<8x32xf32>
    %599 = vector.extract_strided_slice %590 {offsets = [0, 160], sizes = [8, 32], strides = [1, 1]} : vector<8x224xf32> to vector<8x32xf32>
    %600 = vector.extract_strided_slice %590 {offsets = [0, 192], sizes = [8, 32], strides = [1, 1]} : vector<8x224xf32> to vector<8x32xf32>
    %601 = arith.mulf %597, %600 : vector<8x32xf32>
    %602 = arith.addf %599, %601 : vector<8x32xf32>
    %603 = math.tanh %602 : vector<8x32xf32>
    %cst_119 = arith.constant 1.000000e+00 : f32
    %604 = vector.broadcast %cst_119 : f32 to vector<8x32xf32>
    %605 = arith.subf %604, %598 : vector<8x32xf32>
    %606 = arith.mulf %605, %603 : vector<8x32xf32>
    %607 = arith.mulf %598, %562 : vector<8x32xf32>
    %608 = arith.addf %606, %607 : vector<8x32xf32>
    %c12 = arith.constant 12 : index
    %c0_120 = arith.constant 0 : index
    %c0_121 = arith.constant 0 : index
    %609 = vector.load %arg6[%c12, %c0_120, %c0_121] : memref<16x8x32xf32, #tpu.memory_space<vmem>>, vector<1x8x32xf32>
    %610 = vector.shape_cast %609 : vector<1x8x32xf32> to vector<8x32xf32>
    %611 = arith.mulf %608, %610 : vector<8x32xf32>
    %612 = arith.addf %566, %611 : vector<8x32xf32>
    %c104 = arith.constant 104 : index
    %c0_122 = arith.constant 0 : index
    %613 = vector.load %arg9[%c104, %c0_122] : memref<128x96xf32, #tpu.memory_space<vmem>>, vector<8x96xf32>
    %614 = vector.extract_strided_slice %613 {offsets = [0, 0], sizes = [8, 64], strides = [1, 1]} : vector<8x96xf32> to vector<8x64xf32>
    %615 = vector.extract_strided_slice %590 {offsets = [0, 0], sizes = [8, 64], strides = [1, 1]} : vector<8x224xf32> to vector<8x64xf32>
    %616 = arith.addf %614, %615 : vector<8x64xf32>
    %617 = arith.negf %616 : vector<8x64xf32>
    %618 = math.exp %617 : vector<8x64xf32>
    %cst_123 = arith.constant 1.000000e+00 : f32
    %619 = vector.broadcast %cst_123 : f32 to vector<8x64xf32>
    %620 = arith.addf %619, %618 : vector<8x64xf32>
    %621 = arith.divf %619, %620 : vector<8x64xf32>
    %622 = vector.extract_strided_slice %621 {offsets = [0, 0], sizes = [8, 32], strides = [1, 1]} : vector<8x64xf32> to vector<8x32xf32>
    %623 = vector.extract_strided_slice %621 {offsets = [0, 32], sizes = [8, 32], strides = [1, 1]} : vector<8x64xf32> to vector<8x32xf32>
    %624 = vector.extract_strided_slice %613 {offsets = [0, 64], sizes = [8, 32], strides = [1, 1]} : vector<8x96xf32> to vector<8x32xf32>
    %625 = vector.extract_strided_slice %590 {offsets = [0, 64], sizes = [8, 32], strides = [1, 1]} : vector<8x224xf32> to vector<8x32xf32>
    %626 = arith.mulf %622, %625 : vector<8x32xf32>
    %627 = arith.addf %624, %626 : vector<8x32xf32>
    %628 = math.tanh %627 : vector<8x32xf32>
    %cst_124 = arith.constant 1.000000e+00 : f32
    %629 = vector.broadcast %cst_124 : f32 to vector<8x32xf32>
    %630 = arith.subf %629, %623 : vector<8x32xf32>
    %631 = arith.mulf %630, %628 : vector<8x32xf32>
    %632 = arith.mulf %623, %587 : vector<8x32xf32>
    %633 = arith.addf %631, %632 : vector<8x32xf32>
    %634 = tpu.concatenate %633, %608 in 1 : vector<8x32xf32>, vector<8x32xf32> -> vector<8x64xf32>
    %cst_125 = arith.constant dense<0.000000e+00> : vector<8x224xf32>
    %635 = tpu.matmul %634, %8, %cst_125 {dimension_numbers = #tpu.dot_dimension_numbers<[1], [0], [0], [1], [0, 0, 1, 1], [], []>} : vector<8x64xf32>, vector<64x224xf32>, vector<8x224xf32> -> vector<8x224xf32>
    %636 = arith.addf %635, %11 : vector<8x224xf32>
    %637 = vector.extract_strided_slice %636 {offsets = [0, 96], sizes = [8, 64], strides = [1, 1]} : vector<8x224xf32> to vector<8x64xf32>
    %638 = arith.negf %637 : vector<8x64xf32>
    %639 = math.exp %638 : vector<8x64xf32>
    %cst_126 = arith.constant 1.000000e+00 : f32
    %640 = vector.broadcast %cst_126 : f32 to vector<8x64xf32>
    %641 = arith.addf %640, %639 : vector<8x64xf32>
    %642 = arith.divf %640, %641 : vector<8x64xf32>
    %643 = vector.extract_strided_slice %642 {offsets = [0, 0], sizes = [8, 32], strides = [1, 1]} : vector<8x64xf32> to vector<8x32xf32>
    %644 = vector.extract_strided_slice %642 {offsets = [0, 32], sizes = [8, 32], strides = [1, 1]} : vector<8x64xf32> to vector<8x32xf32>
    %645 = vector.extract_strided_slice %636 {offsets = [0, 160], sizes = [8, 32], strides = [1, 1]} : vector<8x224xf32> to vector<8x32xf32>
    %646 = vector.extract_strided_slice %636 {offsets = [0, 192], sizes = [8, 32], strides = [1, 1]} : vector<8x224xf32> to vector<8x32xf32>
    %647 = arith.mulf %643, %646 : vector<8x32xf32>
    %648 = arith.addf %645, %647 : vector<8x32xf32>
    %649 = math.tanh %648 : vector<8x32xf32>
    %cst_127 = arith.constant 1.000000e+00 : f32
    %650 = vector.broadcast %cst_127 : f32 to vector<8x32xf32>
    %651 = arith.subf %650, %644 : vector<8x32xf32>
    %652 = arith.mulf %651, %649 : vector<8x32xf32>
    %653 = arith.mulf %644, %608 : vector<8x32xf32>
    %654 = arith.addf %652, %653 : vector<8x32xf32>
    %c13 = arith.constant 13 : index
    %c0_128 = arith.constant 0 : index
    %c0_129 = arith.constant 0 : index
    %655 = vector.load %arg6[%c13, %c0_128, %c0_129] : memref<16x8x32xf32, #tpu.memory_space<vmem>>, vector<1x8x32xf32>
    %656 = vector.shape_cast %655 : vector<1x8x32xf32> to vector<8x32xf32>
    %657 = arith.mulf %654, %656 : vector<8x32xf32>
    %658 = arith.addf %612, %657 : vector<8x32xf32>
    %c112 = arith.constant 112 : index
    %c0_130 = arith.constant 0 : index
    %659 = vector.load %arg9[%c112, %c0_130] : memref<128x96xf32, #tpu.memory_space<vmem>>, vector<8x96xf32>
    %660 = vector.extract_strided_slice %659 {offsets = [0, 0], sizes = [8, 64], strides = [1, 1]} : vector<8x96xf32> to vector<8x64xf32>
    %661 = vector.extract_strided_slice %636 {offsets = [0, 0], sizes = [8, 64], strides = [1, 1]} : vector<8x224xf32> to vector<8x64xf32>
    %662 = arith.addf %660, %661 : vector<8x64xf32>
    %663 = arith.negf %662 : vector<8x64xf32>
    %664 = math.exp %663 : vector<8x64xf32>
    %cst_131 = arith.constant 1.000000e+00 : f32
    %665 = vector.broadcast %cst_131 : f32 to vector<8x64xf32>
    %666 = arith.addf %665, %664 : vector<8x64xf32>
    %667 = arith.divf %665, %666 : vector<8x64xf32>
    %668 = vector.extract_strided_slice %667 {offsets = [0, 0], sizes = [8, 32], strides = [1, 1]} : vector<8x64xf32> to vector<8x32xf32>
    %669 = vector.extract_strided_slice %667 {offsets = [0, 32], sizes = [8, 32], strides = [1, 1]} : vector<8x64xf32> to vector<8x32xf32>
    %670 = vector.extract_strided_slice %659 {offsets = [0, 64], sizes = [8, 32], strides = [1, 1]} : vector<8x96xf32> to vector<8x32xf32>
    %671 = vector.extract_strided_slice %636 {offsets = [0, 64], sizes = [8, 32], strides = [1, 1]} : vector<8x224xf32> to vector<8x32xf32>
    %672 = arith.mulf %668, %671 : vector<8x32xf32>
    %673 = arith.addf %670, %672 : vector<8x32xf32>
    %674 = math.tanh %673 : vector<8x32xf32>
    %cst_132 = arith.constant 1.000000e+00 : f32
    %675 = vector.broadcast %cst_132 : f32 to vector<8x32xf32>
    %676 = arith.subf %675, %669 : vector<8x32xf32>
    %677 = arith.mulf %676, %674 : vector<8x32xf32>
    %678 = arith.mulf %669, %633 : vector<8x32xf32>
    %679 = arith.addf %677, %678 : vector<8x32xf32>
    %680 = tpu.concatenate %679, %654 in 1 : vector<8x32xf32>, vector<8x32xf32> -> vector<8x64xf32>
    %cst_133 = arith.constant dense<0.000000e+00> : vector<8x224xf32>
    %681 = tpu.matmul %680, %8, %cst_133 {dimension_numbers = #tpu.dot_dimension_numbers<[1], [0], [0], [1], [0, 0, 1, 1], [], []>} : vector<8x64xf32>, vector<64x224xf32>, vector<8x224xf32> -> vector<8x224xf32>
    %682 = arith.addf %681, %11 : vector<8x224xf32>
    %683 = vector.extract_strided_slice %682 {offsets = [0, 96], sizes = [8, 64], strides = [1, 1]} : vector<8x224xf32> to vector<8x64xf32>
    %684 = arith.negf %683 : vector<8x64xf32>
    %685 = math.exp %684 : vector<8x64xf32>
    %cst_134 = arith.constant 1.000000e+00 : f32
    %686 = vector.broadcast %cst_134 : f32 to vector<8x64xf32>
    %687 = arith.addf %686, %685 : vector<8x64xf32>
    %688 = arith.divf %686, %687 : vector<8x64xf32>
    %689 = vector.extract_strided_slice %688 {offsets = [0, 0], sizes = [8, 32], strides = [1, 1]} : vector<8x64xf32> to vector<8x32xf32>
    %690 = vector.extract_strided_slice %688 {offsets = [0, 32], sizes = [8, 32], strides = [1, 1]} : vector<8x64xf32> to vector<8x32xf32>
    %691 = vector.extract_strided_slice %682 {offsets = [0, 160], sizes = [8, 32], strides = [1, 1]} : vector<8x224xf32> to vector<8x32xf32>
    %692 = vector.extract_strided_slice %682 {offsets = [0, 192], sizes = [8, 32], strides = [1, 1]} : vector<8x224xf32> to vector<8x32xf32>
    %693 = arith.mulf %689, %692 : vector<8x32xf32>
    %694 = arith.addf %691, %693 : vector<8x32xf32>
    %695 = math.tanh %694 : vector<8x32xf32>
    %cst_135 = arith.constant 1.000000e+00 : f32
    %696 = vector.broadcast %cst_135 : f32 to vector<8x32xf32>
    %697 = arith.subf %696, %690 : vector<8x32xf32>
    %698 = arith.mulf %697, %695 : vector<8x32xf32>
    %699 = arith.mulf %690, %654 : vector<8x32xf32>
    %700 = arith.addf %698, %699 : vector<8x32xf32>
    %c14 = arith.constant 14 : index
    %c0_136 = arith.constant 0 : index
    %c0_137 = arith.constant 0 : index
    %701 = vector.load %arg6[%c14, %c0_136, %c0_137] : memref<16x8x32xf32, #tpu.memory_space<vmem>>, vector<1x8x32xf32>
    %702 = vector.shape_cast %701 : vector<1x8x32xf32> to vector<8x32xf32>
    %703 = arith.mulf %700, %702 : vector<8x32xf32>
    %704 = arith.addf %658, %703 : vector<8x32xf32>
    %c120 = arith.constant 120 : index
    %c0_138 = arith.constant 0 : index
    %705 = vector.load %arg9[%c120, %c0_138] : memref<128x96xf32, #tpu.memory_space<vmem>>, vector<8x96xf32>
    %706 = vector.extract_strided_slice %705 {offsets = [0, 0], sizes = [8, 64], strides = [1, 1]} : vector<8x96xf32> to vector<8x64xf32>
    %707 = vector.extract_strided_slice %682 {offsets = [0, 0], sizes = [8, 64], strides = [1, 1]} : vector<8x224xf32> to vector<8x64xf32>
    %708 = arith.addf %706, %707 : vector<8x64xf32>
    %709 = arith.negf %708 : vector<8x64xf32>
    %710 = math.exp %709 : vector<8x64xf32>
    %cst_139 = arith.constant 1.000000e+00 : f32
    %711 = vector.broadcast %cst_139 : f32 to vector<8x64xf32>
    %712 = arith.addf %711, %710 : vector<8x64xf32>
    %713 = arith.divf %711, %712 : vector<8x64xf32>
    %714 = vector.extract_strided_slice %713 {offsets = [0, 0], sizes = [8, 32], strides = [1, 1]} : vector<8x64xf32> to vector<8x32xf32>
    %715 = vector.extract_strided_slice %713 {offsets = [0, 32], sizes = [8, 32], strides = [1, 1]} : vector<8x64xf32> to vector<8x32xf32>
    %716 = vector.extract_strided_slice %705 {offsets = [0, 64], sizes = [8, 32], strides = [1, 1]} : vector<8x96xf32> to vector<8x32xf32>
    %717 = vector.extract_strided_slice %682 {offsets = [0, 64], sizes = [8, 32], strides = [1, 1]} : vector<8x224xf32> to vector<8x32xf32>
    %718 = arith.mulf %714, %717 : vector<8x32xf32>
    %719 = arith.addf %716, %718 : vector<8x32xf32>
    %720 = math.tanh %719 : vector<8x32xf32>
    %cst_140 = arith.constant 1.000000e+00 : f32
    %721 = vector.broadcast %cst_140 : f32 to vector<8x32xf32>
    %722 = arith.subf %721, %715 : vector<8x32xf32>
    %723 = arith.mulf %722, %720 : vector<8x32xf32>
    %724 = arith.mulf %715, %679 : vector<8x32xf32>
    %725 = arith.addf %723, %724 : vector<8x32xf32>
    %726 = tpu.concatenate %725, %700 in 1 : vector<8x32xf32>, vector<8x32xf32> -> vector<8x64xf32>
    %cst_141 = arith.constant dense<0.000000e+00> : vector<8x224xf32>
    %727 = tpu.matmul %726, %8, %cst_141 {dimension_numbers = #tpu.dot_dimension_numbers<[1], [0], [0], [1], [0, 0, 1, 1], [], []>} : vector<8x64xf32>, vector<64x224xf32>, vector<8x224xf32> -> vector<8x224xf32>
    %728 = arith.addf %727, %11 : vector<8x224xf32>
    %729 = vector.extract_strided_slice %728 {offsets = [0, 96], sizes = [8, 64], strides = [1, 1]} : vector<8x224xf32> to vector<8x64xf32>
    %730 = arith.negf %729 : vector<8x64xf32>
    %731 = math.exp %730 : vector<8x64xf32>
    %cst_142 = arith.constant 1.000000e+00 : f32
    %732 = vector.broadcast %cst_142 : f32 to vector<8x64xf32>
    %733 = arith.addf %732, %731 : vector<8x64xf32>
    %734 = arith.divf %732, %733 : vector<8x64xf32>
    %735 = vector.extract_strided_slice %734 {offsets = [0, 0], sizes = [8, 32], strides = [1, 1]} : vector<8x64xf32> to vector<8x32xf32>
    %736 = vector.extract_strided_slice %734 {offsets = [0, 32], sizes = [8, 32], strides = [1, 1]} : vector<8x64xf32> to vector<8x32xf32>
    %737 = vector.extract_strided_slice %728 {offsets = [0, 160], sizes = [8, 32], strides = [1, 1]} : vector<8x224xf32> to vector<8x32xf32>
    %738 = vector.extract_strided_slice %728 {offsets = [0, 192], sizes = [8, 32], strides = [1, 1]} : vector<8x224xf32> to vector<8x32xf32>
    %739 = arith.mulf %735, %738 : vector<8x32xf32>
    %740 = arith.addf %737, %739 : vector<8x32xf32>
    %741 = math.tanh %740 : vector<8x32xf32>
    %cst_143 = arith.constant 1.000000e+00 : f32
    %742 = vector.broadcast %cst_143 : f32 to vector<8x32xf32>
    %743 = arith.subf %742, %736 : vector<8x32xf32>
    %744 = arith.mulf %743, %741 : vector<8x32xf32>
    %745 = arith.mulf %736, %700 : vector<8x32xf32>
    %746 = arith.addf %744, %745 : vector<8x32xf32>
    %c15 = arith.constant 15 : index
    %c0_144 = arith.constant 0 : index
    %c0_145 = arith.constant 0 : index
    %747 = vector.load %arg6[%c15, %c0_144, %c0_145] : memref<16x8x32xf32, #tpu.memory_space<vmem>>, vector<1x8x32xf32>
    %748 = vector.shape_cast %747 : vector<1x8x32xf32> to vector<8x32xf32>
    %749 = arith.mulf %746, %748 : vector<8x32xf32>
    %750 = arith.addf %704, %749 : vector<8x32xf32>
    %cst_146 = arith.constant dense<0.000000e+00> : vector<8xf32>
    %751 = vector.multi_reduction <add>, %750, %cst_146 [1] : vector<8x32xf32> to vector<8xf32>
    %752 = vector.shape_cast %751 : vector<8xf32> to vector<8x1xf32>
    %c0_147 = arith.constant 0 : index
    %c0_148 = arith.constant 0 : index
    %753 = vector.load %arg7[%c0_147, %c0_148] : memref<1x1xf32, #tpu.memory_space<vmem>>, vector<1x1xf32>
    %754 = vector.broadcast %753 : vector<1x1xf32> to vector<8x1xf32>
    %755 = arith.addf %752, %754 : vector<8x1xf32>
    %c0_149 = arith.constant 0 : index
    %c0_150 = arith.constant 0 : index
    %756 = vector.load %arg8[%c0_149, %c0_150] : memref<8x1xf32, #tpu.memory_space<vmem>>, vector<8x1xf32>
    tpu.vector_store %arg8[%c0_149, %c0_150], %755 {strides = array<i32>} : memref<8x1xf32, #tpu.memory_space<vmem>>, vector<8x1xf32>,
    return
  }
  func.func @transform_0(%arg0: i32) -> (i32, i32, i32) {
    %c0_i32 = arith.constant 0 : i32
    %c0_i32_0 = arith.constant 0 : i32
    %c0_i32_1 = arith.constant 0 : i32
    return %c0_i32, %arg0, %c0_i32_0 : i32, i32, i32
  }
  func.func @transform_1(%arg0: i32) -> (i32, i32) {
    %c0_i32 = arith.constant 0 : i32
    %c0_i32_0 = arith.constant 0 : i32
    %c0_i32_1 = arith.constant 0 : i32
    return %c0_i32, %c0_i32_0 : i32, i32
  }
  func.func @transform_2(%arg0: i32) -> (i32, i32) {
    %c0_i32 = arith.constant 0 : i32
    %c0_i32_0 = arith.constant 0 : i32
    %c0_i32_1 = arith.constant 0 : i32
    return %c0_i32, %c0_i32_0 : i32, i32
  }
  func.func @transform_3(%arg0: i32) -> (i32, i32) {
    %c0_i32 = arith.constant 0 : i32
    %c0_i32_0 = arith.constant 0 : i32
    %c0_i32_1 = arith.constant 0 : i32
    return %c0_i32, %c0_i32_0 : i32, i32
  }
  func.func @transform_4(%arg0: i32) -> (i32, i32) {
    %c0_i32 = arith.constant 0 : i32
    %c0_i32_0 = arith.constant 0 : i32
    %c0_i32_1 = arith.constant 0 : i32
    return %c0_i32, %c0_i32_0 : i32, i32
  }
  func.func @transform_5(%arg0: i32) -> (i32, i32, i32) {
    %c0_i32 = arith.constant 0 : i32
    %c0_i32_0 = arith.constant 0 : i32
    %c0_i32_1 = arith.constant 0 : i32
    %c0_i32_2 = arith.constant 0 : i32
    return %c0_i32, %c0_i32_0, %c0_i32_1 : i32, i32, i32
  }
  func.func @transform_6(%arg0: i32) -> (i32, i32) {
    %c0_i32 = arith.constant 0 : i32
    %c0_i32_0 = arith.constant 0 : i32
    %c0_i32_1 = arith.constant 0 : i32
    return %c0_i32, %c0_i32_0 : i32, i32
  }
  func.func @transform_7(%arg0: i32) -> (i32, i32) {
    %c0_i32 = arith.constant 0 : i32
    %c0_i32_0 = arith.constant 0 : i32
    return %arg0, %c0_i32 : i32, i32
  }
}

</mosaic_0001>

<llo_original>
// kernel: gru_model_forward.1
$region0: #{gru_model_forward.1}
  #allocation0 [shape = 'u32[]', space=smem, size = 0x4, offset = 0x4, fixed_abs, tag = 'smem constant byte address 0x4 - core index']
  #allocation1 [shape = 'u32[144,128]{1,0:T(1,128)}', space=vmem, size = 0x12000, scoped, tag = 'internal scratch']
  #allocation2 [shape = 'f32[128,96]{1,0:T(8,128)}', space=vmem, size = 0x10000, scoped, tag = 'scratch operand']
  #allocation3 [shape = 'f32[1,1]{1,0:T(1,128)S(1)}', space=vmem, size = 0x200, scoped, tag = 'scoped memory for gru_model_forward.1']
  %s0 = inlined_call_operand.vmem [shape: f32[16,8,32], index: 0, kind: input, shape index: {}]
  %s1 = inlined_call_operand.vmem [shape: f32[32,96], index: 1, kind: input, shape index: {}]
  %s2 = inlined_call_operand.vmem [shape: f32[1,96], index: 2, kind: input, shape index: {}]
  %s3 = inlined_call_operand.vmem [shape: f32[64,224], index: 3, kind: input, shape index: {}]
  %s4 = inlined_call_operand.vmem [shape: f32[1,224], index: 4, kind: input, shape index: {}]
  %s5 = inlined_call_operand.vmem [shape: f32[16,8,32], index: 5, kind: input, shape index: {}]
  %s6 = inlined_call_operand.<no memory space> [shape: f32[1,1], index: 6, kind: input, shape index: {}]
  %s7 = inlined_call_operand.vmem [shape: f32[8,1], index: 7, kind: output, shape index: {}]
  %s8 = sld [smem:[#allocation0]]
  $region38: #{gru_model_forward.1} parent=0
    _
  %s10 = ssub.s32 1, %s8
  %s11 = scalar_select 0, %s10, %s8
  %v12 = vstv %s6
  %13 = vst [vmem:[#allocation3] sm:$0x1] %v12
  // Predicated region
  $region2: #{gru_model_forward.1} parent=0 // pred_check
    _
  $region3: #{gru_model_forward.1} parent=0 // pred_check_branch
    %15 = sbr.rel (0) target = $region5
  $region4: #{gru_model_forward.1} parent=0 // pred_region
    _
  $region5: #{gru_model_forward.1} parent=0 // pred_fallthru
    _
  // Predicated region
  $region6: #{gru_model_forward.1} parent=0 // pred_check
    _
  $region7: #{gru_model_forward.1} parent=0 // pred_check_branch
    %17 = sbr.rel (0) target = $region9
  $region8: #{gru_model_forward.1} parent=0 // pred_region
    _
  $region9: #{gru_model_forward.1} parent=0 // pred_fallthru
    _
  // Predicated region
  $region10: #{gru_model_forward.1} parent=0 // pred_check
    _
  $region11: #{gru_model_forward.1} parent=0 // pred_check_branch
    %19 = sbr.rel (0) target = $region13
  $region12: #{gru_model_forward.1} parent=0 // pred_region
    _
  $region13: #{gru_model_forward.1} parent=0 // pred_fallthru
    _
  // Predicated region
  $region14: #{gru_model_forward.1} parent=0 // pred_check
    _
  $region15: #{gru_model_forward.1} parent=0 // pred_check_branch
    %21 = sbr.rel (0) target = $region17
  $region16: #{gru_model_forward.1} parent=0 // pred_region
    _
  $region17: #{gru_model_forward.1} parent=0 // pred_fallthru
    _
  // Predicated region
  $region18: #{gru_model_forward.1} parent=0 // pred_check
    _
  $region19: #{gru_model_forward.1} parent=0 // pred_check_branch
    %23 = sbr.rel (0) target = $region21
  $region20: #{gru_model_forward.1} parent=0 // pred_region
    _
  $region21: #{gru_model_forward.1} parent=0 // pred_fallthru
    _
  // Predicated region
  $region22: #{gru_model_forward.1} parent=0 // pred_check
    _
  $region23: #{gru_model_forward.1} parent=0 // pred_check_branch
    %25 = sbr.rel (0) target = $region25
  $region24: #{gru_model_forward.1} parent=0 // pred_region
    _
  $region25: #{gru_model_forward.1} parent=0 // pred_fallthru
    _
  // Predicated region
  $region26: #{gru_model_forward.1} parent=0 // pred_check
    _
  $region27: #{gru_model_forward.1} parent=0 // pred_check_branch
    %27 = sbr.rel (0) target = $region29
  $region28: #{gru_model_forward.1} parent=0 // pred_region
    _
  $region29: #{gru_model_forward.1} parent=0 // pred_fallthru
    _
  %v28 = vld [vmem:[%s0] sm:$0xff]
  %v29 = vld [vmem:[%s0 + $0x8] sm:$0xff]
  %v30 = vld [vmem:[%s0 + $0x10] sm:$0xff]
  %v31 = vld [vmem:[%s0 + $0x18] sm:$0xff]
  %v32 = vld [vmem:[%s0 + $0x20] sm:$0xff]
  %v33 = vld [vmem:[%s0 + $0x28] sm:$0xff]
  %v34 = vld [vmem:[%s0 + $0x30] sm:$0xff]
  %v35 = vld [vmem:[%s0 + $0x38] sm:$0xff]
  %v36 = vld [vmem:[%s0 + $0x40] sm:$0xff]
  %v37 = vld [vmem:[%s0 + $0x48] sm:$0xff]
  %v38 = vld [vmem:[%s0 + $0x50] sm:$0xff]
  %v39 = vld [vmem:[%s0 + $0x58] sm:$0xff]
  %v40 = vld [vmem:[%s0 + $0x60] sm:$0xff]
  %v41 = vld [vmem:[%s0 + $0x68] sm:$0xff]
  %v42 = vld [vmem:[%s0 + $0x70] sm:$0xff]
  %v43 = vld [vmem:[%s0 + $0x78] sm:$0xff]
  %v44 = vld [vmem:[%s1] sm:$0xff]
  %v45 = vld [vmem:[%s1 + $0x8] sm:$0xff]
  %v46 = vld [vmem:[%s1 + $0x10] sm:$0xff]
  %v47 = vld [vmem:[%s1 + $0x18] sm:$0xff]
  %v48 = vld [vmem:[%s2] sm:$0x1]
  %v50 = vlaneseq
  %v51 = vshrl.u32 %v50, 7
  %v52 = vsub.s32 0, %v51
  %v53 = vrot.slane %v48, %v52
  %vm55 = vcmask 261120
  %v57 = vsel %vm55, %v28, 0
  %v60 = vsel %vm55, %v29, 0
  %v63 = vsel %vm55, %v30, 0
  %v66 = vsel %vm55, %v31, 0
  %v69 = vsel %vm55, %v32, 0
  %v72 = vsel %vm55, %v33, 0
  %v75 = vsel %vm55, %v34, 0
  %v78 = vsel %vm55, %v35, 0
  %v81 = vsel %vm55, %v36, 0
  %v84 = vsel %vm55, %v37, 0
  %v87 = vsel %vm55, %v38, 0
  %v90 = vsel %vm55, %v39, 0
  %v93 = vsel %vm55, %v40, 0
  %v96 = vsel %vm55, %v41, 0
  %v99 = vsel %vm55, %v42, 0
  %v102 = vsel %vm55, %v43, 0
  %104 = vmatprep.subr.mxu0 0.0
  %105 = vmatpush1.msra.mxu0 %v44
  %106 = vmatprep.subr.mxu0 0.0
  %107 = vmatpush1.msra.mxu0 %v45
  %108 = vmatprep.subr.mxu0 0.0
  %109 = vmatpush1.msra.mxu0 %v46
  %110 = vmatprep.subr.mxu0 0.0
  %111 = vmatpush1.msra.mxu0 %v47
  %112 = vmatprep.subr.mxu0 0.0
  %113 = vmatpush1.msra.mxu0 0.0
  %114 = vmatprep.subr.mxu0 0.0
  %115 = vmatpush1.msra.mxu0 0.0
  %116 = vmatprep.subr.mxu0 0.0
  %117 = vmatpush1.msra.mxu0 0.0
  %118 = vmatprep.subr.mxu0 0.0
  %119 = vmatpush1.msra.mxu0 0.0
  %120 = vmatprep.subr.mxu0 0.0
  %121 = vmatpush1.msra.mxu0 0.0
  %122 = vmatprep.subr.mxu0 0.0
  %123 = vmatpush1.msra.mxu0 0.0
  %124 = vmatprep.subr.mxu0 0.0
  %125 = vmatpush1.msra.mxu0 0.0
  %126 = vmatprep.subr.mxu0 0.0
  %127 = vmatpush1.msra.mxu0 0.0
  %128 = vmatprep.subr.mxu0 0.0
  %129 = vmatpush1.msra.mxu0 0.0
  %130 = vmatprep.subr.mxu0 0.0
  %131 = vmatpush1.msra.mxu0 0.0
  %132 = vmatprep.subr.mxu0 0.0
  %133 = vmatpush1.msra.mxu0 0.0
  %134 = vmatprep.subr.mxu0 0.0
  %135 = vmatpush1.msra.mxu0 0.0
  %136 = vmatprep.subr.mxu0 0.0
  %137 = vmatpush1.msra.mxu0 0.0
  %138 = vmatprep.subr.mxu0 0.0
  %139 = vmatpush1.msra.mxu0 0.0
  %140 = vmatprep.subr.mxu0 0.0
  %141 = vmatpush1.msra.mxu0 0.0
  %142 = vmatprep.subr.mxu0 0.0
  %143 = vmatpush1.msra.mxu0 0.0
  %144 = vmatprep.subr.mxu0 0.0
  %145 = vmatpush1.msra.mxu0 0.0
  %146 = vmatprep.subr.mxu0 0.0
  %147 = vmatpush1.msra.mxu0 0.0
  %148 = vmatprep.subr.mxu0 0.0
  %149 = vmatpush1.msra.mxu0 0.0
  %150 = vmatprep.subr.mxu0 0.0
  %151 = vmatpush1.msra.mxu0 0.0
  %152 = vmatprep.subr.mxu0 0.0
  %153 = vmatpush1.msra.mxu0 0.0
  %154 = vmatprep.subr.mxu0 0.0
  %155 = vmatpush1.msra.mxu0 0.0
  %156 = vmatprep.subr.mxu0 0.0
  %157 = vmatpush1.msra.mxu0 0.0
  %158 = vmatprep.subr.mxu0 0.0
  %159 = vmatpush1.msra.mxu0 0.0
  %160 = vmatprep.subr.mxu0 0.0
  %161 = vmatpush1.msra.mxu0 0.0
  %162 = vmatprep.subr.mxu0 0.0
  %163 = vmatpush1.msra.mxu0 0.0
  %164 = vmatprep.subr.mxu0 0.0
  %165 = vmatpush1.msra.mxu0 0.0
  %166 = vmatprep.subr.mxu0 0.0
  %167 = vmatpush1.msra.mxu0 0.0
  %168 = vmatprep.mubr.f32.mxu0 0.0
  %169 = vmatmul.mubr.f32.gmra.mrb[0].mxu0 %v57
  %v170 = vpop.f32.mrb[0].mxu0
  %v171 = vadd.f32 %v53, %v170
  %v172 = vpop.f32.mrb[0].mxu0
  %173 = vmatprep.mubr.f32.mxu0 0.0
  %174 = vmatmul.mubr.f32.gmra.mrb[0].mxu0 %v60
  %v175 = vpop.f32.mrb[0].mxu0
  %v176 = vadd.f32 %v53, %v175
  %v177 = vpop.f32.mrb[0].mxu0
  %178 = vmatprep.mubr.f32.mxu0 0.0
  %179 = vmatmul.mubr.f32.gmra.mrb[0].mxu0 %v63
  %v180 = vpop.f32.mrb[0].mxu0
  %v181 = vadd.f32 %v53, %v180
  %v182 = vpop.f32.mrb[0].mxu0
  %183 = vmatprep.mubr.f32.mxu0 0.0
  %184 = vmatmul.mubr.f32.gmra.mrb[0].mxu0 %v66
  %v185 = vpop.f32.mrb[0].mxu0
  %v186 = vadd.f32 %v53, %v185
  %v187 = vpop.f32.mrb[0].mxu0
  %188 = vmatprep.mubr.f32.mxu0 0.0
  %189 = vmatmul.mubr.f32.gmra.mrb[0].mxu0 %v69
  %v190 = vpop.f32.mrb[0].mxu0
  %v191 = vadd.f32 %v53, %v190
  %v192 = vpop.f32.mrb[0].mxu0
  %193 = vmatprep.mubr.f32.mxu0 0.0
  %194 = vmatmul.mubr.f32.gmra.mrb[0].mxu0 %v72
  %v195 = vpop.f32.mrb[0].mxu0
  %v196 = vadd.f32 %v53, %v195
  %v197 = vpop.f32.mrb[0].mxu0
  %198 = vmatprep.mubr.f32.mxu0 0.0
  %199 = vmatmul.mubr.f32.gmra.mrb[0].mxu0 %v75
  %v200 = vpop.f32.mrb[0].mxu0
  %v201 = vadd.f32 %v53, %v200
  %v202 = vpop.f32.mrb[0].mxu0
  %203 = vmatprep.mubr.f32.mxu0 0.0
  %204 = vmatmul.mubr.f32.gmra.mrb[0].mxu0 %v78
  %v205 = vpop.f32.mrb[0].mxu0
  %v206 = vadd.f32 %v53, %v205
  %v207 = vpop.f32.mrb[0].mxu0
  %208 = vmatprep.mubr.f32.mxu0 0.0
  %209 = vmatmul.mubr.f32.gmra.mrb[0].mxu0 %v81
  %v210 = vpop.f32.mrb[0].mxu0
  %v211 = vadd.f32 %v53, %v210
  %v212 = vpop.f32.mrb[0].mxu0
  %213 = vmatprep.mubr.f32.mxu0 0.0
  %214 = vmatmul.mubr.f32.gmra.mrb[0].mxu0 %v84
  %v215 = vpop.f32.mrb[0].mxu0
  %v216 = vadd.f32 %v53, %v215
  %v217 = vpop.f32.mrb[0].mxu0
  %218 = vmatprep.mubr.f32.mxu0 0.0
  %219 = vmatmul.mubr.f32.gmra.mrb[0].mxu0 %v87
  %v220 = vpop.f32.mrb[0].mxu0
  %v221 = vadd.f32 %v53, %v220
  %v222 = vpop.f32.mrb[0].mxu0
  %223 = vmatprep.mubr.f32.mxu0 0.0
  %224 = vmatmul.mubr.f32.gmra.mrb[0].mxu0 %v90
  %v225 = vpop.f32.mrb[0].mxu0
  %v226 = vadd.f32 %v53, %v225
  %v227 = vpop.f32.mrb[0].mxu0
  %228 = vmatprep.mubr.f32.mxu0 0.0
  %229 = vmatmul.mubr.f32.gmra.mrb[0].mxu0 %v93
  %v230 = vpop.f32.mrb[0].mxu0
  %v231 = vadd.f32 %v53, %v230
  %v232 = vpop.f32.mrb[0].mxu0
  %233 = vmatprep.mubr.f32.mxu0 0.0
  %234 = vmatmul.mubr.f32.gmra.mrb[0].mxu0 %v96
  %v235 = vpop.f32.mrb[0].mxu0
  %v236 = vadd.f32 %v53, %v235
  %v237 = vpop.f32.mrb[0].mxu0
  %238 = vmatprep.mubr.f32.mxu0 0.0
  %239 = vmatmul.mubr.f32.gmra.mrb[0].mxu0 %v99
  %v240 = vpop.f32.mrb[0].mxu0
  %v241 = vadd.f32 %v53, %v240
  %v242 = vpop.f32.mrb[0].mxu0
  %243 = vmatprep.mubr.f32.mxu0 0.0
  %244 = vmatmul.mubr.f32.gmra.mrb[0].mxu0 %v102
  %v245 = vpop.f32.mrb[0].mxu0
  %v246 = vadd.f32 %v53, %v245
  %v247 = vpop.f32.mrb[0].mxu0
  %248 = vdwg.mxu0
  %vm249 = vcmask 785408
  %250 = vst.msk [vmem:[#allocation2] sm:$0xff] %vm249, %v171
  %251 = vst.msk [vmem:[#allocation2 + $0x8] sm:$0xff] %vm249, %v176
  %252 = vst.msk [vmem:[#allocation2 + $0x10] sm:$0xff] %vm249, %v181
  %253 = vst.msk [vmem:[#allocation2 + $0x18] sm:$0xff] %vm249, %v186
  %254 = vst.msk [vmem:[#allocation2 + $0x20] sm:$0xff] %vm249, %v191
  %255 = vst.msk [vmem:[#allocation2 + $0x28] sm:$0xff] %vm249, %v196
  %256 = vst.msk [vmem:[#allocation2 + $0x30] sm:$0xff] %vm249, %v201
  %257 = vst.msk [vmem:[#allocation2 + $0x38] sm:$0xff] %vm249, %v206
  %258 = vst.msk [vmem:[#allocation2 + $0x40] sm:$0xff] %vm249, %v211
  %259 = vst.msk [vmem:[#allocation2 + $0x48] sm:$0xff] %vm249, %v216
  %260 = vst.msk [vmem:[#allocation2 + $0x50] sm:$0xff] %vm249, %v221
  %261 = vst.msk [vmem:[#allocation2 + $0x58] sm:$0xff] %vm249, %v226
  %262 = vst.msk [vmem:[#allocation2 + $0x60] sm:$0xff] %vm249, %v231
  %263 = vst.msk [vmem:[#allocation2 + $0x68] sm:$0xff] %vm249, %v236
  %264 = vst.msk [vmem:[#allocation2 + $0x70] sm:$0xff] %vm249, %v241
  %265 = vst.msk [vmem:[#allocation2 + $0x78] sm:$0xff] %vm249, %v246
  %v266 = vld [vmem:[%s3] sm:$0xff]
  %v267 = vld [vmem:[%s3 + $0x8] sm:$0xff]
  %v268 = vld [vmem:[%s3 + $0x10] sm:$0xff]
  %v269 = vld [vmem:[%s3 + $0x18] sm:$0xff]
  %v270 = vld [vmem:[%s3 + $0x20] sm:$0xff]
  %v271 = vld [vmem:[%s3 + $0x28] sm:$0xff]
  %v272 = vld [vmem:[%s3 + $0x30] sm:$0xff]
  %v273 = vld [vmem:[%s3 + $0x38] sm:$0xff]
  %v274 = vld [vmem:[%s3 + $0x40] sm:$0xff]
  %v275 = vld [vmem:[%s3 + $0x48] sm:$0xff]
  %v276 = vld [vmem:[%s3 + $0x50] sm:$0xff]
  %v277 = vld [vmem:[%s3 + $0x58] sm:$0xff]
  %v278 = vld [vmem:[%s3 + $0x60] sm:$0xff]
  %v279 = vld [vmem:[%s3 + $0x68] sm:$0xff]
  %v280 = vld [vmem:[%s3 + $0x70] sm:$0xff]
  %v281 = vld [vmem:[%s3 + $0x78] sm:$0xff]
  %v282 = vld [vmem:[%s4] sm:$0x3]
  %v284 = vlaneseq
  %v285 = vshrl.u32 %v284, 7
  %v286 = vsub.s32 0, %v285
  %v287 = vrot.slane %v282, %v286
  %v288 = vlaneseq
  %v289 = vshrl.u32 %v288, 7
  %v290 = vsub.s32 1, %v289
  %v291 = vrot.slane %v282, %v290
  %v294 = vld [vmem:[#allocation2] sm:$0xff]
  %v295 = vadd.f32 %v294, %v287
  %v296 = vxor.u32 %v295, 2147483648
  %v297 = vmul.f32 %v296, 1.442695
  %v298 = vpow.pop %v297
  %v299 = vadd.f32 %v298, 1.0
  %v300 = vrcp.pop %v299
  %v301 = vmul.f32 1.0, %v300
  %302 = vrot.lane.b32.xlu0 %v287, 64
  %v303 = vpop.permute.xlu0 %302
  %v305 = vmul.f32 %v301, %v303
  %307 = vrot.lane.b32.xlu0 %v305, 64
  %v308 = vpop.permute.xlu0 %307
  %v310 = vadd.f32 %v294, %v308
  %v311 = vtanh.pop %v310
  %v312 = vsub.f32 1.0, %v301
  %314 = vrot.lane.b32.xlu0 %v311, 96
  %v315 = vpop.permute.xlu0 %314
  %v317 = vmul.f32 %v312, %v315
  %v318 = vmul.f32 %v301, 0.0
  %v319 = vadd.f32 %v317, %v318
  %321 = vrot.lane.b32.xlu0 %v319, 96
  %v322 = vpop.permute.xlu0 %321
  %v324 = vsel %vm55, %v322, 0.0
  %vm325 = vcmask 523264
  %v327 = vsel %vm325, %v324, 0
  %329 = vmatprep.subr.mxu0 %v267
  %330 = vmatpush1.msra.mxu0 %v266
  %331 = vmatprep.subr.mxu0 %v269
  %332 = vmatpush1.msra.mxu0 %v268
  %333 = vmatprep.subr.mxu0 %v271
  %334 = vmatpush1.msra.mxu0 %v270
  %335 = vmatprep.subr.mxu0 %v273
  %336 = vmatpush1.msra.mxu0 %v272
  %337 = vmatprep.subr.mxu0 %v275
  %338 = vmatpush1.msra.mxu0 %v274
  %339 = vmatprep.subr.mxu0 %v277
  %340 = vmatpush1.msra.mxu0 %v276
  %341 = vmatprep.subr.mxu0 %v279
  %342 = vmatpush1.msra.mxu0 %v278
  %343 = vmatprep.subr.mxu0 %v281
  %344 = vmatpush1.msra.mxu0 %v280
  %345 = vmatprep.subr.mxu0 0.0
  %346 = vmatpush1.msra.mxu0 0.0
  %347 = vmatprep.subr.mxu0 0.0
  %348 = vmatpush1.msra.mxu0 0.0
  %349 = vmatprep.subr.mxu0 0.0
  %350 = vmatpush1.msra.mxu0 0.0
  %351 = vmatprep.subr.mxu0 0.0
  %352 = vmatpush1.msra.mxu0 0.0
  %353 = vmatprep.subr.mxu0 0.0
  %354 = vmatpush1.msra.mxu0 0.0
  %355 = vmatprep.subr.mxu0 0.0
  %356 = vmatpush1.msra.mxu0 0.0
  %357 = vmatprep.subr.mxu0 0.0
  %358 = vmatpush1.msra.mxu0 0.0
  %359 = vmatprep.subr.mxu0 0.0
  %360 = vmatpush1.msra.mxu0 0.0
  %361 = vmatprep.subr.mxu0 0.0
  %362 = vmatpush1.msra.mxu0 0.0
  %363 = vmatprep.subr.mxu0 0.0
  %364 = vmatpush1.msra.mxu0 0.0
  %365 = vmatprep.subr.mxu0 0.0
  %366 = vmatpush1.msra.mxu0 0.0
  %367 = vmatprep.subr.mxu0 0.0
  %368 = vmatpush1.msra.mxu0 0.0
  %369 = vmatprep.subr.mxu0 0.0
  %370 = vmatpush1.msra.mxu0 0.0
  %371 = vmatprep.subr.mxu0 0.0
  %372 = vmatpush1.msra.mxu0 0.0
  %373 = vmatprep.subr.mxu0 0.0
  %374 = vmatpush1.msra.mxu0 0.0
  %375 = vmatprep.subr.mxu0 0.0
  %376 = vmatpush1.msra.mxu0 0.0
  %377 = vmatprep.subr.mxu0 0.0
  %378 = vmatpush1.msra.mxu0 0.0
  %379 = vmatprep.subr.mxu0 0.0
  %380 = vmatpush1.msra.mxu0 0.0
  %381 = vmatprep.subr.mxu0 0.0
  %382 = vmatpush1.msra.mxu0 0.0
  %383 = vmatprep.subr.mxu0 0.0
  %384 = vmatpush1.msra.mxu0 0.0
  %385 = vmatprep.subr.mxu0 0.0
  %386 = vmatpush1.msra.mxu0 0.0
  %387 = vmatprep.subr.mxu0 0.0
  %388 = vmatpush1.msra.mxu0 0.0
  %389 = vmatprep.subr.mxu0 0.0
  %390 = vmatpush1.msra.mxu0 0.0
  %391 = vmatprep.subr.mxu0 0.0
  %392 = vmatpush1.msra.mxu0 0.0
  %393 = vmatprep.mubr.f32.mxu0 0.0
  %394 = vmatmul.mubr.f32.gmra.mrb[0].mxu0 %v327
  %v395 = vpop.f32.mrb[0].mxu0
  %v396 = vadd.f32 %v287, %v395
  %v397 = vpop.f32.mrb[0].mxu0
  %v398 = vadd.f32 %v291, %v397
  %399 = vdwg.mxu0
  %v400 = vxor.u32 %v396, 2147483648
  %v401 = vxor.u32 %v398, 2147483648
  %v402 = vmul.f32 %v400, 1.442695
  %v403 = vpow.pop %v402
  %v404 = vmul.f32 %v401, 1.442695
  %v405 = vpow.pop %v404
  %v406 = vadd.f32 %v403, 1.0
  %v407 = vadd.f32 %v405, 1.0
  %v408 = vrcp.pop %v406
  %v409 = vmul.f32 1.0, %v408
  %v410 = vrcp.pop %v407
  %v411 = vmul.f32 1.0, %v410
  %413 = vrot.lane.b32.xlu0 %v398, 32
  %v414 = vpop.permute.xlu0 %413
  %v416 = vmul.f32 %v409, %v414
  %418 = vrot.lane.b32.xlu0 %v416, 64
  %v419 = vpop.permute.xlu0 %418
  %v421 = vadd.f32 %v398, %v419
  %v422 = vtanh.pop %v421
  %v423 = vsub.f32 1.0, %v411
  %425 = vrot.lane.b32.xlu0 %v422, 96
  %v426 = vpop.permute.xlu0 %425
  %v428 = vmul.f32 %v423, %v426
  %v429 = vmul.f32 %v411, 0.0
  %v430 = vadd.f32 %v428, %v429
  %v431 = vld [vmem:[%s5] sm:$0xff]
  %v432 = vmul.f32 %v430, %v431
  %v433 = vadd.f32 %v432, 0.0
  %v434 = vld [vmem:[#allocation2 + $0x8] sm:$0xff]
  %v435 = vadd.f32 %v434, %v396
  %v436 = vxor.u32 %v435, 2147483648
  %v437 = vmul.f32 %v436, 1.442695
  %v438 = vpow.pop %v437
  %v439 = vadd.f32 %v438, 1.0
  %v440 = vrcp.pop %v439
  %v441 = vmul.f32 1.0, %v440
  %443 = vrot.lane.b32.xlu0 %v396, 64
  %v444 = vpop.permute.xlu0 %443
  %v446 = vmul.f32 %v441, %v444
  %448 = vrot.lane.b32.xlu0 %v446, 64
  %v449 = vpop.permute.xlu0 %448
  %v451 = vadd.f32 %v434, %v449
  %v452 = vtanh.pop %v451
  %v453 = vsub.f32 1.0, %v441
  %455 = vrot.lane.b32.xlu0 %v452, 96
  %v456 = vpop.permute.xlu0 %455
  %v458 = vmul.f32 %v453, %v456
  %v459 = vmul.f32 %v441, %v319
  %v460 = vadd.f32 %v458, %v459
  %462 = vrot.lane.b32.xlu0 %v460, 96
  %v463 = vpop.permute.xlu0 %462
  %466 = vrot.lane.b32.xlu0 %v430, 32
  %v467 = vpop.permute.xlu0 %466
  %v469 = vsel %vm55, %v463, %v467
  %v471 = vsel %vm325, %v469, 0
  %473 = vmatprep.subr.mxu0 %v267
  %474 = vmatpush1.msra.mxu0 %v266
  %475 = vmatprep.subr.mxu0 %v269
  %476 = vmatpush1.msra.mxu0 %v268
  %477 = vmatprep.subr.mxu0 %v271
  %478 = vmatpush1.msra.mxu0 %v270
  %479 = vmatprep.subr.mxu0 %v273
  %480 = vmatpush1.msra.mxu0 %v272
  %481 = vmatprep.subr.mxu0 %v275
  %482 = vmatpush1.msra.mxu0 %v274
  %483 = vmatprep.subr.mxu0 %v277
  %484 = vmatpush1.msra.mxu0 %v276
  %485 = vmatprep.subr.mxu0 %v279
  %486 = vmatpush1.msra.mxu0 %v278
  %487 = vmatprep.subr.mxu0 %v281
  %488 = vmatpush1.msra.mxu0 %v280
  %489 = vmatprep.subr.mxu0 0.0
  %490 = vmatpush1.msra.mxu0 0.0
  %491 = vmatprep.subr.mxu0 0.0
  %492 = vmatpush1.msra.mxu0 0.0
  %493 = vmatprep.subr.mxu0 0.0
  %494 = vmatpush1.msra.mxu0 0.0
  %495 = vmatprep.subr.mxu0 0.0
  %496 = vmatpush1.msra.mxu0 0.0
  %497 = vmatprep.subr.mxu0 0.0
  %498 = vmatpush1.msra.mxu0 0.0
  %499 = vmatprep.subr.mxu0 0.0
  %500 = vmatpush1.msra.mxu0 0.0
  %501 = vmatprep.subr.mxu0 0.0
  %502 = vmatpush1.msra.mxu0 0.0
  %503 = vmatprep.subr.mxu0 0.0
  %504 = vmatpush1.msra.mxu0 0.0
  %505 = vmatprep.subr.mxu0 0.0
  %506 = vmatpush1.msra.mxu0 0.0
  %507 = vmatprep.subr.mxu0 0.0
  %508 = vmatpush1.msra.mxu0 0.0
  %509 = vmatprep.subr.mxu0 0.0
  %510 = vmatpush1.msra.mxu0 0.0
  %511 = vmatprep.subr.mxu0 0.0
  %512 = vmatpush1.msra.mxu0 0.0
  %513 = vmatprep.subr.mxu0 0.0
  %514 = vmatpush1.msra.mxu0 0.0
  %515 = vmatprep.subr.mxu0 0.0
  %516 = vmatpush1.msra.mxu0 0.0
  %517 = vmatprep.subr.mxu0 0.0
  %518 = vmatpush1.msra.mxu0 0.0
  %519 = vmatprep.subr.mxu0 0.0
  %520 = vmatpush1.msra.mxu0 0.0
  %521 = vmatprep.subr.mxu0 0.0
  %522 = vmatpush1.msra.mxu0 0.0
  %523 = vmatprep.subr.mxu0 0.0
  %524 = vmatpush1.msra.mxu0 0.0
  %525 = vmatprep.subr.mxu0 0.0
  %526 = vmatpush1.msra.mxu0 0.0
  %527 = vmatprep.subr.mxu0 0.0
  %528 = vmatpush1.msra.mxu0 0.0
  %529 = vmatprep.subr.mxu0 0.0
  %530 = vmatpush1.msra.mxu0 0.0
  %531 = vmatprep.subr.mxu0 0.0
  %532 = vmatpush1.msra.mxu0 0.0
  %533 = vmatprep.subr.mxu0 0.0
  %534 = vmatpush1.msra.mxu0 0.0
  %535 = vmatprep.subr.mxu0 0.0
  %536 = vmatpush1.msra.mxu0 0.0
  %537 = vmatprep.mubr.f32.mxu0 0.0
  %538 = vmatmul.mubr.f32.gmra.mrb[0].mxu0 %v471
  %v539 = vpop.f32.mrb[0].mxu0
  %v540 = vadd.f32 %v287, %v539
  %v541 = vpop.f32.mrb[0].mxu0
  %v542 = vadd.f32 %v291, %v541
  %543 = vdwg.mxu0
  %v544 = vxor.u32 %v540, 2147483648
  %v545 = vxor.u32 %v542, 2147483648
  %v546 = vmul.f32 %v544, 1.442695
  %v547 = vpow.pop %v546
  %v548 = vmul.f32 %v545, 1.442695
  %v549 = vpow.pop %v548
  %v550 = vadd.f32 %v547, 1.0
  %v551 = vadd.f32 %v549, 1.0
  %v552 = vrcp.pop %v550
  %v553 = vmul.f32 1.0, %v552
  %v554 = vrcp.pop %v551
  %v555 = vmul.f32 1.0, %v554
  %557 = vrot.lane.b32.xlu0 %v542, 32
  %v558 = vpop.permute.xlu0 %557
  %v560 = vmul.f32 %v553, %v558
  %562 = vrot.lane.b32.xlu0 %v560, 64
  %v563 = vpop.permute.xlu0 %562
  %v565 = vadd.f32 %v542, %v563
  %v566 = vtanh.pop %v565
  %v567 = vsub.f32 1.0, %v555
  %569 = vrot.lane.b32.xlu0 %v566, 96
  %v570 = vpop.permute.xlu0 %569
  %v572 = vmul.f32 %v567, %v570
  %v573 = vmul.f32 %v555, %v430
  %v574 = vadd.f32 %v572, %v573
  %s575 = scalar_lea.vmem %s5, 8
  %v576 = vld [vmem:[%s575] sm:$0xff]
  %v577 = vmul.f32 %v574, %v576
  %v578 = vadd.f32 %v433, %v577
  %v579 = vld [vmem:[#allocation2 + $0x10] sm:$0xff]
  %v580 = vadd.f32 %v579, %v540
  %v581 = vxor.u32 %v580, 2147483648
  %v582 = vmul.f32 %v581, 1.442695
  %v583 = vpow.pop %v582
  %v584 = vadd.f32 %v583, 1.0
  %v585 = vrcp.pop %v584
  %v586 = vmul.f32 1.0, %v585
  %588 = vrot.lane.b32.xlu0 %v540, 64
  %v589 = vpop.permute.xlu0 %588
  %v591 = vmul.f32 %v586, %v589
  %593 = vrot.lane.b32.xlu0 %v591, 64
  %v594 = vpop.permute.xlu0 %593
  %v596 = vadd.f32 %v579, %v594
  %v597 = vtanh.pop %v596
  %v598 = vsub.f32 1.0, %v586
  %600 = vrot.lane.b32.xlu0 %v597, 96
  %v601 = vpop.permute.xlu0 %600
  %v603 = vmul.f32 %v598, %v601
  %v604 = vmul.f32 %v586, %v460
  %v605 = vadd.f32 %v603, %v604
  %607 = vrot.lane.b32.xlu0 %v605, 96
  %v608 = vpop.permute.xlu0 %607
  %611 = vrot.lane.b32.xlu0 %v574, 32
  %v612 = vpop.permute.xlu0 %611
  %v614 = vsel %vm55, %v608, %v612
  %v616 = vsel %vm325, %v614, 0
  %618 = vmatprep.subr.mxu0 %v267
  %619 = vmatpush1.msra.mxu0 %v266
  %620 = vmatprep.subr.mxu0 %v269
  %621 = vmatpush1.msra.mxu0 %v268
  %622 = vmatprep.subr.mxu0 %v271
  %623 = vmatpush1.msra.mxu0 %v270
  %624 = vmatprep.subr.mxu0 %v273
  %625 = vmatpush1.msra.mxu0 %v272
  %626 = vmatprep.subr.mxu0 %v275
  %627 = vmatpush1.msra.mxu0 %v274
  %628 = vmatprep.subr.mxu0 %v277
  %629 = vmatpush1.msra.mxu0 %v276
  %630 = vmatprep.subr.mxu0 %v279
  %631 = vmatpush1.msra.mxu0 %v278
  %632 = vmatprep.subr.mxu0 %v281
  %633 = vmatpush1.msra.mxu0 %v280
  %634 = vmatprep.subr.mxu0 0.0
  %635 = vmatpush1.msra.mxu0 0.0
  %636 = vmatprep.subr.mxu0 0.0
  %637 = vmatpush1.msra.mxu0 0.0
  %638 = vmatprep.subr.mxu0 0.0
  %639 = vmatpush1.msra.mxu0 0.0
  %640 = vmatprep.subr.mxu0 0.0
  %641 = vmatpush1.msra.mxu0 0.0
  %642 = vmatprep.subr.mxu0 0.0
  %643 = vmatpush1.msra.mxu0 0.0
  %644 = vmatprep.subr.mxu0 0.0
  %645 = vmatpush1.msra.mxu0 0.0
  %646 = vmatprep.subr.mxu0 0.0
  %647 = vmatpush1.msra.mxu0 0.0
  %648 = vmatprep.subr.mxu0 0.0
  %649 = vmatpush1.msra.mxu0 0.0
  %650 = vmatprep.subr.mxu0 0.0
  %651 = vmatpush1.msra.mxu0 0.0
  %652 = vmatprep.subr.mxu0 0.0
  %653 = vmatpush1.msra.mxu0 0.0
  %654 = vmatprep.subr.mxu0 0.0
  %655 = vmatpush1.msra.mxu0 0.0
  %656 = vmatprep.subr.mxu0 0.0
  %657 = vmatpush1.msra.mxu0 0.0
  %658 = vmatprep.subr.mxu0 0.0
  %659 = vmatpush1.msra.mxu0 0.0
  %660 = vmatprep.subr.mxu0 0.0
  %661 = vmatpush1.msra.mxu0 0.0
  %662 = vmatprep.subr.mxu0 0.0
  %663 = vmatpush1.msra.mxu0 0.0
  %664 = vmatprep.subr.mxu0 0.0
  %665 = vmatpush1.msra.mxu0 0.0
  %666 = vmatprep.subr.mxu0 0.0
  %667 = vmatpush1.msra.mxu0 0.0
  %668 = vmatprep.subr.mxu0 0.0
  %669 = vmatpush1.msra.mxu0 0.0
  %670 = vmatprep.subr.mxu0 0.0
  %671 = vmatpush1.msra.mxu0 0.0
  %672 = vmatprep.subr.mxu0 0.0
  %673 = vmatpush1.msra.mxu0 0.0
  %674 = vmatprep.subr.mxu0 0.0
  %675 = vmatpush1.msra.mxu0 0.0
  %676 = vmatprep.subr.mxu0 0.0
  %677 = vmatpush1.msra.mxu0 0.0
  %678 = vmatprep.subr.mxu0 0.0
  %679 = vmatpush1.msra.mxu0 0.0
  %680 = vmatprep.subr.mxu0 0.0
  %681 = vmatpush1.msra.mxu0 0.0
  %682 = vmatprep.mubr.f32.mxu0 0.0
  %683 = vmatmul.mubr.f32.gmra.mrb[0].mxu0 %v616
  %v684 = vpop.f32.mrb[0].mxu0
  %v685 = vadd.f32 %v287, %v684
  %v686 = vpop.f32.mrb[0].mxu0
  %v687 = vadd.f32 %v291, %v686
  %688 = vdwg.mxu0
  %v689 = vxor.u32 %v685, 2147483648
  %v690 = vxor.u32 %v687, 2147483648
  %v691 = vmul.f32 %v689, 1.442695
  %v692 = vpow.pop %v691
  %v693 = vmul.f32 %v690, 1.442695
  %v694 = vpow.pop %v693
  %v695 = vadd.f32 %v692, 1.0
  %v696 = vadd.f32 %v694, 1.0
  %v697 = vrcp.pop %v695
  %v698 = vmul.f32 1.0, %v697
  %v699 = vrcp.pop %v696
  %v700 = vmul.f32 1.0, %v699
  %702 = vrot.lane.b32.xlu0 %v687, 32
  %v703 = vpop.permute.xlu0 %702
  %v705 = vmul.f32 %v698, %v703
  %707 = vrot.lane.b32.xlu0 %v705, 64
  %v708 = vpop.permute.xlu0 %707
  %v710 = vadd.f32 %v687, %v708
  %v711 = vtanh.pop %v710
  %v712 = vsub.f32 1.0, %v700
  %714 = vrot.lane.b32.xlu0 %v711, 96
  %v715 = vpop.permute.xlu0 %714
  %v717 = vmul.f32 %v712, %v715
  %v718 = vmul.f32 %v700, %v574
  %v719 = vadd.f32 %v717, %v718
  %s720 = scalar_lea.vmem %s5, 16
  %v721 = vld [vmem:[%s720] sm:$0xff]
  %v722 = vmul.f32 %v719, %v721
  %v723 = vadd.f32 %v578, %v722
  %v724 = vld [vmem:[#allocation2 + $0x18] sm:$0xff]
  %v725 = vadd.f32 %v724, %v685
  %v726 = vxor.u32 %v725, 2147483648
  %v727 = vmul.f32 %v726, 1.442695
  %v728 = vpow.pop %v727
  %v729 = vadd.f32 %v728, 1.0
  %v730 = vrcp.pop %v729
  %v731 = vmul.f32 1.0, %v730
  %733 = vrot.lane.b32.xlu0 %v685, 64
  %v734 = vpop.permute.xlu0 %733
  %v736 = vmul.f32 %v731, %v734
  %738 = vrot.lane.b32.xlu0 %v736, 64
  %v739 = vpop.permute.xlu0 %738
  %v741 = vadd.f32 %v724, %v739
  %v742 = vtanh.pop %v741
  %v743 = vsub.f32 1.0, %v731
  %745 = vrot.lane.b32.xlu0 %v742, 96
  %v746 = vpop.permute.xlu0 %745
  %v748 = vmul.f32 %v743, %v746
  %v749 = vmul.f32 %v731, %v605
  %v750 = vadd.f32 %v748, %v749
  %752 = vrot.lane.b32.xlu0 %v750, 96
  %v753 = vpop.permute.xlu0 %752
  %756 = vrot.lane.b32.xlu0 %v719, 32
  %v757 = vpop.permute.xlu0 %756
  %v759 = vsel %vm55, %v753, %v757
  %v761 = vsel %vm325, %v759, 0
  %763 = vmatprep.subr.mxu0 %v267
  %764 = vmatpush1.msra.mxu0 %v266
  %765 = vmatprep.subr.mxu0 %v269
  %766 = vmatpush1.msra.mxu0 %v268
  %767 = vmatprep.subr.mxu0 %v271
  %768 = vmatpush1.msra.mxu0 %v270
  %769 = vmatprep.subr.mxu0 %v273
  %770 = vmatpush1.msra.mxu0 %v272
  %771 = vmatprep.subr.mxu0 %v275
  %772 = vmatpush1.msra.mxu0 %v274
  %773 = vmatprep.subr.mxu0 %v277
  %774 = vmatpush1.msra.mxu0 %v276
  %775 = vmatprep.subr.mxu0 %v279
  %776 = vmatpush1.msra.mxu0 %v278
  %777 = vmatprep.subr.mxu0 %v281
  %778 = vmatpush1.msra.mxu0 %v280
  %779 = vmatprep.subr.mxu0 0.0
  %780 = vmatpush1.msra.mxu0 0.0
  %781 = vmatprep.subr.mxu0 0.0
  %782 = vmatpush1.msra.mxu0 0.0
  %783 = vmatprep.subr.mxu0 0.0
  %784 = vmatpush1.msra.mxu0 0.0
  %785 = vmatprep.subr.mxu0 0.0
  %786 = vmatpush1.msra.mxu0 0.0
  %787 = vmatprep.subr.mxu0 0.0
  %788 = vmatpush1.msra.mxu0 0.0
  %789 = vmatprep.subr.mxu0 0.0
  %790 = vmatpush1.msra.mxu0 0.0
  %791 = vmatprep.subr.mxu0 0.0
  %792 = vmatpush1.msra.mxu0 0.0
  %793 = vmatprep.subr.mxu0 0.0
  %794 = vmatpush1.msra.mxu0 0.0
  %795 = vmatprep.subr.mxu0 0.0
  %796 = vmatpush1.msra.mxu0 0.0
  %797 = vmatprep.subr.mxu0 0.0
  %798 = vmatpush1.msra.mxu0 0.0
  %799 = vmatprep.subr.mxu0 0.0
  %800 = vmatpush1.msra.mxu0 0.0
  %801 = vmatprep.subr.mxu0 0.0
  %802 = vmatpush1.msra.mxu0 0.0
  %803 = vmatprep.subr.mxu0 0.0
  %804 = vmatpush1.msra.mxu0 0.0
  %805 = vmatprep.subr.mxu0 0.0
  %806 = vmatpush1.msra.mxu0 0.0
  %807 = vmatprep.subr.mxu0 0.0
  %808 = vmatpush1.msra.mxu0 0.0
  %809 = vmatprep.subr.mxu0 0.0
  %810 = vmatpush1.msra.mxu0 0.0
  %811 = vmatprep.subr.mxu0 0.0
  %812 = vmatpush1.msra.mxu0 0.0
  %813 = vmatprep.subr.mxu0 0.0
  %814 = vmatpush1.msra.mxu0 0.0
  %815 = vmatprep.subr.mxu0 0.0
  %816 = vmatpush1.msra.mxu0 0.0
  %817 = vmatprep.subr.mxu0 0.0
  %818 = vmatpush1.msra.mxu0 0.0
  %819 = vmatprep.subr.mxu0 0.0
  %820 = vmatpush1.msra.mxu0 0.0
  %821 = vmatprep.subr.mxu0 0.0
  %822 = vmatpush1.msra.mxu0 0.0
  %823 = vmatprep.subr.mxu0 0.0
  %824 = vmatpush1.msra.mxu0 0.0
  %825 = vmatprep.subr.mxu0 0.0
  %826 = vmatpush1.msra.mxu0 0.0
  %827 = vmatprep.mubr.f32.mxu0 0.0
  %828 = vmatmul.mubr.f32.gmra.mrb[0].mxu0 %v761
  %v829 = vpop.f32.mrb[0].mxu0
  %v830 = vadd.f32 %v287, %v829
  %v831 = vpop.f32.mrb[0].mxu0
  %v832 = vadd.f32 %v291, %v831
  %833 = vdwg.mxu0
  %v834 = vxor.u32 %v830, 2147483648
  %v835 = vxor.u32 %v832, 2147483648
  %v836 = vmul.f32 %v834, 1.442695
  %v837 = vpow.pop %v836
  %v838 = vmul.f32 %v835, 1.442695
  %v839 = vpow.pop %v838
  %v840 = vadd.f32 %v837, 1.0
  %v841 = vadd.f32 %v839, 1.0
  %v842 = vrcp.pop %v840
  %v843 = vmul.f32 1.0, %v842
  %v844 = vrcp.pop %v841
  %v845 = vmul.f32 1.0, %v844
  %847 = vrot.lane.b32.xlu0 %v832, 32
  %v848 = vpop.permute.xlu0 %847
  %v850 = vmul.f32 %v843, %v848
  %852 = vrot.lane.b32.xlu0 %v850, 64
  %v853 = vpop.permute.xlu0 %852
  %v855 = vadd.f32 %v832, %v853
  %v856 = vtanh.pop %v855
  %v857 = vsub.f32 1.0, %v845
  %859 = vrot.lane.b32.xlu0 %v856, 96
  %v860 = vpop.permute.xlu0 %859
  %v862 = vmul.f32 %v857, %v860
  %v863 = vmul.f32 %v845, %v719
  %v864 = vadd.f32 %v862, %v863
  %s865 = scalar_lea.vmem %s5, 24
  %v866 = vld [vmem:[%s865] sm:$0xff]
  %v867 = vmul.f32 %v864, %v866
  %v868 = vadd.f32 %v723, %v867
  %v869 = vld [vmem:[#allocation2 + $0x20] sm:$0xff]
  %v870 = vadd.f32 %v869, %v830
  %v871 = vxor.u32 %v870, 2147483648
  %v872 = vmul.f32 %v871, 1.442695
  %v873 = vpow.pop %v872
  %v874 = vadd.f32 %v873, 1.0
  %v875 = vrcp.pop %v874
  %v876 = vmul.f32 1.0, %v875
  %878 = vrot.lane.b32.xlu0 %v830, 64
  %v879 = vpop.permute.xlu0 %878
  %v881 = vmul.f32 %v876, %v879
  %883 = vrot.lane.b32.xlu0 %v881, 64
  %v884 = vpop.permute.xlu0 %883
  %v886 = vadd.f32 %v869, %v884
  %v887 = vtanh.pop %v886
  %v888 = vsub.f32 1.0, %v876
  %890 = vrot.lane.b32.xlu0 %v887, 96
  %v891 = vpop.permute.xlu0 %890
  %v893 = vmul.f32 %v888, %v891
  %v894 = vmul.f32 %v876, %v750
  %v895 = vadd.f32 %v893, %v894
  %897 = vrot.lane.b32.xlu0 %v895, 96
  %v898 = vpop.permute.xlu0 %897
  %901 = vrot.lane.b32.xlu0 %v864, 32
  %v902 = vpop.permute.xlu0 %901
  %v904 = vsel %vm55, %v898, %v902
  %v906 = vsel %vm325, %v904, 0
  %908 = vmatprep.subr.mxu0 %v267
  %909 = vmatpush1.msra.mxu0 %v266
  %910 = vmatprep.subr.mxu0 %v269
  %911 = vmatpush1.msra.mxu0 %v268
  %912 = vmatprep.subr.mxu0 %v271
  %913 = vmatpush1.msra.mxu0 %v270
  %914 = vmatprep.subr.mxu0 %v273
  %915 = vmatpush1.msra.mxu0 %v272
  %916 = vmatprep.subr.mxu0 %v275
  %917 = vmatpush1.msra.mxu0 %v274
  %918 = vmatprep.subr.mxu0 %v277
  %919 = vmatpush1.msra.mxu0 %v276
  %920 = vmatprep.subr.mxu0 %v279
  %921 = vmatpush1.msra.mxu0 %v278
  %922 = vmatprep.subr.mxu0 %v281
  %923 = vmatpush1.msra.mxu0 %v280
  %924 = vmatprep.subr.mxu0 0.0
  %925 = vmatpush1.msra.mxu0 0.0
  %926 = vmatprep.subr.mxu0 0.0
  %927 = vmatpush1.msra.mxu0 0.0
  %928 = vmatprep.subr.mxu0 0.0
  %929 = vmatpush1.msra.mxu0 0.0
  %930 = vmatprep.subr.mxu0 0.0
  %931 = vmatpush1.msra.mxu0 0.0
  %932 = vmatprep.subr.mxu0 0.0
  %933 = vmatpush1.msra.mxu0 0.0
  %934 = vmatprep.subr.mxu0 0.0
  %935 = vmatpush1.msra.mxu0 0.0
  %936 = vmatprep.subr.mxu0 0.0
  %937 = vmatpush1.msra.mxu0 0.0
  %938 = vmatprep.subr.mxu0 0.0
  %939 = vmatpush1.msra.mxu0 0.0
  %940 = vmatprep.subr.mxu0 0.0
  %941 = vmatpush1.msra.mxu0 0.0
  %942 = vmatprep.subr.mxu0 0.0
  %943 = vmatpush1.msra.mxu0 0.0
  %944 = vmatprep.subr.mxu0 0.0
  %945 = vmatpush1.msra.mxu0 0.0
  %946 = vmatprep.subr.mxu0 0.0
  %947 = vmatpush1.msra.mxu0 0.0
  %948 = vmatprep.subr.mxu0 0.0
  %949 = vmatpush1.msra.mxu0 0.0
  %950 = vmatprep.subr.mxu0 0.0
  %951 = vmatpush1.msra.mxu0 0.0
  %952 = vmatprep.subr.mxu0 0.0
  %953 = vmatpush1.msra.mxu0 0.0
  %954 = vmatprep.subr.mxu0 0.0
  %955 = vmatpush1.msra.mxu0 0.0
  %956 = vmatprep.subr.mxu0 0.0
  %957 = vmatpush1.msra.mxu0 0.0
  %958 = vmatprep.subr.mxu0 0.0
  %959 = vmatpush1.msra.mxu0 0.0
  %960 = vmatprep.subr.mxu0 0.0
  %961 = vmatpush1.msra.mxu0 0.0
  %962 = vmatprep.subr.mxu0 0.0
  %963 = vmatpush1.msra.mxu0 0.0
  %964 = vmatprep.subr.mxu0 0.0
  %965 = vmatpush1.msra.mxu0 0.0
  %966 = vmatprep.subr.mxu0 0.0
  %967 = vmatpush1.msra.mxu0 0.0
  %968 = vmatprep.subr.mxu0 0.0
  %969 = vmatpush1.msra.mxu0 0.0
  %970 = vmatprep.subr.mxu0 0.0
  %971 = vmatpush1.msra.mxu0 0.0
  %972 = vmatprep.mubr.f32.mxu0 0.0
  %973 = vmatmul.mubr.f32.gmra.mrb[0].mxu0 %v906
  %v974 = vpop.f32.mrb[0].mxu0
  %v975 = vadd.f32 %v287, %v974
  %v976 = vpop.f32.mrb[0].mxu0
  %v977 = vadd.f32 %v291, %v976
  %978 = vdwg.mxu0
  %v979 = vxor.u32 %v975, 2147483648
  %v980 = vxor.u32 %v977, 2147483648
  %v981 = vmul.f32 %v979, 1.442695
  %v982 = vpow.pop %v981
  %v983 = vmul.f32 %v980, 1.442695
  %v984 = vpow.pop %v983
  %v985 = vadd.f32 %v982, 1.0
  %v986 = vadd.f32 %v984, 1.0
  %v987 = vrcp.pop %v985
  %v988 = vmul.f32 1.0, %v987
  %v989 = vrcp.pop %v986
  %v990 = vmul.f32 1.0, %v989
  %992 = vrot.lane.b32.xlu0 %v977, 32
  %v993 = vpop.permute.xlu0 %992
  %v995 = vmul.f32 %v988, %v993
  %997 = vrot.lane.b32.xlu0 %v995, 64
  %v998 = vpop.permute.xlu0 %997
  %v1000 = vadd.f32 %v977, %v998
  %v1001 = vtanh.pop %v1000
  %v1002 = vsub.f32 1.0, %v990
  %1004 = vrot.lane.b32.xlu0 %v1001, 96
  %v1005 = vpop.permute.xlu0 %1004
  %v1007 = vmul.f32 %v1002, %v1005
  %v1008 = vmul.f32 %v990, %v864
  %v1009 = vadd.f32 %v1007, %v1008
  %s1010 = scalar_lea.vmem %s5, 32
  %v1011 = vld [vmem:[%s1010] sm:$0xff]
  %v1012 = vmul.f32 %v1009, %v1011
  %v1013 = vadd.f32 %v868, %v1012
  %v1014 = vld [vmem:[#allocation2 + $0x28] sm:$0xff]
  %v1015 = vadd.f32 %v1014, %v975
  %v1016 = vxor.u32 %v1015, 2147483648
  %v1017 = vmul.f32 %v1016, 1.442695
  %v1018 = vpow.pop %v1017
  %v1019 = vadd.f32 %v1018, 1.0
  %v1020 = vrcp.pop %v1019
  %v1021 = vmul.f32 1.0, %v1020
  %1023 = vrot.lane.b32.xlu0 %v975, 64
  %v1024 = vpop.permute.xlu0 %1023
  %v1026 = vmul.f32 %v1021, %v1024
  %1028 = vrot.lane.b32.xlu0 %v1026, 64
  %v1029 = vpop.permute.xlu0 %1028
  %v1031 = vadd.f32 %v1014, %v1029
  %v1032 = vtanh.pop %v1031
  %v1033 = vsub.f32 1.0, %v1021
  %1035 = vrot.lane.b32.xlu0 %v1032, 96
  %v1036 = vpop.permute.xlu0 %1035
  %v1038 = vmul.f32 %v1033, %v1036
  %v1039 = vmul.f32 %v1021, %v895
  %v1040 = vadd.f32 %v1038, %v1039
  %1042 = vrot.lane.b32.xlu0 %v1040, 96
  %v1043 = vpop.permute.xlu0 %1042
  %1046 = vrot.lane.b32.xlu0 %v1009, 32
  %v1047 = vpop.permute.xlu0 %1046
  %v1049 = vsel %vm55, %v1043, %v1047
  %v1051 = vsel %vm325, %v1049, 0
  %1053 = vmatprep.subr.mxu0 %v267
  %1054 = vmatpush1.msra.mxu0 %v266
  %1055 = vmatprep.subr.mxu0 %v269
  %1056 = vmatpush1.msra.mxu0 %v268
  %1057 = vmatprep.subr.mxu0 %v271
  %1058 = vmatpush1.msra.mxu0 %v270
  %1059 = vmatprep.subr.mxu0 %v273
  %1060 = vmatpush1.msra.mxu0 %v272
  %1061 = vmatprep.subr.mxu0 %v275
  %1062 = vmatpush1.msra.mxu0 %v274
  %1063 = vmatprep.subr.mxu0 %v277
  %1064 = vmatpush1.msra.mxu0 %v276
  %1065 = vmatprep.subr.mxu0 %v279
  %1066 = vmatpush1.msra.mxu0 %v278
  %1067 = vmatprep.subr.mxu0 %v281
  %1068 = vmatpush1.msra.mxu0 %v280
  %1069 = vmatprep.subr.mxu0 0.0
  %1070 = vmatpush1.msra.mxu0 0.0
  %1071 = vmatprep.subr.mxu0 0.0
  %1072 = vmatpush1.msra.mxu0 0.0
  %1073 = vmatprep.subr.mxu0 0.0
  %1074 = vmatpush1.msra.mxu0 0.0
  %1075 = vmatprep.subr.mxu0 0.0
  %1076 = vmatpush1.msra.mxu0 0.0
  %1077 = vmatprep.subr.mxu0 0.0
  %1078 = vmatpush1.msra.mxu0 0.0
  %1079 = vmatprep.subr.mxu0 0.0
  %1080 = vmatpush1.msra.mxu0 0.0
  %1081 = vmatprep.subr.mxu0 0.0
  %1082 = vmatpush1.msra.mxu0 0.0
  %1083 = vmatprep.subr.mxu0 0.0
  %1084 = vmatpush1.msra.mxu0 0.0
  %1085 = vmatprep.subr.mxu0 0.0
  %1086 = vmatpush1.msra.mxu0 0.0
  %1087 = vmatprep.subr.mxu0 0.0
  %1088 = vmatpush1.msra.mxu0 0.0
  %1089 = vmatprep.subr.mxu0 0.0
  %1090 = vmatpush1.msra.mxu0 0.0
  %1091 = vmatprep.subr.mxu0 0.0
  %1092 = vmatpush1.msra.mxu0 0.0
  %1093 = vmatprep.subr.mxu0 0.0
  %1094 = vmatpush1.msra.mxu0 0.0
  %1095 = vmatprep.subr.mxu0 0.0
  %1096 = vmatpush1.msra.mxu0 0.0
  %1097 = vmatprep.subr.mxu0 0.0
  %1098 = vmatpush1.msra.mxu0 0.0
  %1099 = vmatprep.subr.mxu0 0.0
  %1100 = vmatpush1.msra.mxu0 0.0
  %1101 = vmatprep.subr.mxu0 0.0
  %1102 = vmatpush1.msra.mxu0 0.0
  %1103 = vmatprep.subr.mxu0 0.0
  %1104 = vmatpush1.msra.mxu0 0.0
  %1105 = vmatprep.subr.mxu0 0.0
  %1106 = vmatpush1.msra.mxu0 0.0
  %1107 = vmatprep.subr.mxu0 0.0
  %1108 = vmatpush1.msra.mxu0 0.0
  %1109 = vmatprep.subr.mxu0 0.0
  %1110 = vmatpush1.msra.mxu0 0.0
  %1111 = vmatprep.subr.mxu0 0.0
  %1112 = vmatpush1.msra.mxu0 0.0
  %1113 = vmatprep.subr.mxu0 0.0
  %1114 = vmatpush1.msra.mxu0 0.0
  %1115 = vmatprep.subr.mxu0 0.0
  %1116 = vmatpush1.msra.mxu0 0.0
  %1117 = vmatprep.mubr.f32.mxu0 0.0
  %1118 = vmatmul.mubr.f32.gmra.mrb[0].mxu0 %v1051
  %v1119 = vpop.f32.mrb[0].mxu0
  %v1120 = vadd.f32 %v287, %v1119
  %v1121 = vpop.f32.mrb[0].mxu0
  %v1122 = vadd.f32 %v291, %v1121
  %1123 = vdwg.mxu0
  %v1124 = vxor.u32 %v1120, 2147483648
  %v1125 = vxor.u32 %v1122, 2147483648
  %v1126 = vmul.f32 %v1124, 1.442695
  %v1127 = vpow.pop %v1126
  %v1128 = vmul.f32 %v1125, 1.442695
  %v1129 = vpow.pop %v1128
  %v1130 = vadd.f32 %v1127, 1.0
  %v1131 = vadd.f32 %v1129, 1.0
  %v1132 = vrcp.pop %v1130
  %v1133 = vmul.f32 1.0, %v1132
  %v1134 = vrcp.pop %v1131
  %v1135 = vmul.f32 1.0, %v1134
  %1137 = vrot.lane.b32.xlu0 %v1122, 32
  %v1138 = vpop.permute.xlu0 %1137
  %v1140 = vmul.f32 %v1133, %v1138
  %1142 = vrot.lane.b32.xlu0 %v1140, 64
  %v1143 = vpop.permute.xlu0 %1142
  %v1145 = vadd.f32 %v1122, %v1143
  %v1146 = vtanh.pop %v1145
  %v1147 = vsub.f32 1.0, %v1135
  %1149 = vrot.lane.b32.xlu0 %v1146, 96
  %v1150 = vpop.permute.xlu0 %1149
  %v1152 = vmul.f32 %v1147, %v1150
  %v1153 = vmul.f32 %v1135, %v1009
  %v1154 = vadd.f32 %v1152, %v1153
  %s1155 = scalar_lea.vmem %s5, 40
  %v1156 = vld [vmem:[%s1155] sm:$0xff]
  %v1157 = vmul.f32 %v1154, %v1156
  %v1158 = vadd.f32 %v1013, %v1157
  %v1159 = vld [vmem:[#allocation2 + $0x30] sm:$0xff]
  %v1160 = vadd.f32 %v1159, %v1120
  %v1161 = vxor.u32 %v1160, 2147483648
  %v1162 = vmul.f32 %v1161, 1.442695
  %v1163 = vpow.pop %v1162
  %v1164 = vadd.f32 %v1163, 1.0
  %v1165 = vrcp.pop %v1164
  %v1166 = vmul.f32 1.0, %v1165
  %1168 = vrot.lane.b32.xlu0 %v1120, 64
  %v1169 = vpop.permute.xlu0 %1168
  %v1171 = vmul.f32 %v1166, %v1169
  %1173 = vrot.lane.b32.xlu0 %v1171, 64
  %v1174 = vpop.permute.xlu0 %1173
  %v1176 = vadd.f32 %v1159, %v1174
  %v1177 = vtanh.pop %v1176
  %v1178 = vsub.f32 1.0, %v1166
  %1180 = vrot.lane.b32.xlu0 %v1177, 96
  %v1181 = vpop.permute.xlu0 %1180
  %v1183 = vmul.f32 %v1178, %v1181
  %v1184 = vmul.f32 %v1166, %v1040
  %v1185 = vadd.f32 %v1183, %v1184
  %1187 = vrot.lane.b32.xlu0 %v1185, 96
  %v1188 = vpop.permute.xlu0 %1187
  %1191 = vrot.lane.b32.xlu0 %v1154, 32
  %v1192 = vpop.permute.xlu0 %1191
  %v1194 = vsel %vm55, %v1188, %v1192
  %v1196 = vsel %vm325, %v1194, 0
  %1198 = vmatprep.subr.mxu0 %v267
  %1199 = vmatpush1.msra.mxu0 %v266
  %1200 = vmatprep.subr.mxu0 %v269
  %1201 = vmatpush1.msra.mxu0 %v268
  %1202 = vmatprep.subr.mxu0 %v271
  %1203 = vmatpush1.msra.mxu0 %v270
  %1204 = vmatprep.subr.mxu0 %v273
  %1205 = vmatpush1.msra.mxu0 %v272
  %1206 = vmatprep.subr.mxu0 %v275
  %1207 = vmatpush1.msra.mxu0 %v274
  %1208 = vmatprep.subr.mxu0 %v277
  %1209 = vmatpush1.msra.mxu0 %v276
  %1210 = vmatprep.subr.mxu0 %v279
  %1211 = vmatpush1.msra.mxu0 %v278
  %1212 = vmatprep.subr.mxu0 %v281
  %1213 = vmatpush1.msra.mxu0 %v280
  %1214 = vmatprep.subr.mxu0 0.0
  %1215 = vmatpush1.msra.mxu0 0.0
  %1216 = vmatprep.subr.mxu0 0.0
  %1217 = vmatpush1.msra.mxu0 0.0
  %1218 = vmatprep.subr.mxu0 0.0
  %1219 = vmatpush1.msra.mxu0 0.0
  %1220 = vmatprep.subr.mxu0 0.0
  %1221 = vmatpush1.msra.mxu0 0.0
  %1222 = vmatprep.subr.mxu0 0.0
  %1223 = vmatpush1.msra.mxu0 0.0
  %1224 = vmatprep.subr.mxu0 0.0
  %1225 = vmatpush1.msra.mxu0 0.0
  %1226 = vmatprep.subr.mxu0 0.0
  %1227 = vmatpush1.msra.mxu0 0.0
  %1228 = vmatprep.subr.mxu0 0.0
  %1229 = vmatpush1.msra.mxu0 0.0
  %1230 = vmatprep.subr.mxu0 0.0
  %1231 = vmatpush1.msra.mxu0 0.0
  %1232 = vmatprep.subr.mxu0 0.0
  %1233 = vmatpush1.msra.mxu0 0.0
  %1234 = vmatprep.subr.mxu0 0.0
  %1235 = vmatpush1.msra.mxu0 0.0
  %1236 = vmatprep.subr.mxu0 0.0
  %1237 = vmatpush1.msra.mxu0 0.0
  %1238 = vmatprep.subr.mxu0 0.0
  %1239 = vmatpush1.msra.mxu0 0.0
  %1240 = vmatprep.subr.mxu0 0.0
  %1241 = vmatpush1.msra.mxu0 0.0
  %1242 = vmatprep.subr.mxu0 0.0
  %1243 = vmatpush1.msra.mxu0 0.0
  %1244 = vmatprep.subr.mxu0 0.0
  %1245 = vmatpush1.msra.mxu0 0.0
  %1246 = vmatprep.subr.mxu0 0.0
  %1247 = vmatpush1.msra.mxu0 0.0
  %1248 = vmatprep.subr.mxu0 0.0
  %1249 = vmatpush1.msra.mxu0 0.0
  %1250 = vmatprep.subr.mxu0 0.0
  %1251 = vmatpush1.msra.mxu0 0.0
  %1252 = vmatprep.subr.mxu0 0.0
  %1253 = vmatpush1.msra.mxu0 0.0
  %1254 = vmatprep.subr.mxu0 0.0
  %1255 = vmatpush1.msra.mxu0 0.0
  %1256 = vmatprep.subr.mxu0 0.0
  %1257 = vmatpush1.msra.mxu0 0.0
  %1258 = vmatprep.subr.mxu0 0.0
  %1259 = vmatpush1.msra.mxu0 0.0
  %1260 = vmatprep.subr.mxu0 0.0
  %1261 = vmatpush1.msra.mxu0 0.0
  %1262 = vmatprep.mubr.f32.mxu0 0.0
  %1263 = vmatmul.mubr.f32.gmra.mrb[0].mxu0 %v1196
  %v1264 = vpop.f32.mrb[0].mxu0
  %v1265 = vadd.f32 %v287, %v1264
  %v1266 = vpop.f32.mrb[0].mxu0
  %v1267 = vadd.f32 %v291, %v1266
  %1268 = vdwg.mxu0
  %v1269 = vxor.u32 %v1265, 2147483648
  %v1270 = vxor.u32 %v1267, 2147483648
  %v1271 = vmul.f32 %v1269, 1.442695
  %v1272 = vpow.pop %v1271
  %v1273 = vmul.f32 %v1270, 1.442695
  %v1274 = vpow.pop %v1273
  %v1275 = vadd.f32 %v1272, 1.0
  %v1276 = vadd.f32 %v1274, 1.0
  %v1277 = vrcp.pop %v1275
  %v1278 = vmul.f32 1.0, %v1277
  %v1279 = vrcp.pop %v1276
  %v1280 = vmul.f32 1.0, %v1279
  %1282 = vrot.lane.b32.xlu0 %v1267, 32
  %v1283 = vpop.permute.xlu0 %1282
  %v1285 = vmul.f32 %v1278, %v1283
  %1287 = vrot.lane.b32.xlu0 %v1285, 64
  %v1288 = vpop.permute.xlu0 %1287
  %v1290 = vadd.f32 %v1267, %v1288
  %v1291 = vtanh.pop %v1290
  %v1292 = vsub.f32 1.0, %v1280
  %1294 = vrot.lane.b32.xlu0 %v1291, 96
  %v1295 = vpop.permute.xlu0 %1294
  %v1297 = vmul.f32 %v1292, %v1295
  %v1298 = vmul.f32 %v1280, %v1154
  %v1299 = vadd.f32 %v1297, %v1298
  %s1300 = scalar_lea.vmem %s5, 48
  %v1301 = vld [vmem:[%s1300] sm:$0xff]
  %v1302 = vmul.f32 %v1299, %v1301
  %v1303 = vadd.f32 %v1158, %v1302
  %v1304 = vld [vmem:[#allocation2 + $0x38] sm:$0xff]
  %v1305 = vadd.f32 %v1304, %v1265
  %v1306 = vxor.u32 %v1305, 2147483648
  %v1307 = vmul.f32 %v1306, 1.442695
  %v1308 = vpow.pop %v1307
  %v1309 = vadd.f32 %v1308, 1.0
  %v1310 = vrcp.pop %v1309
  %v1311 = vmul.f32 1.0, %v1310
  %1313 = vrot.lane.b32.xlu0 %v1265, 64
  %v1314 = vpop.permute.xlu0 %1313
  %v1316 = vmul.f32 %v1311, %v1314
  %1318 = vrot.lane.b32.xlu0 %v1316, 64
  %v1319 = vpop.permute.xlu0 %1318
  %v1321 = vadd.f32 %v1304, %v1319
  %v1322 = vtanh.pop %v1321
  %v1323 = vsub.f32 1.0, %v1311
  %1325 = vrot.lane.b32.xlu0 %v1322, 96
  %v1326 = vpop.permute.xlu0 %1325
  %v1328 = vmul.f32 %v1323, %v1326
  %v1329 = vmul.f32 %v1311, %v1185
  %v1330 = vadd.f32 %v1328, %v1329
  %1332 = vrot.lane.b32.xlu0 %v1330, 96
  %v1333 = vpop.permute.xlu0 %1332
  %1336 = vrot.lane.b32.xlu0 %v1299, 32
  %v1337 = vpop.permute.xlu0 %1336
  %v1339 = vsel %vm55, %v1333, %v1337
  %v1341 = vsel %vm325, %v1339, 0
  %1343 = vmatprep.subr.mxu0 %v267
  %1344 = vmatpush1.msra.mxu0 %v266
  %1345 = vmatprep.subr.mxu0 %v269
  %1346 = vmatpush1.msra.mxu0 %v268
  %1347 = vmatprep.subr.mxu0 %v271
  %1348 = vmatpush1.msra.mxu0 %v270
  %1349 = vmatprep.subr.mxu0 %v273
  %1350 = vmatpush1.msra.mxu0 %v272
  %1351 = vmatprep.subr.mxu0 %v275
  %1352 = vmatpush1.msra.mxu0 %v274
  %1353 = vmatprep.subr.mxu0 %v277
  %1354 = vmatpush1.msra.mxu0 %v276
  %1355 = vmatprep.subr.mxu0 %v279
  %1356 = vmatpush1.msra.mxu0 %v278
  %1357 = vmatprep.subr.mxu0 %v281
  %1358 = vmatpush1.msra.mxu0 %v280
  %1359 = vmatprep.subr.mxu0 0.0
  %1360 = vmatpush1.msra.mxu0 0.0
  %1361 = vmatprep.subr.mxu0 0.0
  %1362 = vmatpush1.msra.mxu0 0.0
  %1363 = vmatprep.subr.mxu0 0.0
  %1364 = vmatpush1.msra.mxu0 0.0
  %1365 = vmatprep.subr.mxu0 0.0
  %1366 = vmatpush1.msra.mxu0 0.0
  %1367 = vmatprep.subr.mxu0 0.0
  %1368 = vmatpush1.msra.mxu0 0.0
  %1369 = vmatprep.subr.mxu0 0.0
  %1370 = vmatpush1.msra.mxu0 0.0
  %1371 = vmatprep.subr.mxu0 0.0
  %1372 = vmatpush1.msra.mxu0 0.0
  %1373 = vmatprep.subr.mxu0 0.0
  %1374 = vmatpush1.msra.mxu0 0.0
  %1375 = vmatprep.subr.mxu0 0.0
  %1376 = vmatpush1.msra.mxu0 0.0
  %1377 = vmatprep.subr.mxu0 0.0
  %1378 = vmatpush1.msra.mxu0 0.0
  %1379 = vmatprep.subr.mxu0 0.0
  %1380 = vmatpush1.msra.mxu0 0.0
  %1381 = vmatprep.subr.mxu0 0.0
  %1382 = vmatpush1.msra.mxu0 0.0
  %1383 = vmatprep.subr.mxu0 0.0
  %1384 = vmatpush1.msra.mxu0 0.0
  %1385 = vmatprep.subr.mxu0 0.0
  %1386 = vmatpush1.msra.mxu0 0.0
  %1387 = vmatprep.subr.mxu0 0.0
  %1388 = vmatpush1.msra.mxu0 0.0
  %1389 = vmatprep.subr.mxu0 0.0
  %1390 = vmatpush1.msra.mxu0 0.0
  %1391 = vmatprep.subr.mxu0 0.0
  %1392 = vmatpush1.msra.mxu0 0.0
  %1393 = vmatprep.subr.mxu0 0.0
  %1394 = vmatpush1.msra.mxu0 0.0
  %1395 = vmatprep.subr.mxu0 0.0
  %1396 = vmatpush1.msra.mxu0 0.0
  %1397 = vmatprep.subr.mxu0 0.0
  %1398 = vmatpush1.msra.mxu0 0.0
  %1399 = vmatprep.subr.mxu0 0.0
  %1400 = vmatpush1.msra.mxu0 0.0
  %1401 = vmatprep.subr.mxu0 0.0
  %1402 = vmatpush1.msra.mxu0 0.0
  %1403 = vmatprep.subr.mxu0 0.0
  %1404 = vmatpush1.msra.mxu0 0.0
  %1405 = vmatprep.subr.mxu0 0.0
  %1406 = vmatpush1.msra.mxu0 0.0
  %1407 = vmatprep.mubr.f32.mxu0 0.0
  %1408 = vmatmul.mubr.f32.gmra.mrb[0].mxu0 %v1341
  %v1409 = vpop.f32.mrb[0].mxu0
  %v1410 = vadd.f32 %v287, %v1409
  %v1411 = vpop.f32.mrb[0].mxu0
  %v1412 = vadd.f32 %v291, %v1411
  %1413 = vdwg.mxu0
  %v1414 = vxor.u32 %v1410, 2147483648
  %v1415 = vxor.u32 %v1412, 2147483648
  %v1416 = vmul.f32 %v1414, 1.442695
  %v1417 = vpow.pop %v1416
  %v1418 = vmul.f32 %v1415, 1.442695
  %v1419 = vpow.pop %v1418
  %v1420 = vadd.f32 %v1417, 1.0
  %v1421 = vadd.f32 %v1419, 1.0
  %v1422 = vrcp.pop %v1420
  %v1423 = vmul.f32 1.0, %v1422
  %v1424 = vrcp.pop %v1421
  %v1425 = vmul.f32 1.0, %v1424
  %1427 = vrot.lane.b32.xlu0 %v1412, 32
  %v1428 = vpop.permute.xlu0 %1427
  %v1430 = vmul.f32 %v1423, %v1428
  %1432 = vrot.lane.b32.xlu0 %v1430, 64
  %v1433 = vpop.permute.xlu0 %1432
  %v1435 = vadd.f32 %v1412, %v1433
  %v1436 = vtanh.pop %v1435
  %v1437 = vsub.f32 1.0, %v1425
  %1439 = vrot.lane.b32.xlu0 %v1436, 96
  %v1440 = vpop.permute.xlu0 %1439
  %v1442 = vmul.f32 %v1437, %v1440
  %v1443 = vmul.f32 %v1425, %v1299
  %v1444 = vadd.f32 %v1442, %v1443
  %s1445 = scalar_lea.vmem %s5, 56
  %v1446 = vld [vmem:[%s1445] sm:$0xff]
  %v1447 = vmul.f32 %v1444, %v1446
  %v1448 = vadd.f32 %v1303, %v1447
  %v1449 = vld [vmem:[#allocation2 + $0x40] sm:$0xff]
  %v1450 = vadd.f32 %v1449, %v1410
  %v1451 = vxor.u32 %v1450, 2147483648
  %v1452 = vmul.f32 %v1451, 1.442695
  %v1453 = vpow.pop %v1452
  %v1454 = vadd.f32 %v1453, 1.0
  %v1455 = vrcp.pop %v1454
  %v1456 = vmul.f32 1.0, %v1455
  %1458 = vrot.lane.b32.xlu0 %v1410, 64
  %v1459 = vpop.permute.xlu0 %1458
  %v1461 = vmul.f32 %v1456, %v1459
  %1463 = vrot.lane.b32.xlu0 %v1461, 64
  %v1464 = vpop.permute.xlu0 %1463
  %v1466 = vadd.f32 %v1449, %v1464
  %v1467 = vtanh.pop %v1466
  %v1468 = vsub.f32 1.0, %v1456
  %1470 = vrot.lane.b32.xlu0 %v1467, 96
  %v1471 = vpop.permute.xlu0 %1470
  %v1473 = vmul.f32 %v1468, %v1471
  %v1474 = vmul.f32 %v1456, %v1330
  %v1475 = vadd.f32 %v1473, %v1474
  %1477 = vrot.lane.b32.xlu0 %v1475, 96
  %v1478 = vpop.permute.xlu0 %1477
  %1481 = vrot.lane.b32.xlu0 %v1444, 32
  %v1482 = vpop.permute.xlu0 %1481
  %v1484 = vsel %vm55, %v1478, %v1482
  %v1486 = vsel %vm325, %v1484, 0
  %1488 = vmatprep.subr.mxu0 %v267
  %1489 = vmatpush1.msra.mxu0 %v266
  %1490 = vmatprep.subr.mxu0 %v269
  %1491 = vmatpush1.msra.mxu0 %v268
  %1492 = vmatprep.subr.mxu0 %v271
  %1493 = vmatpush1.msra.mxu0 %v270
  %1494 = vmatprep.subr.mxu0 %v273
  %1495 = vmatpush1.msra.mxu0 %v272
  %1496 = vmatprep.subr.mxu0 %v275
  %1497 = vmatpush1.msra.mxu0 %v274
  %1498 = vmatprep.subr.mxu0 %v277
  %1499 = vmatpush1.msra.mxu0 %v276
  %1500 = vmatprep.subr.mxu0 %v279
  %1501 = vmatpush1.msra.mxu0 %v278
  %1502 = vmatprep.subr.mxu0 %v281
  %1503 = vmatpush1.msra.mxu0 %v280
  %1504 = vmatprep.subr.mxu0 0.0
  %1505 = vmatpush1.msra.mxu0 0.0
  %1506 = vmatprep.subr.mxu0 0.0
  %1507 = vmatpush1.msra.mxu0 0.0
  %1508 = vmatprep.subr.mxu0 0.0
  %1509 = vmatpush1.msra.mxu0 0.0
  %1510 = vmatprep.subr.mxu0 0.0
  %1511 = vmatpush1.msra.mxu0 0.0
  %1512 = vmatprep.subr.mxu0 0.0
  %1513 = vmatpush1.msra.mxu0 0.0
  %1514 = vmatprep.subr.mxu0 0.0
  %1515 = vmatpush1.msra.mxu0 0.0
  %1516 = vmatprep.subr.mxu0 0.0
  %1517 = vmatpush1.msra.mxu0 0.0
  %1518 = vmatprep.subr.mxu0 0.0
  %1519 = vmatpush1.msra.mxu0 0.0
  %1520 = vmatprep.subr.mxu0 0.0
  %1521 = vmatpush1.msra.mxu0 0.0
  %1522 = vmatprep.subr.mxu0 0.0
  %1523 = vmatpush1.msra.mxu0 0.0
  %1524 = vmatprep.subr.mxu0 0.0
  %1525 = vmatpush1.msra.mxu0 0.0
  %1526 = vmatprep.subr.mxu0 0.0
  %1527 = vmatpush1.msra.mxu0 0.0
  %1528 = vmatprep.subr.mxu0 0.0
  %1529 = vmatpush1.msra.mxu0 0.0
  %1530 = vmatprep.subr.mxu0 0.0
  %1531 = vmatpush1.msra.mxu0 0.0
  %1532 = vmatprep.subr.mxu0 0.0
  %1533 = vmatpush1.msra.mxu0 0.0
  %1534 = vmatprep.subr.mxu0 0.0
  %1535 = vmatpush1.msra.mxu0 0.0
  %1536 = vmatprep.subr.mxu0 0.0
  %1537 = vmatpush1.msra.mxu0 0.0
  %1538 = vmatprep.subr.mxu0 0.0
  %1539 = vmatpush1.msra.mxu0 0.0
  %1540 = vmatprep.subr.mxu0 0.0
  %1541 = vmatpush1.msra.mxu0 0.0
  %1542 = vmatprep.subr.mxu0 0.0
  %1543 = vmatpush1.msra.mxu0 0.0
  %1544 = vmatprep.subr.mxu0 0.0
  %1545 = vmatpush1.msra.mxu0 0.0
  %1546 = vmatprep.subr.mxu0 0.0
  %1547 = vmatpush1.msra.mxu0 0.0
  %1548 = vmatprep.subr.mxu0 0.0
  %1549 = vmatpush1.msra.mxu0 0.0
  %1550 = vmatprep.subr.mxu0 0.0
  %1551 = vmatpush1.msra.mxu0 0.0
  %1552 = vmatprep.mubr.f32.mxu0 0.0
  %1553 = vmatmul.mubr.f32.gmra.mrb[0].mxu0 %v1486
  %v1554 = vpop.f32.mrb[0].mxu0
  %v1555 = vadd.f32 %v287, %v1554
  %v1556 = vpop.f32.mrb[0].mxu0
  %v1557 = vadd.f32 %v291, %v1556
  %1558 = vdwg.mxu0
  %v1559 = vxor.u32 %v1555, 2147483648
  %v1560 = vxor.u32 %v1557, 2147483648
  %v1561 = vmul.f32 %v1559, 1.442695
  %v1562 = vpow.pop %v1561
  %v1563 = vmul.f32 %v1560, 1.442695
  %v1564 = vpow.pop %v1563
  %v1565 = vadd.f32 %v1562, 1.0
  %v1566 = vadd.f32 %v1564, 1.0
  %v1567 = vrcp.pop %v1565
  %v1568 = vmul.f32 1.0, %v1567
  %v1569 = vrcp.pop %v1566
  %v1570 = vmul.f32 1.0, %v1569
  %1572 = vrot.lane.b32.xlu0 %v1557, 32
  %v1573 = vpop.permute.xlu0 %1572
  %v1575 = vmul.f32 %v1568, %v1573
  %1577 = vrot.lane.b32.xlu0 %v1575, 64
  %v1578 = vpop.permute.xlu0 %1577
  %v1580 = vadd.f32 %v1557, %v1578
  %v1581 = vtanh.pop %v1580
  %v1582 = vsub.f32 1.0, %v1570
  %1584 = vrot.lane.b32.xlu0 %v1581, 96
  %v1585 = vpop.permute.xlu0 %1584
  %v1587 = vmul.f32 %v1582, %v1585
  %v1588 = vmul.f32 %v1570, %v1444
  %v1589 = vadd.f32 %v1587, %v1588
  %s1590 = scalar_lea.vmem %s5, 64
  %v1591 = vld [vmem:[%s1590] sm:$0xff]
  %v1592 = vmul.f32 %v1589, %v1591
  %v1593 = vadd.f32 %v1448, %v1592
  %v1594 = vld [vmem:[#allocation2 + $0x48] sm:$0xff]
  %v1595 = vadd.f32 %v1594, %v1555
  %v1596 = vxor.u32 %v1595, 2147483648
  %v1597 = vmul.f32 %v1596, 1.442695
  %v1598 = vpow.pop %v1597
  %v1599 = vadd.f32 %v1598, 1.0
  %v1600 = vrcp.pop %v1599
  %v1601 = vmul.f32 1.0, %v1600
  %1603 = vrot.lane.b32.xlu0 %v1555, 64
  %v1604 = vpop.permute.xlu0 %1603
  %v1606 = vmul.f32 %v1601, %v1604
  %1608 = vrot.lane.b32.xlu0 %v1606, 64
  %v1609 = vpop.permute.xlu0 %1608
  %v1611 = vadd.f32 %v1594, %v1609
  %v1612 = vtanh.pop %v1611
  %v1613 = vsub.f32 1.0, %v1601
  %1615 = vrot.lane.b32.xlu0 %v1612, 96
  %v1616 = vpop.permute.xlu0 %1615
  %v1618 = vmul.f32 %v1613, %v1616
  %v1619 = vmul.f32 %v1601, %v1475
  %v1620 = vadd.f32 %v1618, %v1619
  %1622 = vrot.lane.b32.xlu0 %v1620, 96
  %v1623 = vpop.permute.xlu0 %1622
  %1626 = vrot.lane.b32.xlu0 %v1589, 32
  %v1627 = vpop.permute.xlu0 %1626
  %v1629 = vsel %vm55, %v1623, %v1627
  %v1631 = vsel %vm325, %v1629, 0
  %1633 = vmatprep.subr.mxu0 %v267
  %1634 = vmatpush1.msra.mxu0 %v266
  %1635 = vmatprep.subr.mxu0 %v269
  %1636 = vmatpush1.msra.mxu0 %v268
  %1637 = vmatprep.subr.mxu0 %v271
  %1638 = vmatpush1.msra.mxu0 %v270
  %1639 = vmatprep.subr.mxu0 %v273
  %1640 = vmatpush1.msra.mxu0 %v272
  %1641 = vmatprep.subr.mxu0 %v275
  %1642 = vmatpush1.msra.mxu0 %v274
  %1643 = vmatprep.subr.mxu0 %v277
  %1644 = vmatpush1.msra.mxu0 %v276
  %1645 = vmatprep.subr.mxu0 %v279
  %1646 = vmatpush1.msra.mxu0 %v278
  %1647 = vmatprep.subr.mxu0 %v281
  %1648 = vmatpush1.msra.mxu0 %v280
  %1649 = vmatprep.subr.mxu0 0.0
  %1650 = vmatpush1.msra.mxu0 0.0
  %1651 = vmatprep.subr.mxu0 0.0
  %1652 = vmatpush1.msra.mxu0 0.0
  %1653 = vmatprep.subr.mxu0 0.0
  %1654 = vmatpush1.msra.mxu0 0.0
  %1655 = vmatprep.subr.mxu0 0.0
  %1656 = vmatpush1.msra.mxu0 0.0
  %1657 = vmatprep.subr.mxu0 0.0
  %1658 = vmatpush1.msra.mxu0 0.0
  %1659 = vmatprep.subr.mxu0 0.0
  %1660 = vmatpush1.msra.mxu0 0.0
  %1661 = vmatprep.subr.mxu0 0.0
  %1662 = vmatpush1.msra.mxu0 0.0
  %1663 = vmatprep.subr.mxu0 0.0
  %1664 = vmatpush1.msra.mxu0 0.0
  %1665 = vmatprep.subr.mxu0 0.0
  %1666 = vmatpush1.msra.mxu0 0.0
  %1667 = vmatprep.subr.mxu0 0.0
  %1668 = vmatpush1.msra.mxu0 0.0
  %1669 = vmatprep.subr.mxu0 0.0
  %1670 = vmatpush1.msra.mxu0 0.0
  %1671 = vmatprep.subr.mxu0 0.0
  %1672 = vmatpush1.msra.mxu0 0.0
  %1673 = vmatprep.subr.mxu0 0.0
  %1674 = vmatpush1.msra.mxu0 0.0
  %1675 = vmatprep.subr.mxu0 0.0
  %1676 = vmatpush1.msra.mxu0 0.0
  %1677 = vmatprep.subr.mxu0 0.0
  %1678 = vmatpush1.msra.mxu0 0.0
  %1679 = vmatprep.subr.mxu0 0.0
  %1680 = vmatpush1.msra.mxu0 0.0
  %1681 = vmatprep.subr.mxu0 0.0
  %1682 = vmatpush1.msra.mxu0 0.0
  %1683 = vmatprep.subr.mxu0 0.0
  %1684 = vmatpush1.msra.mxu0 0.0
  %1685 = vmatprep.subr.mxu0 0.0
  %1686 = vmatpush1.msra.mxu0 0.0
  %1687 = vmatprep.subr.mxu0 0.0
  %1688 = vmatpush1.msra.mxu0 0.0
  %1689 = vmatprep.subr.mxu0 0.0
  %1690 = vmatpush1.msra.mxu0 0.0
  %1691 = vmatprep.subr.mxu0 0.0
  %1692 = vmatpush1.msra.mxu0 0.0
  %1693 = vmatprep.subr.mxu0 0.0
  %1694 = vmatpush1.msra.mxu0 0.0
  %1695 = vmatprep.subr.mxu0 0.0
  %1696 = vmatpush1.msra.mxu0 0.0
  %1697 = vmatprep.mubr.f32.mxu0 0.0
  %1698 = vmatmul.mubr.f32.gmra.mrb[0].mxu0 %v1631
  %v1699 = vpop.f32.mrb[0].mxu0
  %v1700 = vadd.f32 %v287, %v1699
  %v1701 = vpop.f32.mrb[0].mxu0
  %v1702 = vadd.f32 %v291, %v1701
  %1703 = vdwg.mxu0
  %v1704 = vxor.u32 %v1700, 2147483648
  %v1705 = vxor.u32 %v1702, 2147483648
  %v1706 = vmul.f32 %v1704, 1.442695
  %v1707 = vpow.pop %v1706
  %v1708 = vmul.f32 %v1705, 1.442695
  %v1709 = vpow.pop %v1708
  %v1710 = vadd.f32 %v1707, 1.0
  %v1711 = vadd.f32 %v1709, 1.0
  %v1712 = vrcp.pop %v1710
  %v1713 = vmul.f32 1.0, %v1712
  %v1714 = vrcp.pop %v1711
  %v1715 = vmul.f32 1.0, %v1714
  %1717 = vrot.lane.b32.xlu0 %v1702, 32
  %v1718 = vpop.permute.xlu0 %1717
  %v1720 = vmul.f32 %v1713, %v1718
  %1722 = vrot.lane.b32.xlu0 %v1720, 64
  %v1723 = vpop.permute.xlu0 %1722
  %v1725 = vadd.f32 %v1702, %v1723
  %v1726 = vtanh.pop %v1725
  %v1727 = vsub.f32 1.0, %v1715
  %1729 = vrot.lane.b32.xlu0 %v1726, 96
  %v1730 = vpop.permute.xlu0 %1729
  %v1732 = vmul.f32 %v1727, %v1730
  %v1733 = vmul.f32 %v1715, %v1589
  %v1734 = vadd.f32 %v1732, %v1733
  %s1735 = scalar_lea.vmem %s5, 72
  %v1736 = vld [vmem:[%s1735] sm:$0xff]
  %v1737 = vmul.f32 %v1734, %v1736
  %v1738 = vadd.f32 %v1593, %v1737
  %v1739 = vld [vmem:[#allocation2 + $0x50] sm:$0xff]
  %v1740 = vadd.f32 %v1739, %v1700
  %v1741 = vxor.u32 %v1740, 2147483648
  %v1742 = vmul.f32 %v1741, 1.442695
  %v1743 = vpow.pop %v1742
  %v1744 = vadd.f32 %v1743, 1.0
  %v1745 = vrcp.pop %v1744
  %v1746 = vmul.f32 1.0, %v1745
  %1748 = vrot.lane.b32.xlu0 %v1700, 64
  %v1749 = vpop.permute.xlu0 %1748
  %v1751 = vmul.f32 %v1746, %v1749
  %1753 = vrot.lane.b32.xlu0 %v1751, 64
  %v1754 = vpop.permute.xlu0 %1753
  %v1756 = vadd.f32 %v1739, %v1754
  %v1757 = vtanh.pop %v1756
  %v1758 = vsub.f32 1.0, %v1746
  %1760 = vrot.lane.b32.xlu0 %v1757, 96
  %v1761 = vpop.permute.xlu0 %1760
  %v1763 = vmul.f32 %v1758, %v1761
  %v1764 = vmul.f32 %v1746, %v1620
  %v1765 = vadd.f32 %v1763, %v1764
  %1767 = vrot.lane.b32.xlu0 %v1765, 96
  %v1768 = vpop.permute.xlu0 %1767
  %1771 = vrot.lane.b32.xlu0 %v1734, 32
  %v1772 = vpop.permute.xlu0 %1771
  %v1774 = vsel %vm55, %v1768, %v1772
  %v1776 = vsel %vm325, %v1774, 0
  %1778 = vmatprep.subr.mxu0 %v267
  %1779 = vmatpush1.msra.mxu0 %v266
  %1780 = vmatprep.subr.mxu0 %v269
  %1781 = vmatpush1.msra.mxu0 %v268
  %1782 = vmatprep.subr.mxu0 %v271
  %1783 = vmatpush1.msra.mxu0 %v270
  %1784 = vmatprep.subr.mxu0 %v273
  %1785 = vmatpush1.msra.mxu0 %v272
  %1786 = vmatprep.subr.mxu0 %v275
  %1787 = vmatpush1.msra.mxu0 %v274
  %1788 = vmatprep.subr.mxu0 %v277
  %1789 = vmatpush1.msra.mxu0 %v276
  %1790 = vmatprep.subr.mxu0 %v279
  %1791 = vmatpush1.msra.mxu0 %v278
  %1792 = vmatprep.subr.mxu0 %v281
  %1793 = vmatpush1.msra.mxu0 %v280
  %1794 = vmatprep.subr.mxu0 0.0
  %1795 = vmatpush1.msra.mxu0 0.0
  %1796 = vmatprep.subr.mxu0 0.0
  %1797 = vmatpush1.msra.mxu0 0.0
  %1798 = vmatprep.subr.mxu0 0.0
  %1799 = vmatpush1.msra.mxu0 0.0
  %1800 = vmatprep.subr.mxu0 0.0
  %1801 = vmatpush1.msra.mxu0 0.0
  %1802 = vmatprep.subr.mxu0 0.0
  %1803 = vmatpush1.msra.mxu0 0.0
  %1804 = vmatprep.subr.mxu0 0.0
  %1805 = vmatpush1.msra.mxu0 0.0
  %1806 = vmatprep.subr.mxu0 0.0
  %1807 = vmatpush1.msra.mxu0 0.0
  %1808 = vmatprep.subr.mxu0 0.0
  %1809 = vmatpush1.msra.mxu0 0.0
  %1810 = vmatprep.subr.mxu0 0.0
  %1811 = vmatpush1.msra.mxu0 0.0
  %1812 = vmatprep.subr.mxu0 0.0
  %1813 = vmatpush1.msra.mxu0 0.0
  %1814 = vmatprep.subr.mxu0 0.0
  %1815 = vmatpush1.msra.mxu0 0.0
  %1816 = vmatprep.subr.mxu0 0.0
  %1817 = vmatpush1.msra.mxu0 0.0
  %1818 = vmatprep.subr.mxu0 0.0
  %1819 = vmatpush1.msra.mxu0 0.0
  %1820 = vmatprep.subr.mxu0 0.0
  %1821 = vmatpush1.msra.mxu0 0.0
  %1822 = vmatprep.subr.mxu0 0.0
  %1823 = vmatpush1.msra.mxu0 0.0
  %1824 = vmatprep.subr.mxu0 0.0
  %1825 = vmatpush1.msra.mxu0 0.0
  %1826 = vmatprep.subr.mxu0 0.0
  %1827 = vmatpush1.msra.mxu0 0.0
  %1828 = vmatprep.subr.mxu0 0.0
  %1829 = vmatpush1.msra.mxu0 0.0
  %1830 = vmatprep.subr.mxu0 0.0
  %1831 = vmatpush1.msra.mxu0 0.0
  %1832 = vmatprep.subr.mxu0 0.0
  %1833 = vmatpush1.msra.mxu0 0.0
  %1834 = vmatprep.subr.mxu0 0.0
  %1835 = vmatpush1.msra.mxu0 0.0
  %1836 = vmatprep.subr.mxu0 0.0
  %1837 = vmatpush1.msra.mxu0 0.0
  %1838 = vmatprep.subr.mxu0 0.0
  %1839 = vmatpush1.msra.mxu0 0.0
  %1840 = vmatprep.subr.mxu0 0.0
  %1841 = vmatpush1.msra.mxu0 0.0
  %1842 = vmatprep.mubr.f32.mxu0 0.0
  %1843 = vmatmul.mubr.f32.gmra.mrb[0].mxu0 %v1776
  %v1844 = vpop.f32.mrb[0].mxu0
  %v1845 = vadd.f32 %v287, %v1844
  %v1846 = vpop.f32.mrb[0].mxu0
  %v1847 = vadd.f32 %v291, %v1846
  %1848 = vdwg.mxu0
  %v1849 = vxor.u32 %v1845, 2147483648
  %v1850 = vxor.u32 %v1847, 2147483648
  %v1851 = vmul.f32 %v1849, 1.442695
  %v1852 = vpow.pop %v1851
  %v1853 = vmul.f32 %v1850, 1.442695
  %v1854 = vpow.pop %v1853
  %v1855 = vadd.f32 %v1852, 1.0
  %v1856 = vadd.f32 %v1854, 1.0
  %v1857 = vrcp.pop %v1855
  %v1858 = vmul.f32 1.0, %v1857
  %v1859 = vrcp.pop %v1856
  %v1860 = vmul.f32 1.0, %v1859
  %1862 = vrot.lane.b32.xlu0 %v1847, 32
  %v1863 = vpop.permute.xlu0 %1862
  %v1865 = vmul.f32 %v1858, %v1863
  %1867 = vrot.lane.b32.xlu0 %v1865, 64
  %v1868 = vpop.permute.xlu0 %1867
  %v1870 = vadd.f32 %v1847, %v1868
  %v1871 = vtanh.pop %v1870
  %v1872 = vsub.f32 1.0, %v1860
  %1874 = vrot.lane.b32.xlu0 %v1871, 96
  %v1875 = vpop.permute.xlu0 %1874
  %v1877 = vmul.f32 %v1872, %v1875
  %v1878 = vmul.f32 %v1860, %v1734
  %v1879 = vadd.f32 %v1877, %v1878
  %s1880 = scalar_lea.vmem %s5, 80
  %v1881 = vld [vmem:[%s1880] sm:$0xff]
  %v1882 = vmul.f32 %v1879, %v1881
  %v1883 = vadd.f32 %v1738, %v1882
  %v1884 = vld [vmem:[#allocation2 + $0x58] sm:$0xff]
  %v1885 = vadd.f32 %v1884, %v1845
  %v1886 = vxor.u32 %v1885, 2147483648
  %v1887 = vmul.f32 %v1886, 1.442695
  %v1888 = vpow.pop %v1887
  %v1889 = vadd.f32 %v1888, 1.0
  %v1890 = vrcp.pop %v1889
  %v1891 = vmul.f32 1.0, %v1890
  %1893 = vrot.lane.b32.xlu0 %v1845, 64
  %v1894 = vpop.permute.xlu0 %1893
  %v1896 = vmul.f32 %v1891, %v1894
  %1898 = vrot.lane.b32.xlu0 %v1896, 64
  %v1899 = vpop.permute.xlu0 %1898
  %v1901 = vadd.f32 %v1884, %v1899
  %v1902 = vtanh.pop %v1901
  %v1903 = vsub.f32 1.0, %v1891
  %1905 = vrot.lane.b32.xlu0 %v1902, 96
  %v1906 = vpop.permute.xlu0 %1905
  %v1908 = vmul.f32 %v1903, %v1906
  %v1909 = vmul.f32 %v1891, %v1765
  %v1910 = vadd.f32 %v1908, %v1909
  %1912 = vrot.lane.b32.xlu0 %v1910, 96
  %v1913 = vpop.permute.xlu0 %1912
  %1916 = vrot.lane.b32.xlu0 %v1879, 32
  %v1917 = vpop.permute.xlu0 %1916
  %v1919 = vsel %vm55, %v1913, %v1917
  %v1921 = vsel %vm325, %v1919, 0
  %1923 = vmatprep.subr.mxu0 %v267
  %1924 = vmatpush1.msra.mxu0 %v266
  %1925 = vmatprep.subr.mxu0 %v269
  %1926 = vmatpush1.msra.mxu0 %v268
  %1927 = vmatprep.subr.mxu0 %v271
  %1928 = vmatpush1.msra.mxu0 %v270
  %1929 = vmatprep.subr.mxu0 %v273
  %1930 = vmatpush1.msra.mxu0 %v272
  %1931 = vmatprep.subr.mxu0 %v275
  %1932 = vmatpush1.msra.mxu0 %v274
  %1933 = vmatprep.subr.mxu0 %v277
  %1934 = vmatpush1.msra.mxu0 %v276
  %1935 = vmatprep.subr.mxu0 %v279
  %1936 = vmatpush1.msra.mxu0 %v278
  %1937 = vmatprep.subr.mxu0 %v281
  %1938 = vmatpush1.msra.mxu0 %v280
  %1939 = vmatprep.subr.mxu0 0.0
  %1940 = vmatpush1.msra.mxu0 0.0
  %1941 = vmatprep.subr.mxu0 0.0
  %1942 = vmatpush1.msra.mxu0 0.0
  %1943 = vmatprep.subr.mxu0 0.0
  %1944 = vmatpush1.msra.mxu0 0.0
  %1945 = vmatprep.subr.mxu0 0.0
  %1946 = vmatpush1.msra.mxu0 0.0
  %1947 = vmatprep.subr.mxu0 0.0
  %1948 = vmatpush1.msra.mxu0 0.0
  %1949 = vmatprep.subr.mxu0 0.0
  %1950 = vmatpush1.msra.mxu0 0.0
  %1951 = vmatprep.subr.mxu0 0.0
  %1952 = vmatpush1.msra.mxu0 0.0
  %1953 = vmatprep.subr.mxu0 0.0
  %1954 = vmatpush1.msra.mxu0 0.0
  %1955 = vmatprep.subr.mxu0 0.0
  %1956 = vmatpush1.msra.mxu0 0.0
  %1957 = vmatprep.subr.mxu0 0.0
  %1958 = vmatpush1.msra.mxu0 0.0
  %1959 = vmatprep.subr.mxu0 0.0
  %1960 = vmatpush1.msra.mxu0 0.0
  %1961 = vmatprep.subr.mxu0 0.0
  %1962 = vmatpush1.msra.mxu0 0.0
  %1963 = vmatprep.subr.mxu0 0.0
  %1964 = vmatpush1.msra.mxu0 0.0
  %1965 = vmatprep.subr.mxu0 0.0
  %1966 = vmatpush1.msra.mxu0 0.0
  %1967 = vmatprep.subr.mxu0 0.0
  %1968 = vmatpush1.msra.mxu0 0.0
  %1969 = vmatprep.subr.mxu0 0.0
  %1970 = vmatpush1.msra.mxu0 0.0
  %1971 = vmatprep.subr.mxu0 0.0
  %1972 = vmatpush1.msra.mxu0 0.0
  %1973 = vmatprep.subr.mxu0 0.0
  %1974 = vmatpush1.msra.mxu0 0.0
  %1975 = vmatprep.subr.mxu0 0.0
  %1976 = vmatpush1.msra.mxu0 0.0
  %1977 = vmatprep.subr.mxu0 0.0
  %1978 = vmatpush1.msra.mxu0 0.0
  %1979 = vmatprep.subr.mxu0 0.0
  %1980 = vmatpush1.msra.mxu0 0.0
  %1981 = vmatprep.subr.mxu0 0.0
  %1982 = vmatpush1.msra.mxu0 0.0
  %1983 = vmatprep.subr.mxu0 0.0
  %1984 = vmatpush1.msra.mxu0 0.0
  %1985 = vmatprep.subr.mxu0 0.0
  %1986 = vmatpush1.msra.mxu0 0.0
  %1987 = vmatprep.mubr.f32.mxu0 0.0
  %1988 = vmatmul.mubr.f32.gmra.mrb[0].mxu0 %v1921
  %v1989 = vpop.f32.mrb[0].mxu0
  %v1990 = vadd.f32 %v287, %v1989
  %v1991 = vpop.f32.mrb[0].mxu0
  %v1992 = vadd.f32 %v291, %v1991
  %1993 = vdwg.mxu0
  %v1994 = vxor.u32 %v1990, 2147483648
  %v1995 = vxor.u32 %v1992, 2147483648
  %v1996 = vmul.f32 %v1994, 1.442695
  %v1997 = vpow.pop %v1996
  %v1998 = vmul.f32 %v1995, 1.442695
  %v1999 = vpow.pop %v1998
  %v2000 = vadd.f32 %v1997, 1.0
  %v2001 = vadd.f32 %v1999, 1.0
  %v2002 = vrcp.pop %v2000
  %v2003 = vmul.f32 1.0, %v2002
  %v2004 = vrcp.pop %v2001
  %v2005 = vmul.f32 1.0, %v2004
  %2007 = vrot.lane.b32.xlu0 %v1992, 32
  %v2008 = vpop.permute.xlu0 %2007
  %v2010 = vmul.f32 %v2003, %v2008
  %2012 = vrot.lane.b32.xlu0 %v2010, 64
  %v2013 = vpop.permute.xlu0 %2012
  %v2015 = vadd.f32 %v1992, %v2013
  %v2016 = vtanh.pop %v2015
  %v2017 = vsub.f32 1.0, %v2005
  %2019 = vrot.lane.b32.xlu0 %v2016, 96
  %v2020 = vpop.permute.xlu0 %2019
  %v2022 = vmul.f32 %v2017, %v2020
  %v2023 = vmul.f32 %v2005, %v1879
  %v2024 = vadd.f32 %v2022, %v2023
  %s2025 = scalar_lea.vmem %s5, 88
  %v2026 = vld [vmem:[%s2025] sm:$0xff]
  %v2027 = vmul.f32 %v2024, %v2026
  %v2028 = vadd.f32 %v1883, %v2027
  %v2029 = vld [vmem:[#allocation2 + $0x60] sm:$0xff]
  %v2030 = vadd.f32 %v2029, %v1990
  %v2031 = vxor.u32 %v2030, 2147483648
  %v2032 = vmul.f32 %v2031, 1.442695
  %v2033 = vpow.pop %v2032
  %v2034 = vadd.f32 %v2033, 1.0
  %v2035 = vrcp.pop %v2034
  %v2036 = vmul.f32 1.0, %v2035
  %2038 = vrot.lane.b32.xlu0 %v1990, 64
  %v2039 = vpop.permute.xlu0 %2038
  %v2041 = vmul.f32 %v2036, %v2039
  %2043 = vrot.lane.b32.xlu0 %v2041, 64
  %v2044 = vpop.permute.xlu0 %2043
  %v2046 = vadd.f32 %v2029, %v2044
  %v2047 = vtanh.pop %v2046
  %v2048 = vsub.f32 1.0, %v2036
  %2050 = vrot.lane.b32.xlu0 %v2047, 96
  %v2051 = vpop.permute.xlu0 %2050
  %v2053 = vmul.f32 %v2048, %v2051
  %v2054 = vmul.f32 %v2036, %v1910
  %v2055 = vadd.f32 %v2053, %v2054
  %2057 = vrot.lane.b32.xlu0 %v2055, 96
  %v2058 = vpop.permute.xlu0 %2057
  %2061 = vrot.lane.b32.xlu0 %v2024, 32
  %v2062 = vpop.permute.xlu0 %2061
  %v2064 = vsel %vm55, %v2058, %v2062
  %v2066 = vsel %vm325, %v2064, 0
  %2068 = vmatprep.subr.mxu0 %v267
  %2069 = vmatpush1.msra.mxu0 %v266
  %2070 = vmatprep.subr.mxu0 %v269
  %2071 = vmatpush1.msra.mxu0 %v268
  %2072 = vmatprep.subr.mxu0 %v271
  %2073 = vmatpush1.msra.mxu0 %v270
  %2074 = vmatprep.subr.mxu0 %v273
  %2075 = vmatpush1.msra.mxu0 %v272
  %2076 = vmatprep.subr.mxu0 %v275
  %2077 = vmatpush1.msra.mxu0 %v274
  %2078 = vmatprep.subr.mxu0 %v277
  %2079 = vmatpush1.msra.mxu0 %v276
  %2080 = vmatprep.subr.mxu0 %v279
  %2081 = vmatpush1.msra.mxu0 %v278
  %2082 = vmatprep.subr.mxu0 %v281
  %2083 = vmatpush1.msra.mxu0 %v280
  %2084 = vmatprep.subr.mxu0 0.0
  %2085 = vmatpush1.msra.mxu0 0.0
  %2086 = vmatprep.subr.mxu0 0.0
  %2087 = vmatpush1.msra.mxu0 0.0
  %2088 = vmatprep.subr.mxu0 0.0
  %2089 = vmatpush1.msra.mxu0 0.0
  %2090 = vmatprep.subr.mxu0 0.0
  %2091 = vmatpush1.msra.mxu0 0.0
  %2092 = vmatprep.subr.mxu0 0.0
  %2093 = vmatpush1.msra.mxu0 0.0
  %2094 = vmatprep.subr.mxu0 0.0
  %2095 = vmatpush1.msra.mxu0 0.0
  %2096 = vmatprep.subr.mxu0 0.0
  %2097 = vmatpush1.msra.mxu0 0.0
  %2098 = vmatprep.subr.mxu0 0.0
  %2099 = vmatpush1.msra.mxu0 0.0
  %2100 = vmatprep.subr.mxu0 0.0
  %2101 = vmatpush1.msra.mxu0 0.0
  %2102 = vmatprep.subr.mxu0 0.0
  %2103 = vmatpush1.msra.mxu0 0.0
  %2104 = vmatprep.subr.mxu0 0.0
  %2105 = vmatpush1.msra.mxu0 0.0
  %2106 = vmatprep.subr.mxu0 0.0
  %2107 = vmatpush1.msra.mxu0 0.0
  %2108 = vmatprep.subr.mxu0 0.0
  %2109 = vmatpush1.msra.mxu0 0.0
  %2110 = vmatprep.subr.mxu0 0.0
  %2111 = vmatpush1.msra.mxu0 0.0
  %2112 = vmatprep.subr.mxu0 0.0
  %2113 = vmatpush1.msra.mxu0 0.0
  %2114 = vmatprep.subr.mxu0 0.0
  %2115 = vmatpush1.msra.mxu0 0.0
  %2116 = vmatprep.subr.mxu0 0.0
  %2117 = vmatpush1.msra.mxu0 0.0
  %2118 = vmatprep.subr.mxu0 0.0
  %2119 = vmatpush1.msra.mxu0 0.0
  %2120 = vmatprep.subr.mxu0 0.0
  %2121 = vmatpush1.msra.mxu0 0.0
  %2122 = vmatprep.subr.mxu0 0.0
  %2123 = vmatpush1.msra.mxu0 0.0
  %2124 = vmatprep.subr.mxu0 0.0
  %2125 = vmatpush1.msra.mxu0 0.0
  %2126 = vmatprep.subr.mxu0 0.0
  %2127 = vmatpush1.msra.mxu0 0.0
  %2128 = vmatprep.subr.mxu0 0.0
  %2129 = vmatpush1.msra.mxu0 0.0
  %2130 = vmatprep.subr.mxu0 0.0
  %2131 = vmatpush1.msra.mxu0 0.0
  %2132 = vmatprep.mubr.f32.mxu0 0.0
  %2133 = vmatmul.mubr.f32.gmra.mrb[0].mxu0 %v2066
  %v2134 = vpop.f32.mrb[0].mxu0
  %v2135 = vadd.f32 %v287, %v2134
  %v2136 = vpop.f32.mrb[0].mxu0
  %v2137 = vadd.f32 %v291, %v2136
  %2138 = vdwg.mxu0
  %v2139 = vxor.u32 %v2135, 2147483648
  %v2140 = vxor.u32 %v2137, 2147483648
  %v2141 = vmul.f32 %v2139, 1.442695
  %v2142 = vpow.pop %v2141
  %v2143 = vmul.f32 %v2140, 1.442695
  %v2144 = vpow.pop %v2143
  %v2145 = vadd.f32 %v2142, 1.0
  %v2146 = vadd.f32 %v2144, 1.0
  %v2147 = vrcp.pop %v2145
  %v2148 = vmul.f32 1.0, %v2147
  %v2149 = vrcp.pop %v2146
  %v2150 = vmul.f32 1.0, %v2149
  %2152 = vrot.lane.b32.xlu0 %v2137, 32
  %v2153 = vpop.permute.xlu0 %2152
  %v2155 = vmul.f32 %v2148, %v2153
  %2157 = vrot.lane.b32.xlu0 %v2155, 64
  %v2158 = vpop.permute.xlu0 %2157
  %v2160 = vadd.f32 %v2137, %v2158
  %v2161 = vtanh.pop %v2160
  %v2162 = vsub.f32 1.0, %v2150
  %2164 = vrot.lane.b32.xlu0 %v2161, 96
  %v2165 = vpop.permute.xlu0 %2164
  %v2167 = vmul.f32 %v2162, %v2165
  %v2168 = vmul.f32 %v2150, %v2024
  %v2169 = vadd.f32 %v2167, %v2168
  %s2170 = scalar_lea.vmem %s5, 96
  %v2171 = vld [vmem:[%s2170] sm:$0xff]
  %v2172 = vmul.f32 %v2169, %v2171
  %v2173 = vadd.f32 %v2028, %v2172
  %v2174 = vld [vmem:[#allocation2 + $0x68] sm:$0xff]
  %v2175 = vadd.f32 %v2174, %v2135
  %v2176 = vxor.u32 %v2175, 2147483648
  %v2177 = vmul.f32 %v2176, 1.442695
  %v2178 = vpow.pop %v2177
  %v2179 = vadd.f32 %v2178, 1.0
  %v2180 = vrcp.pop %v2179
  %v2181 = vmul.f32 1.0, %v2180
  %2183 = vrot.lane.b32.xlu0 %v2135, 64
  %v2184 = vpop.permute.xlu0 %2183
  %v2186 = vmul.f32 %v2181, %v2184
  %2188 = vrot.lane.b32.xlu0 %v2186, 64
  %v2189 = vpop.permute.xlu0 %2188
  %v2191 = vadd.f32 %v2174, %v2189
  %v2192 = vtanh.pop %v2191
  %v2193 = vsub.f32 1.0, %v2181
  %2195 = vrot.lane.b32.xlu0 %v2192, 96
  %v2196 = vpop.permute.xlu0 %2195
  %v2198 = vmul.f32 %v2193, %v2196
  %v2199 = vmul.f32 %v2181, %v2055
  %v2200 = vadd.f32 %v2198, %v2199
  %2202 = vrot.lane.b32.xlu0 %v2200, 96
  %v2203 = vpop.permute.xlu0 %2202
  %2206 = vrot.lane.b32.xlu0 %v2169, 32
  %v2207 = vpop.permute.xlu0 %2206
  %v2209 = vsel %vm55, %v2203, %v2207
  %v2211 = vsel %vm325, %v2209, 0
  %2213 = vmatprep.subr.mxu0 %v267
  %2214 = vmatpush1.msra.mxu0 %v266
  %2215 = vmatprep.subr.mxu0 %v269
  %2216 = vmatpush1.msra.mxu0 %v268
  %2217 = vmatprep.subr.mxu0 %v271
  %2218 = vmatpush1.msra.mxu0 %v270
  %2219 = vmatprep.subr.mxu0 %v273
  %2220 = vmatpush1.msra.mxu0 %v272
  %2221 = vmatprep.subr.mxu0 %v275
  %2222 = vmatpush1.msra.mxu0 %v274
  %2223 = vmatprep.subr.mxu0 %v277
  %2224 = vmatpush1.msra.mxu0 %v276
  %2225 = vmatprep.subr.mxu0 %v279
  %2226 = vmatpush1.msra.mxu0 %v278
  %2227 = vmatprep.subr.mxu0 %v281
  %2228 = vmatpush1.msra.mxu0 %v280
  %2229 = vmatprep.subr.mxu0 0.0
  %2230 = vmatpush1.msra.mxu0 0.0
  %2231 = vmatprep.subr.mxu0 0.0
  %2232 = vmatpush1.msra.mxu0 0.0
  %2233 = vmatprep.subr.mxu0 0.0
  %2234 = vmatpush1.msra.mxu0 0.0
  %2235 = vmatprep.subr.mxu0 0.0
  %2236 = vmatpush1.msra.mxu0 0.0
  %2237 = vmatprep.subr.mxu0 0.0
  %2238 = vmatpush1.msra.mxu0 0.0
  %2239 = vmatprep.subr.mxu0 0.0
  %2240 = vmatpush1.msra.mxu0 0.0
  %2241 = vmatprep.subr.mxu0 0.0
  %2242 = vmatpush1.msra.mxu0 0.0
  %2243 = vmatprep.subr.mxu0 0.0
  %2244 = vmatpush1.msra.mxu0 0.0
  %2245 = vmatprep.subr.mxu0 0.0
  %2246 = vmatpush1.msra.mxu0 0.0
  %2247 = vmatprep.subr.mxu0 0.0
  %2248 = vmatpush1.msra.mxu0 0.0
  %2249 = vmatprep.subr.mxu0 0.0
  %2250 = vmatpush1.msra.mxu0 0.0
  %2251 = vmatprep.subr.mxu0 0.0
  %2252 = vmatpush1.msra.mxu0 0.0
  %2253 = vmatprep.subr.mxu0 0.0
  %2254 = vmatpush1.msra.mxu0 0.0
  %2255 = vmatprep.subr.mxu0 0.0
  %2256 = vmatpush1.msra.mxu0 0.0
  %2257 = vmatprep.subr.mxu0 0.0
  %2258 = vmatpush1.msra.mxu0 0.0
  %2259 = vmatprep.subr.mxu0 0.0
  %2260 = vmatpush1.msra.mxu0 0.0
  %2261 = vmatprep.subr.mxu0 0.0
  %2262 = vmatpush1.msra.mxu0 0.0
  %2263 = vmatprep.subr.mxu0 0.0
  %2264 = vmatpush1.msra.mxu0 0.0
  %2265 = vmatprep.subr.mxu0 0.0
  %2266 = vmatpush1.msra.mxu0 0.0
  %2267 = vmatprep.subr.mxu0 0.0
  %2268 = vmatpush1.msra.mxu0 0.0
  %2269 = vmatprep.subr.mxu0 0.0
  %2270 = vmatpush1.msra.mxu0 0.0
  %2271 = vmatprep.subr.mxu0 0.0
  %2272 = vmatpush1.msra.mxu0 0.0
  %2273 = vmatprep.subr.mxu0 0.0
  %2274 = vmatpush1.msra.mxu0 0.0
  %2275 = vmatprep.subr.mxu0 0.0
  %2276 = vmatpush1.msra.mxu0 0.0
  %2277 = vmatprep.mubr.f32.mxu0 0.0
  %2278 = vmatmul.mubr.f32.gmra.mrb[0].mxu0 %v2211
  %v2279 = vpop.f32.mrb[0].mxu0
  %v2280 = vadd.f32 %v287, %v2279
  %v2281 = vpop.f32.mrb[0].mxu0
  %v2282 = vadd.f32 %v291, %v2281
  %2283 = vdwg.mxu0
  %v2284 = vxor.u32 %v2280, 2147483648
  %v2285 = vxor.u32 %v2282, 2147483648
  %v2286 = vmul.f32 %v2284, 1.442695
  %v2287 = vpow.pop %v2286
  %v2288 = vmul.f32 %v2285, 1.442695
  %v2289 = vpow.pop %v2288
  %v2290 = vadd.f32 %v2287, 1.0
  %v2291 = vadd.f32 %v2289, 1.0
  %v2292 = vrcp.pop %v2290
  %v2293 = vmul.f32 1.0, %v2292
  %v2294 = vrcp.pop %v2291
  %v2295 = vmul.f32 1.0, %v2294
  %2297 = vrot.lane.b32.xlu0 %v2282, 32
  %v2298 = vpop.permute.xlu0 %2297
  %v2300 = vmul.f32 %v2293, %v2298
  %2302 = vrot.lane.b32.xlu0 %v2300, 64
  %v2303 = vpop.permute.xlu0 %2302
  %v2305 = vadd.f32 %v2282, %v2303
  %v2306 = vtanh.pop %v2305
  %v2307 = vsub.f32 1.0, %v2295
  %2309 = vrot.lane.b32.xlu0 %v2306, 96
  %v2310 = vpop.permute.xlu0 %2309
  %v2312 = vmul.f32 %v2307, %v2310
  %v2313 = vmul.f32 %v2295, %v2169
  %v2314 = vadd.f32 %v2312, %v2313
  %s2315 = scalar_lea.vmem %s5, 104
  %v2316 = vld [vmem:[%s2315] sm:$0xff]
  %v2317 = vmul.f32 %v2314, %v2316
  %v2318 = vadd.f32 %v2173, %v2317
  %v2319 = vld [vmem:[#allocation2 + $0x70] sm:$0xff]
  %v2320 = vadd.f32 %v2319, %v2280
  %v2321 = vxor.u32 %v2320, 2147483648
  %v2322 = vmul.f32 %v2321, 1.442695
  %v2323 = vpow.pop %v2322
  %v2324 = vadd.f32 %v2323, 1.0
  %v2325 = vrcp.pop %v2324
  %v2326 = vmul.f32 1.0, %v2325
  %2328 = vrot.lane.b32.xlu0 %v2280, 64
  %v2329 = vpop.permute.xlu0 %2328
  %v2331 = vmul.f32 %v2326, %v2329
  %2333 = vrot.lane.b32.xlu0 %v2331, 64
  %v2334 = vpop.permute.xlu0 %2333
  %v2336 = vadd.f32 %v2319, %v2334
  %v2337 = vtanh.pop %v2336
  %v2338 = vsub.f32 1.0, %v2326
  %2340 = vrot.lane.b32.xlu0 %v2337, 96
  %v2341 = vpop.permute.xlu0 %2340
  %v2343 = vmul.f32 %v2338, %v2341
  %v2344 = vmul.f32 %v2326, %v2200
  %v2345 = vadd.f32 %v2343, %v2344
  %2347 = vrot.lane.b32.xlu0 %v2345, 96
  %v2348 = vpop.permute.xlu0 %2347
  %2351 = vrot.lane.b32.xlu0 %v2314, 32
  %v2352 = vpop.permute.xlu0 %2351
  %v2354 = vsel %vm55, %v2348, %v2352
  %v2356 = vsel %vm325, %v2354, 0
  %2358 = vmatprep.subr.mxu0 %v267
  %2359 = vmatpush1.msra.mxu0 %v266
  %2360 = vmatprep.subr.mxu0 %v269
  %2361 = vmatpush1.msra.mxu0 %v268
  %2362 = vmatprep.subr.mxu0 %v271
  %2363 = vmatpush1.msra.mxu0 %v270
  %2364 = vmatprep.subr.mxu0 %v273
  %2365 = vmatpush1.msra.mxu0 %v272
  %2366 = vmatprep.subr.mxu0 %v275
  %2367 = vmatpush1.msra.mxu0 %v274
  %2368 = vmatprep.subr.mxu0 %v277
  %2369 = vmatpush1.msra.mxu0 %v276
  %2370 = vmatprep.subr.mxu0 %v279
  %2371 = vmatpush1.msra.mxu0 %v278
  %2372 = vmatprep.subr.mxu0 %v281
  %2373 = vmatpush1.msra.mxu0 %v280
  %2374 = vmatprep.subr.mxu0 0.0
  %2375 = vmatpush1.msra.mxu0 0.0
  %2376 = vmatprep.subr.mxu0 0.0
  %2377 = vmatpush1.msra.mxu0 0.0
  %2378 = vmatprep.subr.mxu0 0.0
  %2379 = vmatpush1.msra.mxu0 0.0
  %2380 = vmatprep.subr.mxu0 0.0
  %2381 = vmatpush1.msra.mxu0 0.0
  %2382 = vmatprep.subr.mxu0 0.0
  %2383 = vmatpush1.msra.mxu0 0.0
  %2384 = vmatprep.subr.mxu0 0.0
  %2385 = vmatpush1.msra.mxu0 0.0
  %2386 = vmatprep.subr.mxu0 0.0
  %2387 = vmatpush1.msra.mxu0 0.0
  %2388 = vmatprep.subr.mxu0 0.0
  %2389 = vmatpush1.msra.mxu0 0.0
  %2390 = vmatprep.subr.mxu0 0.0
  %2391 = vmatpush1.msra.mxu0 0.0
  %2392 = vmatprep.subr.mxu0 0.0
  %2393 = vmatpush1.msra.mxu0 0.0
  %2394 = vmatprep.subr.mxu0 0.0
  %2395 = vmatpush1.msra.mxu0 0.0
  %2396 = vmatprep.subr.mxu0 0.0
  %2397 = vmatpush1.msra.mxu0 0.0
  %2398 = vmatprep.subr.mxu0 0.0
  %2399 = vmatpush1.msra.mxu0 0.0
  %2400 = vmatprep.subr.mxu0 0.0
  %2401 = vmatpush1.msra.mxu0 0.0
  %2402 = vmatprep.subr.mxu0 0.0
  %2403 = vmatpush1.msra.mxu0 0.0
  %2404 = vmatprep.subr.mxu0 0.0
  %2405 = vmatpush1.msra.mxu0 0.0
  %2406 = vmatprep.subr.mxu0 0.0
  %2407 = vmatpush1.msra.mxu0 0.0
  %2408 = vmatprep.subr.mxu0 0.0
  %2409 = vmatpush1.msra.mxu0 0.0
  %2410 = vmatprep.subr.mxu0 0.0
  %2411 = vmatpush1.msra.mxu0 0.0
  %2412 = vmatprep.subr.mxu0 0.0
  %2413 = vmatpush1.msra.mxu0 0.0
  %2414 = vmatprep.subr.mxu0 0.0
  %2415 = vmatpush1.msra.mxu0 0.0
  %2416 = vmatprep.subr.mxu0 0.0
  %2417 = vmatpush1.msra.mxu0 0.0
  %2418 = vmatprep.subr.mxu0 0.0
  %2419 = vmatpush1.msra.mxu0 0.0
  %2420 = vmatprep.subr.mxu0 0.0
  %2421 = vmatpush1.msra.mxu0 0.0
  %2422 = vmatprep.mubr.f32.mxu0 0.0
  %2423 = vmatmul.mubr.f32.gmra.mrb[0].mxu0 %v2356
  %v2424 = vpop.f32.mrb[0].mxu0
  %v2425 = vadd.f32 %v287, %v2424
  %v2426 = vpop.f32.mrb[0].mxu0
  %v2427 = vadd.f32 %v291, %v2426
  %2428 = vdwg.mxu0
  %v2429 = vxor.u32 %v2425, 2147483648
  %v2430 = vxor.u32 %v2427, 2147483648
  %v2431 = vmul.f32 %v2429, 1.442695
  %v2432 = vpow.pop %v2431
  %v2433 = vmul.f32 %v2430, 1.442695
  %v2434 = vpow.pop %v2433
  %v2435 = vadd.f32 %v2432, 1.0
  %v2436 = vadd.f32 %v2434, 1.0
  %v2437 = vrcp.pop %v2435
  %v2438 = vmul.f32 1.0, %v2437
  %v2439 = vrcp.pop %v2436
  %v2440 = vmul.f32 1.0, %v2439
  %2442 = vrot.lane.b32.xlu0 %v2427, 32
  %v2443 = vpop.permute.xlu0 %2442
  %v2445 = vmul.f32 %v2438, %v2443
  %2447 = vrot.lane.b32.xlu0 %v2445, 64
  %v2448 = vpop.permute.xlu0 %2447
  %v2450 = vadd.f32 %v2427, %v2448
  %v2451 = vtanh.pop %v2450
  %v2452 = vsub.f32 1.0, %v2440
  %2454 = vrot.lane.b32.xlu0 %v2451, 96
  %v2455 = vpop.permute.xlu0 %2454
  %v2457 = vmul.f32 %v2452, %v2455
  %v2458 = vmul.f32 %v2440, %v2314
  %v2459 = vadd.f32 %v2457, %v2458
  %s2460 = scalar_lea.vmem %s5, 112
  %v2461 = vld [vmem:[%s2460] sm:$0xff]
  %v2462 = vmul.f32 %v2459, %v2461
  %v2463 = vadd.f32 %v2318, %v2462
  %v2464 = vld [vmem:[#allocation2 + $0x78] sm:$0xff]
  %v2465 = vadd.f32 %v2464, %v2425
  %v2466 = vxor.u32 %v2465, 2147483648
  %v2467 = vmul.f32 %v2466, 1.442695
  %v2468 = vpow.pop %v2467
  %v2469 = vadd.f32 %v2468, 1.0
  %v2470 = vrcp.pop %v2469
  %v2471 = vmul.f32 1.0, %v2470
  %2473 = vrot.lane.b32.xlu0 %v2425, 64
  %v2474 = vpop.permute.xlu0 %2473
  %v2476 = vmul.f32 %v2471, %v2474
  %2478 = vrot.lane.b32.xlu0 %v2476, 64
  %v2479 = vpop.permute.xlu0 %2478
  %v2481 = vadd.f32 %v2464, %v2479
  %v2482 = vtanh.pop %v2481
  %v2483 = vsub.f32 1.0, %v2471
  %2485 = vrot.lane.b32.xlu0 %v2482, 96
  %v2486 = vpop.permute.xlu0 %2485
  %v2488 = vmul.f32 %v2483, %v2486
  %v2489 = vmul.f32 %v2471, %v2345
  %v2490 = vadd.f32 %v2488, %v2489
  %2492 = vrot.lane.b32.xlu0 %v2490, 96
  %v2493 = vpop.permute.xlu0 %2492
  %2496 = vrot.lane.b32.xlu0 %v2459, 32
  %v2497 = vpop.permute.xlu0 %2496
  %v2499 = vsel %vm55, %v2493, %v2497
  %v2501 = vsel %vm325, %v2499, 0
  %2503 = vmatprep.subr.mxu0 %v267
  %2504 = vmatpush1.msra.mxu0 %v266
  %2505 = vmatprep.subr.mxu0 %v269
  %2506 = vmatpush1.msra.mxu0 %v268
  %2507 = vmatprep.subr.mxu0 %v271
  %2508 = vmatpush1.msra.mxu0 %v270
  %2509 = vmatprep.subr.mxu0 %v273
  %2510 = vmatpush1.msra.mxu0 %v272
  %2511 = vmatprep.subr.mxu0 %v275
  %2512 = vmatpush1.msra.mxu0 %v274
  %2513 = vmatprep.subr.mxu0 %v277
  %2514 = vmatpush1.msra.mxu0 %v276
  %2515 = vmatprep.subr.mxu0 %v279
  %2516 = vmatpush1.msra.mxu0 %v278
  %2517 = vmatprep.subr.mxu0 %v281
  %2518 = vmatpush1.msra.mxu0 %v280
  %2519 = vmatprep.subr.mxu0 0.0
  %2520 = vmatpush1.msra.mxu0 0.0
  %2521 = vmatprep.subr.mxu0 0.0
  %2522 = vmatpush1.msra.mxu0 0.0
  %2523 = vmatprep.subr.mxu0 0.0
  %2524 = vmatpush1.msra.mxu0 0.0
  %2525 = vmatprep.subr.mxu0 0.0
  %2526 = vmatpush1.msra.mxu0 0.0
  %2527 = vmatprep.subr.mxu0 0.0
  %2528 = vmatpush1.msra.mxu0 0.0
  %2529 = vmatprep.subr.mxu0 0.0
  %2530 = vmatpush1.msra.mxu0 0.0
  %2531 = vmatprep.subr.mxu0 0.0
  %2532 = vmatpush1.msra.mxu0 0.0
  %2533 = vmatprep.subr.mxu0 0.0
  %2534 = vmatpush1.msra.mxu0 0.0
  %2535 = vmatprep.subr.mxu0 0.0
  %2536 = vmatpush1.msra.mxu0 0.0
  %2537 = vmatprep.subr.mxu0 0.0
  %2538 = vmatpush1.msra.mxu0 0.0
  %2539 = vmatprep.subr.mxu0 0.0
  %2540 = vmatpush1.msra.mxu0 0.0
  %2541 = vmatprep.subr.mxu0 0.0
  %2542 = vmatpush1.msra.mxu0 0.0
  %2543 = vmatprep.subr.mxu0 0.0
  %2544 = vmatpush1.msra.mxu0 0.0
  %2545 = vmatprep.subr.mxu0 0.0
  %2546 = vmatpush1.msra.mxu0 0.0
  %2547 = vmatprep.subr.mxu0 0.0
  %2548 = vmatpush1.msra.mxu0 0.0
  %2549 = vmatprep.subr.mxu0 0.0
  %2550 = vmatpush1.msra.mxu0 0.0
  %2551 = vmatprep.subr.mxu0 0.0
  %2552 = vmatpush1.msra.mxu0 0.0
  %2553 = vmatprep.subr.mxu0 0.0
  %2554 = vmatpush1.msra.mxu0 0.0
  %2555 = vmatprep.subr.mxu0 0.0
  %2556 = vmatpush1.msra.mxu0 0.0
  %2557 = vmatprep.subr.mxu0 0.0
  %2558 = vmatpush1.msra.mxu0 0.0
  %2559 = vmatprep.subr.mxu0 0.0
  %2560 = vmatpush1.msra.mxu0 0.0
  %2561 = vmatprep.subr.mxu0 0.0
  %2562 = vmatpush1.msra.mxu0 0.0
  %2563 = vmatprep.subr.mxu0 0.0
  %2564 = vmatpush1.msra.mxu0 0.0
  %2565 = vmatprep.subr.mxu0 0.0
  %2566 = vmatpush1.msra.mxu0 0.0
  %2567 = vmatprep.mubr.f32.mxu0 0.0
  %2568 = vmatmul.mubr.f32.gmra.mrb[0].mxu0 %v2501
  %v2569 = vpop.f32.mrb[0].mxu0
  %v2570 = vadd.f32 %v287, %v2569
  %v2571 = vpop.f32.mrb[0].mxu0
  %v2572 = vadd.f32 %v291, %v2571
  %2573 = vdwg.mxu0
  %v2574 = vxor.u32 %v2570, 2147483648
  %v2575 = vxor.u32 %v2572, 2147483648
  %v2576 = vmul.f32 %v2574, 1.442695
  %v2577 = vpow.pop %v2576
  %v2578 = vmul.f32 %v2575, 1.442695
  %v2579 = vpow.pop %v2578
  %v2580 = vadd.f32 %v2577, 1.0
  %v2581 = vadd.f32 %v2579, 1.0
  %v2582 = vrcp.pop %v2580
  %v2583 = vmul.f32 1.0, %v2582
  %v2584 = vrcp.pop %v2581
  %v2585 = vmul.f32 1.0, %v2584
  %2587 = vrot.lane.b32.xlu0 %v2572, 32
  %v2588 = vpop.permute.xlu0 %2587
  %v2590 = vmul.f32 %v2583, %v2588
  %2592 = vrot.lane.b32.xlu0 %v2590, 64
  %v2593 = vpop.permute.xlu0 %2592
  %v2595 = vadd.f32 %v2572, %v2593
  %v2596 = vtanh.pop %v2595
  %v2597 = vsub.f32 1.0, %v2585
  %2599 = vrot.lane.b32.xlu0 %v2596, 96
  %v2600 = vpop.permute.xlu0 %2599
  %v2602 = vmul.f32 %v2597, %v2600
  %v2603 = vmul.f32 %v2585, %v2459
  %v2604 = vadd.f32 %v2602, %v2603
  %s2605 = scalar_lea.vmem %s5, 120
  %v2606 = vld [vmem:[%s2605] sm:$0xff]
  %v2607 = vmul.f32 %v2604, %v2606
  %v2608 = vadd.f32 %v2463, %v2607
  %v2609 = vsel %vm55, %v2608, 0.0
  %2610 = vadd.xlane.f32.xlu0 %v2609
  %v2611 = vpop.xlane.xlu0 %2610
  %v2612 = vld [vmem:[#allocation3] sm:$0x1]
  %v2614 = vlaneseq
  %v2615 = vshrl.u32 %v2614, 7
  %v2616 = vsub.s32 0, %v2615
  %v2617 = vrot.slane %v2612, %v2616
  %v2619 = vadd.f32 %v2611, %v2617
  %vm2620 = vcmask 7168
  %2621 = vst.msk [vmem:[%s7] sm:$0xff] %vm2620, %v2619
  // Predicated region
  $region30: #{gru_model_forward.1} parent=0 // pred_check
    _
  $region31: #{gru_model_forward.1} parent=0 // pred_check_branch
    %2623 = sbr.rel (0) target = $region33
  $region32: #{gru_model_forward.1} parent=0 // pred_region
    _
  $region33: #{gru_model_forward.1} parent=0 // pred_fallthru
    _
  // Predicated region
  $region34: #{gru_model_forward.1} parent=0 // pred_check
    _
  $region35: #{gru_model_forward.1} parent=0 // pred_check_branch
    %2625 = sbr.rel (0) target = $region37
  $region36: #{gru_model_forward.1} parent=0 // pred_region
    _
  $region37: #{gru_model_forward.1} parent=0 // pred_fallthru
    _

</llo_original>
